<compile_context>
chip_gen: v5e
topology: v5e:2x2
jax: 0.10.0
libtpu: 0.0.40
codegen_flags: <defaults>
</compile_context>

<pallas_src>
import math
import functools

import jax
import jax.numpy as jnp
from jax.experimental import pallas as pl
from jax.experimental.pallas import tpu as pltpu


# ----------------------------------------------------------------------------
# Fused Pallas kernel: whole SetTransformer forward for one batch tile.
# ----------------------------------------------------------------------------
def _set_transformer_kernel(
        x_ref, s_ref,
        wqkv1_ref, bqkv1_ref, wo1_ref, bo1_ref,      # SAB 1
        wqkv2_ref, bqkv2_ref, wo2_ref, bo2_ref,      # SAB 2
        wq_p_ref, bq_p_ref, wkv_p_ref, bkv_p_ref, wo_p_ref, bo_p_ref,  # PMA
        wqkv3_ref, bqkv3_ref, wo3_ref, bo3_ref,      # SAB 3 (decoder)
        wout_ref, bout_ref,                           # final Linear
        o_ref,
        *, num_heads):
    f32 = jnp.float32
    tb, n_set, _ = x_ref.shape
    num_seeds = s_ref.shape[1]
    dim_V = wo1_ref.shape[0]
    ds = dim_V // num_heads
    inv_sqrt_dv = 1.0 / math.sqrt(dim_V)

    def attention(Q3, K3, V3):
        # Q3: (tb, nq, dim_V); K3, V3: (tb, nk, dim_V).
        # Static (unrolled) head loop; each head is a 3-D batched MXU
        # contraction on the last dim (no explicit transpose materialized).
        outs = []
        for h in range(num_heads):
            sl = slice(h * ds, (h + 1) * ds)
            qh, kh, vh = Q3[..., sl], K3[..., sl], V3[..., sl]
            s = jnp.einsum("bqd,bkd->bqk", qh, kh,
                           preferred_element_type=f32) * inv_sqrt_dv
            s = s - jnp.max(s, axis=-1, keepdims=True)
            p = jnp.exp(s)
            p = p * pl.reciprocal(jnp.sum(p, axis=-1, keepdims=True),
                                  approx=True)
            outs.append(qh + jnp.einsum("bqk,bkd->bqd", p, vh,
                                        preferred_element_type=f32))
        return jnp.concatenate(outs, axis=-1)        # (tb, nq, dim_V)

    def fc_o_residual(O3, wo_ref, bo_ref):
        nq = O3.shape[1]
        O2 = O3.reshape(tb * nq, dim_V)              # fold batch into M
        O2 = O2 + jnp.maximum(
            jnp.dot(O2, wo_ref[...], preferred_element_type=f32) + bo_ref[...],
            0.0)
        return O2.reshape(tb, nq, dim_V)

    def sab(X3, wqkv_ref, bqkv_ref, wo_ref, bo_ref):
        # Self-attention block: Q == K == V input, fused QKV projection.
        nq = X3.shape[1]
        X2 = X3.reshape(tb * nq, X3.shape[-1])       # fold batch into M
        qkv = (jnp.dot(X2, wqkv_ref[...], preferred_element_type=f32)
               + bqkv_ref[...])
        Q = qkv[:, :dim_V].reshape(tb, nq, dim_V)
        K = qkv[:, dim_V:2 * dim_V].reshape(tb, nq, dim_V)
        V = qkv[:, 2 * dim_V:].reshape(tb, nq, dim_V)
        return fc_o_residual(attention(Q, K, V), wo_ref, bo_ref)

    # ---- encoder: SAB1, SAB2 (VMEM-resident intermediates) ----
    X = x_ref[...].astype(f32)                       # (tb, n_set, dim_input)
    H = sab(X, wqkv1_ref, bqkv1_ref, wo1_ref, bo1_ref)
    H = sab(H, wqkv2_ref, bqkv2_ref, wo2_ref, bo2_ref)

    # ---- decoder: PMA (seeds projected once, broadcast over batch tile) ----
    Qs = (jnp.dot(s_ref[0], wq_p_ref[...], preferred_element_type=f32)
          + bq_p_ref[...])                           # (num_seeds, dim_V)
    Q = jnp.broadcast_to(Qs[None], (tb, num_seeds, dim_V))
    H2 = H.reshape(tb * n_set, dim_V)
    kv = (jnp.dot(H2, wkv_p_ref[...], preferred_element_type=f32)
          + bkv_p_ref[...])
    K = kv[:, :dim_V].reshape(tb, n_set, dim_V)
    V = kv[:, dim_V:].reshape(tb, n_set, dim_V)
    H = fc_o_residual(attention(Q, K, V), wo_p_ref, bo_p_ref)

    # ---- decoder: SAB3 ----
    H = sab(H, wqkv3_ref, bqkv3_ref, wo3_ref, bo3_ref)

    # ---- final Linear (only store that ever touches HBM) ----
    d_out = wout_ref.shape[1]
    Y = (jnp.dot(H.reshape(tb * num_seeds, dim_V), wout_ref[...],
                 preferred_element_type=f32) + bout_ref[...])
    o_ref[...] = Y.reshape(tb, num_seeds, d_out).astype(o_ref.dtype)


# ----------------------------------------------------------------------------
# Batch-tile selection: biggest tile that comfortably fits VMEM, but prefer
# >=2 "parallel" grid steps (v7x megacore) when the batch is even.
# ----------------------------------------------------------------------------
def _choose_num_tiles(B, N, dH, budget_bytes=8 << 20):
    # Generous per-sample f32 working-set estimate (QKV + attn + scratch).
    per_sample = 4 * (3 * N * dH + 4 * N * dH + N * N + 64)
    divisors = [t for t in range(1, B + 1) if B % t == 0]
    num_tiles = next((t for t in divisors
                      if (B // t) * per_sample <= budget_bytes), divisors[-1])
    if num_tiles == 1 and B >= 2 and B % 2 == 0:
        num_tiles = 2
    return num_tiles


# ----------------------------------------------------------------------------
# Wrapper: one pallas_call for the whole forward pass.
# ----------------------------------------------------------------------------
def set_transformer_forward(X, packed, num_heads):
    B, N, d_in = X.shape
    dH = packed["sab1"]["wqkv"].shape[1] // 3
    num_seeds = packed["S"].shape[1]
    d_out = packed["out_w"].shape[1]

    num_tiles = _choose_num_tiles(B, N, dH)
    tb = B // num_tiles

    def inv2(shape):      # invariant 2-D weight / bias (stays VMEM-resident)
        return pl.BlockSpec(shape, lambda t: (0, 0))

    p1, p2, pp, p3 = packed["sab1"], packed["sab2"], packed["pma"], packed["sab3"]
    kern = functools.partial(_set_transformer_kernel, num_heads=num_heads)

    return pl.pallas_call(
        kern,
        out_shape=jax.ShapeDtypeStruct((B, num_seeds, d_out), jnp.float32),
        grid=(num_tiles,),
        in_specs=[
            pl.BlockSpec((tb, N, d_in), lambda t: (t, 0, 0)),
            pl.BlockSpec((1, num_seeds, dH), lambda t: (0, 0, 0)),
            inv2((d_in, 3 * dH)), inv2((1, 3 * dH)), inv2((dH, dH)), inv2((1, dH)),
            inv2((dH, 3 * dH)), inv2((1, 3 * dH)), inv2((dH, dH)), inv2((1, dH)),
            inv2((dH, dH)), inv2((1, dH)), inv2((dH, 2 * dH)), inv2((1, 2 * dH)),
            inv2((dH, dH)), inv2((1, dH)),
            inv2((dH, 3 * dH)), inv2((1, 3 * dH)), inv2((dH, dH)), inv2((1, dH)),
            inv2((dH, d_out)), inv2((1, d_out)),
        ],
        out_specs=pl.BlockSpec((tb, num_seeds, d_out), lambda t: (t, 0, 0)),
        compiler_params=pltpu.CompilerParams(
            dimension_semantics=("parallel",),
            vmem_limit_bytes=32 * 1024 * 1024,
        ),
    )(X, packed["S"],
      p1["wqkv"], p1["bqkv"], p1["wo"], p1["bo"],
      p2["wqkv"], p2["bqkv"], p2["wo"], p2["bo"],
      pp["wq"], pp["bq"], pp["wkv"], pp["bkv"], pp["wo"], pp["bo"],
      p3["wqkv"], p3["bqkv"], p3["wo"], p3["bo"],
      packed["out_w"], packed["out_b"])


# ----------------------------------------------------------------------------
# Parameter init (deterministic, PyTorch-shaped; weights stored (in, out)) and
# packing of fused QKV / KV weights for the kernel.
# ----------------------------------------------------------------------------
def init_linear(key, din, dout):
    kw, kb = jax.random.split(key)
    bound = 1.0 / math.sqrt(din)
    w = jax.random.uniform(kw, (din, dout), jnp.float32, -bound, bound)
    b = jax.random.uniform(kb, (1, dout), jnp.float32, -bound, bound)
    return w, b


def init_mab(key, dim_Q, dim_K, dim_V):
    ks = jax.random.split(key, 4)
    wq, bq = init_linear(ks[0], dim_Q, dim_V)
    wk, bk = init_linear(ks[1], dim_K, dim_V)
    wv, bv = init_linear(ks[2], dim_K, dim_V)
    wo, bo = init_linear(ks[3], dim_V, dim_V)
    return dict(wq=wq, bq=bq, wk=wk, bk=bk, wv=wv, bv=bv, wo=wo, bo=bo)


def init_set_transformer(key, dim_input, num_outputs, dim_output,
                         dim_hidden=128, num_heads=4):
    ks = jax.random.split(key, 6)
    params = {
        "sab1": init_mab(ks[0], dim_input, dim_input, dim_hidden),
        "sab2": init_mab(ks[1], dim_hidden, dim_hidden, dim_hidden),
        "pma":  init_mab(ks[2], dim_hidden, dim_hidden, dim_hidden),
        "sab3": init_mab(ks[3], dim_hidden, dim_hidden, dim_hidden),
    }
    bound = math.sqrt(6.0 / (num_outputs + dim_hidden))   # xavier_uniform for S
    params["S"] = jax.random.uniform(ks[4], (1, num_outputs, dim_hidden),
                                     jnp.float32, -bound, bound)
    params["out_w"], params["out_b"] = init_linear(ks[5], dim_hidden, dim_output)
    return params


def pack_set_transformer(params):
    def pack_qkv(p):   # SAB blocks: dim_Q == dim_K, fuse all three projections
        return dict(
            wqkv=jnp.concatenate([p["wq"], p["wk"], p["wv"]], axis=1),
            bqkv=jnp.concatenate([p["bq"], p["bk"], p["bv"]], axis=1),
            wo=p["wo"], bo=p["bo"])

    def pack_kv(p):    # PMA: Q comes from seeds, fuse only K/V
        return dict(
            wq=p["wq"], bq=p["bq"],
            wkv=jnp.concatenate([p["wk"], p["wv"]], axis=1),
            bkv=jnp.concatenate([p["bk"], p["bv"]], axis=1),
            wo=p["wo"], bo=p["bo"])

    return {
        "sab1": pack_qkv(params["sab1"]),
        "sab2": pack_qkv(params["sab2"]),
        "pma":  pack_kv(params["pma"]),
        "sab3": pack_qkv(params["sab3"]),
        "S": params["S"],
        "out_w": params["out_w"], "out_b": params["out_b"],
    }


# ----------------------------------------------------------------------------
# Pure-JAX reference (unpacked params) for correctness checking.
# ----------------------------------------------------------------------------
def _mab_ref(Qx, Kx, p, num_heads):
    dV = p["wq"].shape[1]
    Q = Qx @ p["wq"] + p["bq"]
    K = Kx @ p["wk"] + p["bk"]
    V = Kx @ p["wv"] + p["bv"]
    ds = dV // num_heads
    outs = []
    for h in range(num_heads):
        qh, kh, vh = (A[..., h * ds:(h + 1) * ds] for A in (Q, K, V))
        s = jnp.einsum("bqd,bkd->bqk", qh, kh) / math.sqrt(dV)
        a = jax.nn.softmax(s, axis=-1)
        outs.append(qh + jnp.einsum("bqk,bkd->bqd", a, vh))
    O = jnp.concatenate(outs, axis=-1)
    return O + jax.nn.relu(O @ p["wo"] + p["bo"])


def set_transformer_ref(X, params, num_heads):
    H = _mab_ref(X, X, params["sab1"], num_heads)
    H = _mab_ref(H, H, params["sab2"], num_heads)
    B = X.shape[0]
    S = jnp.broadcast_to(params["S"], (B,) + params["S"].shape[1:])
    H = _mab_ref(S, H, params["pma"], num_heads)
    H = _mab_ref(H, H, params["sab3"], num_heads)
    return H @ params["out_w"] + params["out_b"]


# ----------------------------------------------------------------------------
if __name__ == "__main__":
    B, N = 2, 16                  # batch of sets, 16 elements per set
    dim_input = 8
    dim_hidden = 32
    num_heads = 4
    num_outputs = 2               # number of PMA seed vectors
    dim_output = 4

    key = jax.random.PRNGKey(0)
    kx, kp = jax.random.split(key)
    X = jax.random.normal(kx, (B, N, dim_input), jnp.float32)
    params = init_set_transformer(kp, dim_input, num_outputs, dim_output,
                                  dim_hidden=dim_hidden, num_heads=num_heads)
    packed = pack_set_transformer(params)

    out = set_transformer_forward(X, packed, num_heads)
    out = jax.block_until_ready(out)

    ref = set_transformer_ref(X, params, num_heads)
    assert out.shape == (B, num_outputs, dim_output), out.shape
    # Tolerance loosened slightly vs f32: in-kernel softmax uses the EUP
    # approximate reciprocal (pl.reciprocal(..., approx=True)).
    assert jnp.allclose(out, ref, atol=1e-2, rtol=1e-2), "mismatch vs reference"

    print("KERNEL_OK")
</pallas_src>

<mosaic_0001>
module attributes {stable_mosaic.version = 11 : i64} {
  func.func @_set_transformer_kernel(%arg0: i32, %arg1: memref<1x16x8xf32, #tpu.memory_space<vmem>>, %arg2: memref<1x2x32xf32, #tpu.memory_space<vmem>>, %arg3: memref<8x96xf32, #tpu.memory_space<vmem>>, %arg4: memref<1x96xf32, #tpu.memory_space<vmem>>, %arg5: memref<32x32xf32, #tpu.memory_space<vmem>>, %arg6: memref<1x32xf32, #tpu.memory_space<vmem>>, %arg7: memref<32x96xf32, #tpu.memory_space<vmem>>, %arg8: memref<1x96xf32, #tpu.memory_space<vmem>>, %arg9: memref<32x32xf32, #tpu.memory_space<vmem>>, %arg10: memref<1x32xf32, #tpu.memory_space<vmem>>, %arg11: memref<32x32xf32, #tpu.memory_space<vmem>>, %arg12: memref<1x32xf32, #tpu.memory_space<vmem>>, %arg13: memref<32x64xf32, #tpu.memory_space<vmem>>, %arg14: memref<1x64xf32, #tpu.memory_space<vmem>>, %arg15: memref<32x32xf32, #tpu.memory_space<vmem>>, %arg16: memref<1x32xf32, #tpu.memory_space<vmem>>, %arg17: memref<32x96xf32, #tpu.memory_space<vmem>>, %arg18: memref<1x96xf32, #tpu.memory_space<vmem>>, %arg19: memref<32x32xf32, #tpu.memory_space<vmem>>, %arg20: memref<1x32xf32, #tpu.memory_space<vmem>>, %arg21: memref<32x4xf32, #tpu.memory_space<vmem>>, %arg22: memref<1x4xf32, #tpu.memory_space<vmem>>, %arg23: memref<1x2x4xf32, #tpu.memory_space<vmem>>) attributes {dimension_semantics = [#tpu.dimension_semantics<parallel>], iteration_bounds = array<i64: 2>, scalar_prefetch = 0 : i64, scratch_operands = 0 : i64, tpu.core_type = #tpu.core_type<tc>, window_params = [{transform_indices = @transform_0, window_bounds = array<i64: 1, 16, 8>}, {pipeline_mode = #tpu.pipeline_mode<synchronous>, transform_indices = @transform_1, window_bounds = array<i64: 1, 2, 32>}, {pipeline_mode = #tpu.pipeline_mode<synchronous>, transform_indices = @transform_2, window_bounds = array<i64: 8, 96>}, {pipeline_mode = #tpu.pipeline_mode<synchronous>, transform_indices = @transform_3, window_bounds = array<i64: 1, 96>}, {pipeline_mode = #tpu.pipeline_mode<synchronous>, transform_indices = @transform_4, window_bounds = array<i64: 32, 32>}, {pipeline_mode = #tpu.pipeline_mode<synchronous>, transform_indices = @transform_5, window_bounds = array<i64: 1, 32>}, {pipeline_mode = #tpu.pipeline_mode<synchronous>, transform_indices = @transform_6, window_bounds = array<i64: 32, 96>}, {pipeline_mode = #tpu.pipeline_mode<synchronous>, transform_indices = @transform_7, window_bounds = array<i64: 1, 96>}, {pipeline_mode = #tpu.pipeline_mode<synchronous>, transform_indices = @transform_8, window_bounds = array<i64: 32, 32>}, {pipeline_mode = #tpu.pipeline_mode<synchronous>, transform_indices = @transform_9, window_bounds = array<i64: 1, 32>}, {pipeline_mode = #tpu.pipeline_mode<synchronous>, transform_indices = @transform_10, window_bounds = array<i64: 32, 32>}, {pipeline_mode = #tpu.pipeline_mode<synchronous>, transform_indices = @transform_11, window_bounds = array<i64: 1, 32>}, {pipeline_mode = #tpu.pipeline_mode<synchronous>, transform_indices = @transform_12, window_bounds = array<i64: 32, 64>}, {pipeline_mode = #tpu.pipeline_mode<synchronous>, transform_indices = @transform_13, window_bounds = array<i64: 1, 64>}, {pipeline_mode = #tpu.pipeline_mode<synchronous>, transform_indices = @transform_14, window_bounds = array<i64: 32, 32>}, {pipeline_mode = #tpu.pipeline_mode<synchronous>, transform_indices = @transform_15, window_bounds = array<i64: 1, 32>}, {pipeline_mode = #tpu.pipeline_mode<synchronous>, transform_indices = @transform_16, window_bounds = array<i64: 32, 96>}, {pipeline_mode = #tpu.pipeline_mode<synchronous>, transform_indices = @transform_17, window_bounds = array<i64: 1, 96>}, {pipeline_mode = #tpu.pipeline_mode<synchronous>, transform_indices = @transform_18, window_bounds = array<i64: 32, 32>}, {pipeline_mode = #tpu.pipeline_mode<synchronous>, transform_indices = @transform_19, window_bounds = array<i64: 1, 32>}, {pipeline_mode = #tpu.pipeline_mode<synchronous>, transform_indices = @transform_20, window_bounds = array<i64: 32, 4>}, {pipeline_mode = #tpu.pipeline_mode<synchronous>, transform_indices = @transform_21, window_bounds = array<i64: 1, 4>}, {transform_indices = @transform_22, window_bounds = array<i64: 1, 2, 4>}]} {
    %c0 = arith.constant 0 : index
    %c0_0 = arith.constant 0 : index
    %c0_1 = arith.constant 0 : index
    %0 = vector.load %arg1[%c0, %c0_0, %c0_1] : memref<1x16x8xf32, #tpu.memory_space<vmem>>, vector<1x16x8xf32>
    %1 = vector.shape_cast %0 : vector<1x16x8xf32> to vector<16x8xf32>
    %c0_2 = arith.constant 0 : index
    %c0_3 = arith.constant 0 : index
    %2 = vector.load %arg3[%c0_2, %c0_3] : memref<8x96xf32, #tpu.memory_space<vmem>>, vector<8x96xf32>
    %cst = arith.constant dense<0.000000e+00> : vector<16x96xf32>
    %3 = tpu.matmul %1, %2, %cst {dimension_numbers = #tpu.dot_dimension_numbers<[1], [0], [0], [1], [0, 0, 1, 1], [], []>} : vector<16x8xf32>, vector<8x96xf32>, vector<16x96xf32> -> vector<16x96xf32>
    %c0_4 = arith.constant 0 : index
    %c0_5 = arith.constant 0 : index
    %4 = vector.load %arg4[%c0_4, %c0_5] : memref<1x96xf32, #tpu.memory_space<vmem>>, vector<1x96xf32>
    %5 = vector.broadcast %4 : vector<1x96xf32> to vector<16x96xf32>
    %6 = arith.addf %3, %5 : vector<16x96xf32>
    %7 = vector.extract_strided_slice %6 {offsets = [0, 0], sizes = [16, 32], strides = [1, 1]} : vector<16x96xf32> to vector<16x32xf32>
    %8 = vector.shape_cast %7 : vector<16x32xf32> to vector<1x16x32xf32>
    %9 = vector.extract_strided_slice %6 {offsets = [0, 32], sizes = [16, 32], strides = [1, 1]} : vector<16x96xf32> to vector<16x32xf32>
    %10 = vector.shape_cast %9 : vector<16x32xf32> to vector<1x16x32xf32>
    %11 = vector.extract_strided_slice %6 {offsets = [0, 64], sizes = [16, 32], strides = [1, 1]} : vector<16x96xf32> to vector<16x32xf32>
    %12 = vector.shape_cast %11 : vector<16x32xf32> to vector<1x16x32xf32>
    %13 = vector.extract_strided_slice %8 {offsets = [0, 0, 0], sizes = [1, 16, 8], strides = [1, 1, 1]} : vector<1x16x32xf32> to vector<1x16x8xf32>
    %14 = vector.extract_strided_slice %10 {offsets = [0, 0, 0], sizes = [1, 16, 8], strides = [1, 1, 1]} : vector<1x16x32xf32> to vector<1x16x8xf32>
    %15 = vector.extract_strided_slice %12 {offsets = [0, 0, 0], sizes = [1, 16, 8], strides = [1, 1, 1]} : vector<1x16x32xf32> to vector<1x16x8xf32>
    "tpu.trace_start"() <{level = 10 : i32, message = "bqd,bkd->bqk"}> : () -> ()
    %cst_6 = arith.constant dense<0.000000e+00> : vector<1x16x16xf32>
    %16 = tpu.matmul %13, %14, %cst_6 {dimension_numbers = #tpu.dot_dimension_numbers<[2], [2], [1], [1], [0, 0, 0, 1, 1, 1], [0], [0]>} : vector<1x16x8xf32>, vector<1x16x8xf32>, vector<1x16x16xf32> -> vector<1x16x16xf32>
    "tpu.trace_stop"() : () -> ()
    %cst_7 = arith.constant 0.176776692 : f32
    %17 = vector.broadcast %cst_7 : f32 to vector<1x16x16xf32>
    %18 = arith.mulf %16, %17 : vector<1x16x16xf32>
    %cst_8 = arith.constant dense<0xFF800000> : vector<1x16xf32>
    %19 = vector.multi_reduction <maximumf>, %18, %cst_8 [2] : vector<1x16x16xf32> to vector<1x16xf32>
    %20 = vector.shape_cast %19 : vector<1x16xf32> to vector<1x16x1xf32>
    %21 = vector.broadcast %20 : vector<1x16x1xf32> to vector<1x16x16xf32>
    %22 = arith.subf %18, %21 : vector<1x16x16xf32>
    %23 = math.exp %22 : vector<1x16x16xf32>
    %cst_9 = arith.constant dense<0.000000e+00> : vector<1x16xf32>
    %24 = vector.multi_reduction <add>, %23, %cst_9 [2] : vector<1x16x16xf32> to vector<1x16xf32>
    %25 = vector.shape_cast %24 : vector<1x16xf32> to vector<1x16x1xf32>
    %26 = tpu.reciprocal %25 {approx = true} : vector<1x16x1xf32> -> vector<1x16x1xf32>
    %27 = vector.broadcast %26 : vector<1x16x1xf32> to vector<1x16x16xf32>
    %28 = arith.mulf %23, %27 : vector<1x16x16xf32>
    "tpu.trace_start"() <{level = 10 : i32, message = "bqk,bkd->bqd"}> : () -> ()
    %cst_10 = arith.constant dense<0.000000e+00> : vector<1x16x8xf32>
    %29 = tpu.matmul %28, %15, %cst_10 {dimension_numbers = #tpu.dot_dimension_numbers<[2], [1], [1], [2], [0, 0, 0, 1, 1, 2], [0], [0]>} : vector<1x16x16xf32>, vector<1x16x8xf32>, vector<1x16x8xf32> -> vector<1x16x8xf32>
    "tpu.trace_stop"() : () -> ()
    %30 = arith.addf %13, %29 : vector<1x16x8xf32>
    %31 = vector.extract_strided_slice %8 {offsets = [0, 0, 8], sizes = [1, 16, 8], strides = [1, 1, 1]} : vector<1x16x32xf32> to vector<1x16x8xf32>
    %32 = vector.extract_strided_slice %10 {offsets = [0, 0, 8], sizes = [1, 16, 8], strides = [1, 1, 1]} : vector<1x16x32xf32> to vector<1x16x8xf32>
    %33 = vector.extract_strided_slice %12 {offsets = [0, 0, 8], sizes = [1, 16, 8], strides = [1, 1, 1]} : vector<1x16x32xf32> to vector<1x16x8xf32>
    "tpu.trace_start"() <{level = 10 : i32, message = "bqd,bkd->bqk"}> : () -> ()
    %cst_11 = arith.constant dense<0.000000e+00> : vector<1x16x16xf32>
    %34 = tpu.matmul %31, %32, %cst_11 {dimension_numbers = #tpu.dot_dimension_numbers<[2], [2], [1], [1], [0, 0, 0, 1, 1, 1], [0], [0]>} : vector<1x16x8xf32>, vector<1x16x8xf32>, vector<1x16x16xf32> -> vector<1x16x16xf32>
    "tpu.trace_stop"() : () -> ()
    %cst_12 = arith.constant 0.176776692 : f32
    %35 = vector.broadcast %cst_12 : f32 to vector<1x16x16xf32>
    %36 = arith.mulf %34, %35 : vector<1x16x16xf32>
    %cst_13 = arith.constant dense<0xFF800000> : vector<1x16xf32>
    %37 = vector.multi_reduction <maximumf>, %36, %cst_13 [2] : vector<1x16x16xf32> to vector<1x16xf32>
    %38 = vector.shape_cast %37 : vector<1x16xf32> to vector<1x16x1xf32>
    %39 = vector.broadcast %38 : vector<1x16x1xf32> to vector<1x16x16xf32>
    %40 = arith.subf %36, %39 : vector<1x16x16xf32>
    %41 = math.exp %40 : vector<1x16x16xf32>
    %cst_14 = arith.constant dense<0.000000e+00> : vector<1x16xf32>
    %42 = vector.multi_reduction <add>, %41, %cst_14 [2] : vector<1x16x16xf32> to vector<1x16xf32>
    %43 = vector.shape_cast %42 : vector<1x16xf32> to vector<1x16x1xf32>
    %44 = tpu.reciprocal %43 {approx = true} : vector<1x16x1xf32> -> vector<1x16x1xf32>
    %45 = vector.broadcast %44 : vector<1x16x1xf32> to vector<1x16x16xf32>
    %46 = arith.mulf %41, %45 : vector<1x16x16xf32>
    "tpu.trace_start"() <{level = 10 : i32, message = "bqk,bkd->bqd"}> : () -> ()
    %cst_15 = arith.constant dense<0.000000e+00> : vector<1x16x8xf32>
    %47 = tpu.matmul %46, %33, %cst_15 {dimension_numbers = #tpu.dot_dimension_numbers<[2], [1], [1], [2], [0, 0, 0, 1, 1, 2], [0], [0]>} : vector<1x16x16xf32>, vector<1x16x8xf32>, vector<1x16x8xf32> -> vector<1x16x8xf32>
    "tpu.trace_stop"() : () -> ()
    %48 = arith.addf %31, %47 : vector<1x16x8xf32>
    %49 = vector.extract_strided_slice %8 {offsets = [0, 0, 16], sizes = [1, 16, 8], strides = [1, 1, 1]} : vector<1x16x32xf32> to vector<1x16x8xf32>
    %50 = vector.extract_strided_slice %10 {offsets = [0, 0, 16], sizes = [1, 16, 8], strides = [1, 1, 1]} : vector<1x16x32xf32> to vector<1x16x8xf32>
    %51 = vector.extract_strided_slice %12 {offsets = [0, 0, 16], sizes = [1, 16, 8], strides = [1, 1, 1]} : vector<1x16x32xf32> to vector<1x16x8xf32>
    "tpu.trace_start"() <{level = 10 : i32, message = "bqd,bkd->bqk"}> : () -> ()
    %cst_16 = arith.constant dense<0.000000e+00> : vector<1x16x16xf32>
    %52 = tpu.matmul %49, %50, %cst_16 {dimension_numbers = #tpu.dot_dimension_numbers<[2], [2], [1], [1], [0, 0, 0, 1, 1, 1], [0], [0]>} : vector<1x16x8xf32>, vector<1x16x8xf32>, vector<1x16x16xf32> -> vector<1x16x16xf32>
    "tpu.trace_stop"() : () -> ()
    %cst_17 = arith.constant 0.176776692 : f32
    %53 = vector.broadcast %cst_17 : f32 to vector<1x16x16xf32>
    %54 = arith.mulf %52, %53 : vector<1x16x16xf32>
    %cst_18 = arith.constant dense<0xFF800000> : vector<1x16xf32>
    %55 = vector.multi_reduction <maximumf>, %54, %cst_18 [2] : vector<1x16x16xf32> to vector<1x16xf32>
    %56 = vector.shape_cast %55 : vector<1x16xf32> to vector<1x16x1xf32>
    %57 = vector.broadcast %56 : vector<1x16x1xf32> to vector<1x16x16xf32>
    %58 = arith.subf %54, %57 : vector<1x16x16xf32>
    %59 = math.exp %58 : vector<1x16x16xf32>
    %cst_19 = arith.constant dense<0.000000e+00> : vector<1x16xf32>
    %60 = vector.multi_reduction <add>, %59, %cst_19 [2] : vector<1x16x16xf32> to vector<1x16xf32>
    %61 = vector.shape_cast %60 : vector<1x16xf32> to vector<1x16x1xf32>
    %62 = tpu.reciprocal %61 {approx = true} : vector<1x16x1xf32> -> vector<1x16x1xf32>
    %63 = vector.broadcast %62 : vector<1x16x1xf32> to vector<1x16x16xf32>
    %64 = arith.mulf %59, %63 : vector<1x16x16xf32>
    "tpu.trace_start"() <{level = 10 : i32, message = "bqk,bkd->bqd"}> : () -> ()
    %cst_20 = arith.constant dense<0.000000e+00> : vector<1x16x8xf32>
    %65 = tpu.matmul %64, %51, %cst_20 {dimension_numbers = #tpu.dot_dimension_numbers<[2], [1], [1], [2], [0, 0, 0, 1, 1, 2], [0], [0]>} : vector<1x16x16xf32>, vector<1x16x8xf32>, vector<1x16x8xf32> -> vector<1x16x8xf32>
    "tpu.trace_stop"() : () -> ()
    %66 = arith.addf %49, %65 : vector<1x16x8xf32>
    %67 = vector.extract_strided_slice %8 {offsets = [0, 0, 24], sizes = [1, 16, 8], strides = [1, 1, 1]} : vector<1x16x32xf32> to vector<1x16x8xf32>
    %68 = vector.extract_strided_slice %10 {offsets = [0, 0, 24], sizes = [1, 16, 8], strides = [1, 1, 1]} : vector<1x16x32xf32> to vector<1x16x8xf32>
    %69 = vector.extract_strided_slice %12 {offsets = [0, 0, 24], sizes = [1, 16, 8], strides = [1, 1, 1]} : vector<1x16x32xf32> to vector<1x16x8xf32>
    "tpu.trace_start"() <{level = 10 : i32, message = "bqd,bkd->bqk"}> : () -> ()
    %cst_21 = arith.constant dense<0.000000e+00> : vector<1x16x16xf32>
    %70 = tpu.matmul %67, %68, %cst_21 {dimension_numbers = #tpu.dot_dimension_numbers<[2], [2], [1], [1], [0, 0, 0, 1, 1, 1], [0], [0]>} : vector<1x16x8xf32>, vector<1x16x8xf32>, vector<1x16x16xf32> -> vector<1x16x16xf32>
    "tpu.trace_stop"() : () -> ()
    %cst_22 = arith.constant 0.176776692 : f32
    %71 = vector.broadcast %cst_22 : f32 to vector<1x16x16xf32>
    %72 = arith.mulf %70, %71 : vector<1x16x16xf32>
    %cst_23 = arith.constant dense<0xFF800000> : vector<1x16xf32>
    %73 = vector.multi_reduction <maximumf>, %72, %cst_23 [2] : vector<1x16x16xf32> to vector<1x16xf32>
    %74 = vector.shape_cast %73 : vector<1x16xf32> to vector<1x16x1xf32>
    %75 = vector.broadcast %74 : vector<1x16x1xf32> to vector<1x16x16xf32>
    %76 = arith.subf %72, %75 : vector<1x16x16xf32>
    %77 = math.exp %76 : vector<1x16x16xf32>
    %cst_24 = arith.constant dense<0.000000e+00> : vector<1x16xf32>
    %78 = vector.multi_reduction <add>, %77, %cst_24 [2] : vector<1x16x16xf32> to vector<1x16xf32>
    %79 = vector.shape_cast %78 : vector<1x16xf32> to vector<1x16x1xf32>
    %80 = tpu.reciprocal %79 {approx = true} : vector<1x16x1xf32> -> vector<1x16x1xf32>
    %81 = vector.broadcast %80 : vector<1x16x1xf32> to vector<1x16x16xf32>
    %82 = arith.mulf %77, %81 : vector<1x16x16xf32>
    "tpu.trace_start"() <{level = 10 : i32, message = "bqk,bkd->bqd"}> : () -> ()
    %cst_25 = arith.constant dense<0.000000e+00> : vector<1x16x8xf32>
    %83 = tpu.matmul %82, %69, %cst_25 {dimension_numbers = #tpu.dot_dimension_numbers<[2], [1], [1], [2], [0, 0, 0, 1, 1, 2], [0], [0]>} : vector<1x16x16xf32>, vector<1x16x8xf32>, vector<1x16x8xf32> -> vector<1x16x8xf32>
    "tpu.trace_stop"() : () -> ()
    %84 = arith.addf %67, %83 : vector<1x16x8xf32>
    %85 = tpu.concatenate %30, %48, %66, %84 in 2 : vector<1x16x8xf32>, vector<1x16x8xf32>, vector<1x16x8xf32>, vector<1x16x8xf32> -> vector<1x16x32xf32>
    %86 = vector.shape_cast %85 : vector<1x16x32xf32> to vector<16x32xf32>
    %c0_26 = arith.constant 0 : index
    %c0_27 = arith.constant 0 : index
    %87 = vector.load %arg5[%c0_26, %c0_27] : memref<32x32xf32, #tpu.memory_space<vmem>>, vector<32x32xf32>
    %cst_28 = arith.constant dense<0.000000e+00> : vector<16x32xf32>
    %88 = tpu.matmul %86, %87, %cst_28 {dimension_numbers = #tpu.dot_dimension_numbers<[1], [0], [0], [1], [0, 0, 1, 1], [], []>} : vector<16x32xf32>, vector<32x32xf32>, vector<16x32xf32> -> vector<16x32xf32>
    %c0_29 = arith.constant 0 : index
    %c0_30 = arith.constant 0 : index
    %89 = vector.load %arg6[%c0_29, %c0_30] : memref<1x32xf32, #tpu.memory_space<vmem>>, vector<1x32xf32>
    %90 = vector.broadcast %89 : vector<1x32xf32> to vector<16x32xf32>
    %91 = arith.addf %88, %90 : vector<16x32xf32>
    %cst_31 = arith.constant 0.000000e+00 : f32
    %92 = vector.broadcast %cst_31 : f32 to vector<16x32xf32>
    %93 = arith.maximumf %91, %92 : vector<16x32xf32>
    %94 = arith.addf %86, %93 : vector<16x32xf32>
    %95 = vector.shape_cast %94 : vector<16x32xf32> to vector<1x16x32xf32>
    %96 = vector.shape_cast %95 : vector<1x16x32xf32> to vector<16x32xf32>
    %c0_32 = arith.constant 0 : index
    %c0_33 = arith.constant 0 : index
    %97 = vector.load %arg7[%c0_32, %c0_33] : memref<32x96xf32, #tpu.memory_space<vmem>>, vector<32x96xf32>
    %cst_34 = arith.constant dense<0.000000e+00> : vector<16x96xf32>
    %98 = tpu.matmul %96, %97, %cst_34 {dimension_numbers = #tpu.dot_dimension_numbers<[1], [0], [0], [1], [0, 0, 1, 1], [], []>} : vector<16x32xf32>, vector<32x96xf32>, vector<16x96xf32> -> vector<16x96xf32>
    %c0_35 = arith.constant 0 : index
    %c0_36 = arith.constant 0 : index
    %99 = vector.load %arg8[%c0_35, %c0_36] : memref<1x96xf32, #tpu.memory_space<vmem>>, vector<1x96xf32>
    %100 = vector.broadcast %99 : vector<1x96xf32> to vector<16x96xf32>
    %101 = arith.addf %98, %100 : vector<16x96xf32>
    %102 = vector.extract_strided_slice %101 {offsets = [0, 0], sizes = [16, 32], strides = [1, 1]} : vector<16x96xf32> to vector<16x32xf32>
    %103 = vector.shape_cast %102 : vector<16x32xf32> to vector<1x16x32xf32>
    %104 = vector.extract_strided_slice %101 {offsets = [0, 32], sizes = [16, 32], strides = [1, 1]} : vector<16x96xf32> to vector<16x32xf32>
    %105 = vector.shape_cast %104 : vector<16x32xf32> to vector<1x16x32xf32>
    %106 = vector.extract_strided_slice %101 {offsets = [0, 64], sizes = [16, 32], strides = [1, 1]} : vector<16x96xf32> to vector<16x32xf32>
    %107 = vector.shape_cast %106 : vector<16x32xf32> to vector<1x16x32xf32>
    %108 = vector.extract_strided_slice %103 {offsets = [0, 0, 0], sizes = [1, 16, 8], strides = [1, 1, 1]} : vector<1x16x32xf32> to vector<1x16x8xf32>
    %109 = vector.extract_strided_slice %105 {offsets = [0, 0, 0], sizes = [1, 16, 8], strides = [1, 1, 1]} : vector<1x16x32xf32> to vector<1x16x8xf32>
    %110 = vector.extract_strided_slice %107 {offsets = [0, 0, 0], sizes = [1, 16, 8], strides = [1, 1, 1]} : vector<1x16x32xf32> to vector<1x16x8xf32>
    "tpu.trace_start"() <{level = 10 : i32, message = "bqd,bkd->bqk"}> : () -> ()
    %cst_37 = arith.constant dense<0.000000e+00> : vector<1x16x16xf32>
    %111 = tpu.matmul %108, %109, %cst_37 {dimension_numbers = #tpu.dot_dimension_numbers<[2], [2], [1], [1], [0, 0, 0, 1, 1, 1], [0], [0]>} : vector<1x16x8xf32>, vector<1x16x8xf32>, vector<1x16x16xf32> -> vector<1x16x16xf32>
    "tpu.trace_stop"() : () -> ()
    %cst_38 = arith.constant 0.176776692 : f32
    %112 = vector.broadcast %cst_38 : f32 to vector<1x16x16xf32>
    %113 = arith.mulf %111, %112 : vector<1x16x16xf32>
    %cst_39 = arith.constant dense<0xFF800000> : vector<1x16xf32>
    %114 = vector.multi_reduction <maximumf>, %113, %cst_39 [2] : vector<1x16x16xf32> to vector<1x16xf32>
    %115 = vector.shape_cast %114 : vector<1x16xf32> to vector<1x16x1xf32>
    %116 = vector.broadcast %115 : vector<1x16x1xf32> to vector<1x16x16xf32>
    %117 = arith.subf %113, %116 : vector<1x16x16xf32>
    %118 = math.exp %117 : vector<1x16x16xf32>
    %cst_40 = arith.constant dense<0.000000e+00> : vector<1x16xf32>
    %119 = vector.multi_reduction <add>, %118, %cst_40 [2] : vector<1x16x16xf32> to vector<1x16xf32>
    %120 = vector.shape_cast %119 : vector<1x16xf32> to vector<1x16x1xf32>
    %121 = tpu.reciprocal %120 {approx = true} : vector<1x16x1xf32> -> vector<1x16x1xf32>
    %122 = vector.broadcast %121 : vector<1x16x1xf32> to vector<1x16x16xf32>
    %123 = arith.mulf %118, %122 : vector<1x16x16xf32>
    "tpu.trace_start"() <{level = 10 : i32, message = "bqk,bkd->bqd"}> : () -> ()
    %cst_41 = arith.constant dense<0.000000e+00> : vector<1x16x8xf32>
    %124 = tpu.matmul %123, %110, %cst_41 {dimension_numbers = #tpu.dot_dimension_numbers<[2], [1], [1], [2], [0, 0, 0, 1, 1, 2], [0], [0]>} : vector<1x16x16xf32>, vector<1x16x8xf32>, vector<1x16x8xf32> -> vector<1x16x8xf32>
    "tpu.trace_stop"() : () -> ()
    %125 = arith.addf %108, %124 : vector<1x16x8xf32>
    %126 = vector.extract_strided_slice %103 {offsets = [0, 0, 8], sizes = [1, 16, 8], strides = [1, 1, 1]} : vector<1x16x32xf32> to vector<1x16x8xf32>
    %127 = vector.extract_strided_slice %105 {offsets = [0, 0, 8], sizes = [1, 16, 8], strides = [1, 1, 1]} : vector<1x16x32xf32> to vector<1x16x8xf32>
    %128 = vector.extract_strided_slice %107 {offsets = [0, 0, 8], sizes = [1, 16, 8], strides = [1, 1, 1]} : vector<1x16x32xf32> to vector<1x16x8xf32>
    "tpu.trace_start"() <{level = 10 : i32, message = "bqd,bkd->bqk"}> : () -> ()
    %cst_42 = arith.constant dense<0.000000e+00> : vector<1x16x16xf32>
    %129 = tpu.matmul %126, %127, %cst_42 {dimension_numbers = #tpu.dot_dimension_numbers<[2], [2], [1], [1], [0, 0, 0, 1, 1, 1], [0], [0]>} : vector<1x16x8xf32>, vector<1x16x8xf32>, vector<1x16x16xf32> -> vector<1x16x16xf32>
    "tpu.trace_stop"() : () -> ()
    %cst_43 = arith.constant 0.176776692 : f32
    %130 = vector.broadcast %cst_43 : f32 to vector<1x16x16xf32>
    %131 = arith.mulf %129, %130 : vector<1x16x16xf32>
    %cst_44 = arith.constant dense<0xFF800000> : vector<1x16xf32>
    %132 = vector.multi_reduction <maximumf>, %131, %cst_44 [2] : vector<1x16x16xf32> to vector<1x16xf32>
    %133 = vector.shape_cast %132 : vector<1x16xf32> to vector<1x16x1xf32>
    %134 = vector.broadcast %133 : vector<1x16x1xf32> to vector<1x16x16xf32>
    %135 = arith.subf %131, %134 : vector<1x16x16xf32>
    %136 = math.exp %135 : vector<1x16x16xf32>
    %cst_45 = arith.constant dense<0.000000e+00> : vector<1x16xf32>
    %137 = vector.multi_reduction <add>, %136, %cst_45 [2] : vector<1x16x16xf32> to vector<1x16xf32>
    %138 = vector.shape_cast %137 : vector<1x16xf32> to vector<1x16x1xf32>
    %139 = tpu.reciprocal %138 {approx = true} : vector<1x16x1xf32> -> vector<1x16x1xf32>
    %140 = vector.broadcast %139 : vector<1x16x1xf32> to vector<1x16x16xf32>
    %141 = arith.mulf %136, %140 : vector<1x16x16xf32>
    "tpu.trace_start"() <{level = 10 : i32, message = "bqk,bkd->bqd"}> : () -> ()
    %cst_46 = arith.constant dense<0.000000e+00> : vector<1x16x8xf32>
    %142 = tpu.matmul %141, %128, %cst_46 {dimension_numbers = #tpu.dot_dimension_numbers<[2], [1], [1], [2], [0, 0, 0, 1, 1, 2], [0], [0]>} : vector<1x16x16xf32>, vector<1x16x8xf32>, vector<1x16x8xf32> -> vector<1x16x8xf32>
    "tpu.trace_stop"() : () -> ()
    %143 = arith.addf %126, %142 : vector<1x16x8xf32>
    %144 = vector.extract_strided_slice %103 {offsets = [0, 0, 16], sizes = [1, 16, 8], strides = [1, 1, 1]} : vector<1x16x32xf32> to vector<1x16x8xf32>
    %145 = vector.extract_strided_slice %105 {offsets = [0, 0, 16], sizes = [1, 16, 8], strides = [1, 1, 1]} : vector<1x16x32xf32> to vector<1x16x8xf32>
    %146 = vector.extract_strided_slice %107 {offsets = [0, 0, 16], sizes = [1, 16, 8], strides = [1, 1, 1]} : vector<1x16x32xf32> to vector<1x16x8xf32>
    "tpu.trace_start"() <{level = 10 : i32, message = "bqd,bkd->bqk"}> : () -> ()
    %cst_47 = arith.constant dense<0.000000e+00> : vector<1x16x16xf32>
    %147 = tpu.matmul %144, %145, %cst_47 {dimension_numbers = #tpu.dot_dimension_numbers<[2], [2], [1], [1], [0, 0, 0, 1, 1, 1], [0], [0]>} : vector<1x16x8xf32>, vector<1x16x8xf32>, vector<1x16x16xf32> -> vector<1x16x16xf32>
    "tpu.trace_stop"() : () -> ()
    %cst_48 = arith.constant 0.176776692 : f32
    %148 = vector.broadcast %cst_48 : f32 to vector<1x16x16xf32>
    %149 = arith.mulf %147, %148 : vector<1x16x16xf32>
    %cst_49 = arith.constant dense<0xFF800000> : vector<1x16xf32>
    %150 = vector.multi_reduction <maximumf>, %149, %cst_49 [2] : vector<1x16x16xf32> to vector<1x16xf32>
    %151 = vector.shape_cast %150 : vector<1x16xf32> to vector<1x16x1xf32>
    %152 = vector.broadcast %151 : vector<1x16x1xf32> to vector<1x16x16xf32>
    %153 = arith.subf %149, %152 : vector<1x16x16xf32>
    %154 = math.exp %153 : vector<1x16x16xf32>
    %cst_50 = arith.constant dense<0.000000e+00> : vector<1x16xf32>
    %155 = vector.multi_reduction <add>, %154, %cst_50 [2] : vector<1x16x16xf32> to vector<1x16xf32>
    %156 = vector.shape_cast %155 : vector<1x16xf32> to vector<1x16x1xf32>
    %157 = tpu.reciprocal %156 {approx = true} : vector<1x16x1xf32> -> vector<1x16x1xf32>
    %158 = vector.broadcast %157 : vector<1x16x1xf32> to vector<1x16x16xf32>
    %159 = arith.mulf %154, %158 : vector<1x16x16xf32>
    "tpu.trace_start"() <{level = 10 : i32, message = "bqk,bkd->bqd"}> : () -> ()
    %cst_51 = arith.constant dense<0.000000e+00> : vector<1x16x8xf32>
    %160 = tpu.matmul %159, %146, %cst_51 {dimension_numbers = #tpu.dot_dimension_numbers<[2], [1], [1], [2], [0, 0, 0, 1, 1, 2], [0], [0]>} : vector<1x16x16xf32>, vector<1x16x8xf32>, vector<1x16x8xf32> -> vector<1x16x8xf32>
    "tpu.trace_stop"() : () -> ()
    %161 = arith.addf %144, %160 : vector<1x16x8xf32>
    %162 = vector.extract_strided_slice %103 {offsets = [0, 0, 24], sizes = [1, 16, 8], strides = [1, 1, 1]} : vector<1x16x32xf32> to vector<1x16x8xf32>
    %163 = vector.extract_strided_slice %105 {offsets = [0, 0, 24], sizes = [1, 16, 8], strides = [1, 1, 1]} : vector<1x16x32xf32> to vector<1x16x8xf32>
    %164 = vector.extract_strided_slice %107 {offsets = [0, 0, 24], sizes = [1, 16, 8], strides = [1, 1, 1]} : vector<1x16x32xf32> to vector<1x16x8xf32>
    "tpu.trace_start"() <{level = 10 : i32, message = "bqd,bkd->bqk"}> : () -> ()
    %cst_52 = arith.constant dense<0.000000e+00> : vector<1x16x16xf32>
    %165 = tpu.matmul %162, %163, %cst_52 {dimension_numbers = #tpu.dot_dimension_numbers<[2], [2], [1], [1], [0, 0, 0, 1, 1, 1], [0], [0]>} : vector<1x16x8xf32>, vector<1x16x8xf32>, vector<1x16x16xf32> -> vector<1x16x16xf32>
    "tpu.trace_stop"() : () -> ()
    %cst_53 = arith.constant 0.176776692 : f32
    %166 = vector.broadcast %cst_53 : f32 to vector<1x16x16xf32>
    %167 = arith.mulf %165, %166 : vector<1x16x16xf32>
    %cst_54 = arith.constant dense<0xFF800000> : vector<1x16xf32>
    %168 = vector.multi_reduction <maximumf>, %167, %cst_54 [2] : vector<1x16x16xf32> to vector<1x16xf32>
    %169 = vector.shape_cast %168 : vector<1x16xf32> to vector<1x16x1xf32>
    %170 = vector.broadcast %169 : vector<1x16x1xf32> to vector<1x16x16xf32>
    %171 = arith.subf %167, %170 : vector<1x16x16xf32>
    %172 = math.exp %171 : vector<1x16x16xf32>
    %cst_55 = arith.constant dense<0.000000e+00> : vector<1x16xf32>
    %173 = vector.multi_reduction <add>, %172, %cst_55 [2] : vector<1x16x16xf32> to vector<1x16xf32>
    %174 = vector.shape_cast %173 : vector<1x16xf32> to vector<1x16x1xf32>
    %175 = tpu.reciprocal %174 {approx = true} : vector<1x16x1xf32> -> vector<1x16x1xf32>
    %176 = vector.broadcast %175 : vector<1x16x1xf32> to vector<1x16x16xf32>
    %177 = arith.mulf %172, %176 : vector<1x16x16xf32>
    "tpu.trace_start"() <{level = 10 : i32, message = "bqk,bkd->bqd"}> : () -> ()
    %cst_56 = arith.constant dense<0.000000e+00> : vector<1x16x8xf32>
    %178 = tpu.matmul %177, %164, %cst_56 {dimension_numbers = #tpu.dot_dimension_numbers<[2], [1], [1], [2], [0, 0, 0, 1, 1, 2], [0], [0]>} : vector<1x16x16xf32>, vector<1x16x8xf32>, vector<1x16x8xf32> -> vector<1x16x8xf32>
    "tpu.trace_stop"() : () -> ()
    %179 = arith.addf %162, %178 : vector<1x16x8xf32>
    %180 = tpu.concatenate %125, %143, %161, %179 in 2 : vector<1x16x8xf32>, vector<1x16x8xf32>, vector<1x16x8xf32>, vector<1x16x8xf32> -> vector<1x16x32xf32>
    %181 = vector.shape_cast %180 : vector<1x16x32xf32> to vector<16x32xf32>
    %c0_57 = arith.constant 0 : index
    %c0_58 = arith.constant 0 : index
    %182 = vector.load %arg9[%c0_57, %c0_58] : memref<32x32xf32, #tpu.memory_space<vmem>>, vector<32x32xf32>
    %cst_59 = arith.constant dense<0.000000e+00> : vector<16x32xf32>
    %183 = tpu.matmul %181, %182, %cst_59 {dimension_numbers = #tpu.dot_dimension_numbers<[1], [0], [0], [1], [0, 0, 1, 1], [], []>} : vector<16x32xf32>, vector<32x32xf32>, vector<16x32xf32> -> vector<16x32xf32>
    %c0_60 = arith.constant 0 : index
    %c0_61 = arith.constant 0 : index
    %184 = vector.load %arg10[%c0_60, %c0_61] : memref<1x32xf32, #tpu.memory_space<vmem>>, vector<1x32xf32>
    %185 = vector.broadcast %184 : vector<1x32xf32> to vector<16x32xf32>
    %186 = arith.addf %183, %185 : vector<16x32xf32>
    %cst_62 = arith.constant 0.000000e+00 : f32
    %187 = vector.broadcast %cst_62 : f32 to vector<16x32xf32>
    %188 = arith.maximumf %186, %187 : vector<16x32xf32>
    %189 = arith.addf %181, %188 : vector<16x32xf32>
    %190 = vector.shape_cast %189 : vector<16x32xf32> to vector<1x16x32xf32>
    %c0_63 = arith.constant 0 : index
    %c0_64 = arith.constant 0 : index
    %c0_65 = arith.constant 0 : index
    %191 = vector.load %arg2[%c0_63, %c0_64, %c0_65] : memref<1x2x32xf32, #tpu.memory_space<vmem>>, vector<1x2x32xf32>
    %192 = vector.shape_cast %191 : vector<1x2x32xf32> to vector<2x32xf32>
    %c0_66 = arith.constant 0 : index
    %c0_67 = arith.constant 0 : index
    %193 = vector.load %arg11[%c0_66, %c0_67] : memref<32x32xf32, #tpu.memory_space<vmem>>, vector<32x32xf32>
    %cst_68 = arith.constant dense<0.000000e+00> : vector<2x32xf32>
    %194 = tpu.matmul %192, %193, %cst_68 {dimension_numbers = #tpu.dot_dimension_numbers<[1], [0], [0], [1], [0, 0, 1, 1], [], []>} : vector<2x32xf32>, vector<32x32xf32>, vector<2x32xf32> -> vector<2x32xf32>
    %c0_69 = arith.constant 0 : index
    %c0_70 = arith.constant 0 : index
    %195 = vector.load %arg12[%c0_69, %c0_70] : memref<1x32xf32, #tpu.memory_space<vmem>>, vector<1x32xf32>
    %196 = vector.broadcast %195 : vector<1x32xf32> to vector<2x32xf32>
    %197 = arith.addf %194, %196 : vector<2x32xf32>
    %198 = vector.shape_cast %197 : vector<2x32xf32> to vector<1x2x32xf32>
    %199 = vector.shape_cast %190 : vector<1x16x32xf32> to vector<16x32xf32>
    %c0_71 = arith.constant 0 : index
    %c0_72 = arith.constant 0 : index
    %200 = vector.load %arg13[%c0_71, %c0_72] : memref<32x64xf32, #tpu.memory_space<vmem>>, vector<32x64xf32>
    %cst_73 = arith.constant dense<0.000000e+00> : vector<16x64xf32>
    %201 = tpu.matmul %199, %200, %cst_73 {dimension_numbers = #tpu.dot_dimension_numbers<[1], [0], [0], [1], [0, 0, 1, 1], [], []>} : vector<16x32xf32>, vector<32x64xf32>, vector<16x64xf32> -> vector<16x64xf32>
    %c0_74 = arith.constant 0 : index
    %c0_75 = arith.constant 0 : index
    %202 = vector.load %arg14[%c0_74, %c0_75] : memref<1x64xf32, #tpu.memory_space<vmem>>, vector<1x64xf32>
    %203 = vector.broadcast %202 : vector<1x64xf32> to vector<16x64xf32>
    %204 = arith.addf %201, %203 : vector<16x64xf32>
    %205 = vector.extract_strided_slice %204 {offsets = [0, 0], sizes = [16, 32], strides = [1, 1]} : vector<16x64xf32> to vector<16x32xf32>
    %206 = vector.shape_cast %205 : vector<16x32xf32> to vector<1x16x32xf32>
    %207 = vector.extract_strided_slice %204 {offsets = [0, 32], sizes = [16, 32], strides = [1, 1]} : vector<16x64xf32> to vector<16x32xf32>
    %208 = vector.shape_cast %207 : vector<16x32xf32> to vector<1x16x32xf32>
    %209 = vector.extract_strided_slice %198 {offsets = [0, 0, 0], sizes = [1, 2, 8], strides = [1, 1, 1]} : vector<1x2x32xf32> to vector<1x2x8xf32>
    %210 = vector.extract_strided_slice %206 {offsets = [0, 0, 0], sizes = [1, 16, 8], strides = [1, 1, 1]} : vector<1x16x32xf32> to vector<1x16x8xf32>
    %211 = vector.extract_strided_slice %208 {offsets = [0, 0, 0], sizes = [1, 16, 8], strides = [1, 1, 1]} : vector<1x16x32xf32> to vector<1x16x8xf32>
    "tpu.trace_start"() <{level = 10 : i32, message = "bqd,bkd->bqk"}> : () -> ()
    %cst_76 = arith.constant dense<0.000000e+00> : vector<1x2x16xf32>
    %212 = tpu.matmul %209, %210, %cst_76 {dimension_numbers = #tpu.dot_dimension_numbers<[2], [2], [1], [1], [0, 0, 0, 1, 1, 1], [0], [0]>} : vector<1x2x8xf32>, vector<1x16x8xf32>, vector<1x2x16xf32> -> vector<1x2x16xf32>
    "tpu.trace_stop"() : () -> ()
    %cst_77 = arith.constant 0.176776692 : f32
    %213 = vector.broadcast %cst_77 : f32 to vector<1x2x16xf32>
    %214 = arith.mulf %212, %213 : vector<1x2x16xf32>
    %cst_78 = arith.constant dense<0xFF800000> : vector<1x2xf32>
    %215 = vector.multi_reduction <maximumf>, %214, %cst_78 [2] : vector<1x2x16xf32> to vector<1x2xf32>
    %216 = vector.shape_cast %215 : vector<1x2xf32> to vector<1x2x1xf32>
    %217 = vector.broadcast %216 : vector<1x2x1xf32> to vector<1x2x16xf32>
    %218 = arith.subf %214, %217 : vector<1x2x16xf32>
    %219 = math.exp %218 : vector<1x2x16xf32>
    %cst_79 = arith.constant dense<0.000000e+00> : vector<1x2xf32>
    %220 = vector.multi_reduction <add>, %219, %cst_79 [2] : vector<1x2x16xf32> to vector<1x2xf32>
    %221 = vector.shape_cast %220 : vector<1x2xf32> to vector<1x2x1xf32>
    %222 = tpu.reciprocal %221 {approx = true} : vector<1x2x1xf32> -> vector<1x2x1xf32>
    %223 = vector.broadcast %222 : vector<1x2x1xf32> to vector<1x2x16xf32>
    %224 = arith.mulf %219, %223 : vector<1x2x16xf32>
    "tpu.trace_start"() <{level = 10 : i32, message = "bqk,bkd->bqd"}> : () -> ()
    %cst_80 = arith.constant dense<0.000000e+00> : vector<1x2x8xf32>
    %225 = tpu.matmul %224, %211, %cst_80 {dimension_numbers = #tpu.dot_dimension_numbers<[2], [1], [1], [2], [0, 0, 0, 1, 1, 2], [0], [0]>} : vector<1x2x16xf32>, vector<1x16x8xf32>, vector<1x2x8xf32> -> vector<1x2x8xf32>
    "tpu.trace_stop"() : () -> ()
    %226 = arith.addf %209, %225 : vector<1x2x8xf32>
    %227 = vector.extract_strided_slice %198 {offsets = [0, 0, 8], sizes = [1, 2, 8], strides = [1, 1, 1]} : vector<1x2x32xf32> to vector<1x2x8xf32>
    %228 = vector.extract_strided_slice %206 {offsets = [0, 0, 8], sizes = [1, 16, 8], strides = [1, 1, 1]} : vector<1x16x32xf32> to vector<1x16x8xf32>
    %229 = vector.extract_strided_slice %208 {offsets = [0, 0, 8], sizes = [1, 16, 8], strides = [1, 1, 1]} : vector<1x16x32xf32> to vector<1x16x8xf32>
    "tpu.trace_start"() <{level = 10 : i32, message = "bqd,bkd->bqk"}> : () -> ()
    %cst_81 = arith.constant dense<0.000000e+00> : vector<1x2x16xf32>
    %230 = tpu.matmul %227, %228, %cst_81 {dimension_numbers = #tpu.dot_dimension_numbers<[2], [2], [1], [1], [0, 0, 0, 1, 1, 1], [0], [0]>} : vector<1x2x8xf32>, vector<1x16x8xf32>, vector<1x2x16xf32> -> vector<1x2x16xf32>
    "tpu.trace_stop"() : () -> ()
    %cst_82 = arith.constant 0.176776692 : f32
    %231 = vector.broadcast %cst_82 : f32 to vector<1x2x16xf32>
    %232 = arith.mulf %230, %231 : vector<1x2x16xf32>
    %cst_83 = arith.constant dense<0xFF800000> : vector<1x2xf32>
    %233 = vector.multi_reduction <maximumf>, %232, %cst_83 [2] : vector<1x2x16xf32> to vector<1x2xf32>
    %234 = vector.shape_cast %233 : vector<1x2xf32> to vector<1x2x1xf32>
    %235 = vector.broadcast %234 : vector<1x2x1xf32> to vector<1x2x16xf32>
    %236 = arith.subf %232, %235 : vector<1x2x16xf32>
    %237 = math.exp %236 : vector<1x2x16xf32>
    %cst_84 = arith.constant dense<0.000000e+00> : vector<1x2xf32>
    %238 = vector.multi_reduction <add>, %237, %cst_84 [2] : vector<1x2x16xf32> to vector<1x2xf32>
    %239 = vector.shape_cast %238 : vector<1x2xf32> to vector<1x2x1xf32>
    %240 = tpu.reciprocal %239 {approx = true} : vector<1x2x1xf32> -> vector<1x2x1xf32>
    %241 = vector.broadcast %240 : vector<1x2x1xf32> to vector<1x2x16xf32>
    %242 = arith.mulf %237, %241 : vector<1x2x16xf32>
    "tpu.trace_start"() <{level = 10 : i32, message = "bqk,bkd->bqd"}> : () -> ()
    %cst_85 = arith.constant dense<0.000000e+00> : vector<1x2x8xf32>
    %243 = tpu.matmul %242, %229, %cst_85 {dimension_numbers = #tpu.dot_dimension_numbers<[2], [1], [1], [2], [0, 0, 0, 1, 1, 2], [0], [0]>} : vector<1x2x16xf32>, vector<1x16x8xf32>, vector<1x2x8xf32> -> vector<1x2x8xf32>
    "tpu.trace_stop"() : () -> ()
    %244 = arith.addf %227, %243 : vector<1x2x8xf32>
    %245 = vector.extract_strided_slice %198 {offsets = [0, 0, 16], sizes = [1, 2, 8], strides = [1, 1, 1]} : vector<1x2x32xf32> to vector<1x2x8xf32>
    %246 = vector.extract_strided_slice %206 {offsets = [0, 0, 16], sizes = [1, 16, 8], strides = [1, 1, 1]} : vector<1x16x32xf32> to vector<1x16x8xf32>
    %247 = vector.extract_strided_slice %208 {offsets = [0, 0, 16], sizes = [1, 16, 8], strides = [1, 1, 1]} : vector<1x16x32xf32> to vector<1x16x8xf32>
    "tpu.trace_start"() <{level = 10 : i32, message = "bqd,bkd->bqk"}> : () -> ()
    %cst_86 = arith.constant dense<0.000000e+00> : vector<1x2x16xf32>
    %248 = tpu.matmul %245, %246, %cst_86 {dimension_numbers = #tpu.dot_dimension_numbers<[2], [2], [1], [1], [0, 0, 0, 1, 1, 1], [0], [0]>} : vector<1x2x8xf32>, vector<1x16x8xf32>, vector<1x2x16xf32> -> vector<1x2x16xf32>
    "tpu.trace_stop"() : () -> ()
    %cst_87 = arith.constant 0.176776692 : f32
    %249 = vector.broadcast %cst_87 : f32 to vector<1x2x16xf32>
    %250 = arith.mulf %248, %249 : vector<1x2x16xf32>
    %cst_88 = arith.constant dense<0xFF800000> : vector<1x2xf32>
    %251 = vector.multi_reduction <maximumf>, %250, %cst_88 [2] : vector<1x2x16xf32> to vector<1x2xf32>
    %252 = vector.shape_cast %251 : vector<1x2xf32> to vector<1x2x1xf32>
    %253 = vector.broadcast %252 : vector<1x2x1xf32> to vector<1x2x16xf32>
    %254 = arith.subf %250, %253 : vector<1x2x16xf32>
    %255 = math.exp %254 : vector<1x2x16xf32>
    %cst_89 = arith.constant dense<0.000000e+00> : vector<1x2xf32>
    %256 = vector.multi_reduction <add>, %255, %cst_89 [2] : vector<1x2x16xf32> to vector<1x2xf32>
    %257 = vector.shape_cast %256 : vector<1x2xf32> to vector<1x2x1xf32>
    %258 = tpu.reciprocal %257 {approx = true} : vector<1x2x1xf32> -> vector<1x2x1xf32>
    %259 = vector.broadcast %258 : vector<1x2x1xf32> to vector<1x2x16xf32>
    %260 = arith.mulf %255, %259 : vector<1x2x16xf32>
    "tpu.trace_start"() <{level = 10 : i32, message = "bqk,bkd->bqd"}> : () -> ()
    %cst_90 = arith.constant dense<0.000000e+00> : vector<1x2x8xf32>
    %261 = tpu.matmul %260, %247, %cst_90 {dimension_numbers = #tpu.dot_dimension_numbers<[2], [1], [1], [2], [0, 0, 0, 1, 1, 2], [0], [0]>} : vector<1x2x16xf32>, vector<1x16x8xf32>, vector<1x2x8xf32> -> vector<1x2x8xf32>
    "tpu.trace_stop"() : () -> ()
    %262 = arith.addf %245, %261 : vector<1x2x8xf32>
    %263 = vector.extract_strided_slice %198 {offsets = [0, 0, 24], sizes = [1, 2, 8], strides = [1, 1, 1]} : vector<1x2x32xf32> to vector<1x2x8xf32>
    %264 = vector.extract_strided_slice %206 {offsets = [0, 0, 24], sizes = [1, 16, 8], strides = [1, 1, 1]} : vector<1x16x32xf32> to vector<1x16x8xf32>
    %265 = vector.extract_strided_slice %208 {offsets = [0, 0, 24], sizes = [1, 16, 8], strides = [1, 1, 1]} : vector<1x16x32xf32> to vector<1x16x8xf32>
    "tpu.trace_start"() <{level = 10 : i32, message = "bqd,bkd->bqk"}> : () -> ()
    %cst_91 = arith.constant dense<0.000000e+00> : vector<1x2x16xf32>
    %266 = tpu.matmul %263, %264, %cst_91 {dimension_numbers = #tpu.dot_dimension_numbers<[2], [2], [1], [1], [0, 0, 0, 1, 1, 1], [0], [0]>} : vector<1x2x8xf32>, vector<1x16x8xf32>, vector<1x2x16xf32> -> vector<1x2x16xf32>
    "tpu.trace_stop"() : () -> ()
    %cst_92 = arith.constant 0.176776692 : f32
    %267 = vector.broadcast %cst_92 : f32 to vector<1x2x16xf32>
    %268 = arith.mulf %266, %267 : vector<1x2x16xf32>
    %cst_93 = arith.constant dense<0xFF800000> : vector<1x2xf32>
    %269 = vector.multi_reduction <maximumf>, %268, %cst_93 [2] : vector<1x2x16xf32> to vector<1x2xf32>
    %270 = vector.shape_cast %269 : vector<1x2xf32> to vector<1x2x1xf32>
    %271 = vector.broadcast %270 : vector<1x2x1xf32> to vector<1x2x16xf32>
    %272 = arith.subf %268, %271 : vector<1x2x16xf32>
    %273 = math.exp %272 : vector<1x2x16xf32>
    %cst_94 = arith.constant dense<0.000000e+00> : vector<1x2xf32>
    %274 = vector.multi_reduction <add>, %273, %cst_94 [2] : vector<1x2x16xf32> to vector<1x2xf32>
    %275 = vector.shape_cast %274 : vector<1x2xf32> to vector<1x2x1xf32>
    %276 = tpu.reciprocal %275 {approx = true} : vector<1x2x1xf32> -> vector<1x2x1xf32>
    %277 = vector.broadcast %276 : vector<1x2x1xf32> to vector<1x2x16xf32>
    %278 = arith.mulf %273, %277 : vector<1x2x16xf32>
    "tpu.trace_start"() <{level = 10 : i32, message = "bqk,bkd->bqd"}> : () -> ()
    %cst_95 = arith.constant dense<0.000000e+00> : vector<1x2x8xf32>
    %279 = tpu.matmul %278, %265, %cst_95 {dimension_numbers = #tpu.dot_dimension_numbers<[2], [1], [1], [2], [0, 0, 0, 1, 1, 2], [0], [0]>} : vector<1x2x16xf32>, vector<1x16x8xf32>, vector<1x2x8xf32> -> vector<1x2x8xf32>
    "tpu.trace_stop"() : () -> ()
    %280 = arith.addf %263, %279 : vector<1x2x8xf32>
    %281 = tpu.concatenate %226, %244, %262, %280 in 2 : vector<1x2x8xf32>, vector<1x2x8xf32>, vector<1x2x8xf32>, vector<1x2x8xf32> -> vector<1x2x32xf32>
    %282 = vector.shape_cast %281 : vector<1x2x32xf32> to vector<2x32xf32>
    %c0_96 = arith.constant 0 : index
    %c0_97 = arith.constant 0 : index
    %283 = vector.load %arg15[%c0_96, %c0_97] : memref<32x32xf32, #tpu.memory_space<vmem>>, vector<32x32xf32>
    %cst_98 = arith.constant dense<0.000000e+00> : vector<2x32xf32>
    %284 = tpu.matmul %282, %283, %cst_98 {dimension_numbers = #tpu.dot_dimension_numbers<[1], [0], [0], [1], [0, 0, 1, 1], [], []>} : vector<2x32xf32>, vector<32x32xf32>, vector<2x32xf32> -> vector<2x32xf32>
    %c0_99 = arith.constant 0 : index
    %c0_100 = arith.constant 0 : index
    %285 = vector.load %arg16[%c0_99, %c0_100] : memref<1x32xf32, #tpu.memory_space<vmem>>, vector<1x32xf32>
    %286 = vector.broadcast %285 : vector<1x32xf32> to vector<2x32xf32>
    %287 = arith.addf %284, %286 : vector<2x32xf32>
    %cst_101 = arith.constant 0.000000e+00 : f32
    %288 = vector.broadcast %cst_101 : f32 to vector<2x32xf32>
    %289 = arith.maximumf %287, %288 : vector<2x32xf32>
    %290 = arith.addf %282, %289 : vector<2x32xf32>
    %291 = vector.shape_cast %290 : vector<2x32xf32> to vector<1x2x32xf32>
    %292 = vector.shape_cast %291 : vector<1x2x32xf32> to vector<2x32xf32>
    %c0_102 = arith.constant 0 : index
    %c0_103 = arith.constant 0 : index
    %293 = vector.load %arg17[%c0_102, %c0_103] : memref<32x96xf32, #tpu.memory_space<vmem>>, vector<32x96xf32>
    %cst_104 = arith.constant dense<0.000000e+00> : vector<2x96xf32>
    %294 = tpu.matmul %292, %293, %cst_104 {dimension_numbers = #tpu.dot_dimension_numbers<[1], [0], [0], [1], [0, 0, 1, 1], [], []>} : vector<2x32xf32>, vector<32x96xf32>, vector<2x96xf32> -> vector<2x96xf32>
    %c0_105 = arith.constant 0 : index
    %c0_106 = arith.constant 0 : index
    %295 = vector.load %arg18[%c0_105, %c0_106] : memref<1x96xf32, #tpu.memory_space<vmem>>, vector<1x96xf32>
    %296 = vector.broadcast %295 : vector<1x96xf32> to vector<2x96xf32>
    %297 = arith.addf %294, %296 : vector<2x96xf32>
    %298 = vector.extract_strided_slice %297 {offsets = [0, 0], sizes = [2, 32], strides = [1, 1]} : vector<2x96xf32> to vector<2x32xf32>
    %299 = vector.shape_cast %298 : vector<2x32xf32> to vector<1x2x32xf32>
    %300 = vector.extract_strided_slice %297 {offsets = [0, 32], sizes = [2, 32], strides = [1, 1]} : vector<2x96xf32> to vector<2x32xf32>
    %301 = vector.shape_cast %300 : vector<2x32xf32> to vector<1x2x32xf32>
    %302 = vector.extract_strided_slice %297 {offsets = [0, 64], sizes = [2, 32], strides = [1, 1]} : vector<2x96xf32> to vector<2x32xf32>
    %303 = vector.shape_cast %302 : vector<2x32xf32> to vector<1x2x32xf32>
    %304 = vector.extract_strided_slice %299 {offsets = [0, 0, 0], sizes = [1, 2, 8], strides = [1, 1, 1]} : vector<1x2x32xf32> to vector<1x2x8xf32>
    %305 = vector.extract_strided_slice %301 {offsets = [0, 0, 0], sizes = [1, 2, 8], strides = [1, 1, 1]} : vector<1x2x32xf32> to vector<1x2x8xf32>
    %306 = vector.extract_strided_slice %303 {offsets = [0, 0, 0], sizes = [1, 2, 8], strides = [1, 1, 1]} : vector<1x2x32xf32> to vector<1x2x8xf32>
    "tpu.trace_start"() <{level = 10 : i32, message = "bqd,bkd->bqk"}> : () -> ()
    %cst_107 = arith.constant dense<0.000000e+00> : vector<1x2x2xf32>
    %307 = tpu.matmul %304, %305, %cst_107 {dimension_numbers = #tpu.dot_dimension_numbers<[2], [2], [1], [1], [0, 0, 0, 1, 1, 1], [0], [0]>} : vector<1x2x8xf32>, vector<1x2x8xf32>, vector<1x2x2xf32> -> vector<1x2x2xf32>
    "tpu.trace_stop"() : () -> ()
    %cst_108 = arith.constant 0.176776692 : f32
    %308 = vector.broadcast %cst_108 : f32 to vector<1x2x2xf32>
    %309 = arith.mulf %307, %308 : vector<1x2x2xf32>
    %cst_109 = arith.constant dense<0xFF800000> : vector<1x2xf32>
    %310 = vector.multi_reduction <maximumf>, %309, %cst_109 [2] : vector<1x2x2xf32> to vector<1x2xf32>
    %311 = vector.shape_cast %310 : vector<1x2xf32> to vector<1x2x1xf32>
    %312 = vector.broadcast %311 : vector<1x2x1xf32> to vector<1x2x2xf32>
    %313 = arith.subf %309, %312 : vector<1x2x2xf32>
    %314 = math.exp %313 : vector<1x2x2xf32>
    %cst_110 = arith.constant dense<0.000000e+00> : vector<1x2xf32>
    %315 = vector.multi_reduction <add>, %314, %cst_110 [2] : vector<1x2x2xf32> to vector<1x2xf32>
    %316 = vector.shape_cast %315 : vector<1x2xf32> to vector<1x2x1xf32>
    %317 = tpu.reciprocal %316 {approx = true} : vector<1x2x1xf32> -> vector<1x2x1xf32>
    %318 = vector.broadcast %317 : vector<1x2x1xf32> to vector<1x2x2xf32>
    %319 = arith.mulf %314, %318 : vector<1x2x2xf32>
    "tpu.trace_start"() <{level = 10 : i32, message = "bqk,bkd->bqd"}> : () -> ()
    %cst_111 = arith.constant dense<0.000000e+00> : vector<1x2x8xf32>
    %320 = tpu.matmul %319, %306, %cst_111 {dimension_numbers = #tpu.dot_dimension_numbers<[2], [1], [1], [2], [0, 0, 0, 1, 1, 2], [0], [0]>} : vector<1x2x2xf32>, vector<1x2x8xf32>, vector<1x2x8xf32> -> vector<1x2x8xf32>
    "tpu.trace_stop"() : () -> ()
    %321 = arith.addf %304, %320 : vector<1x2x8xf32>
    %322 = vector.extract_strided_slice %299 {offsets = [0, 0, 8], sizes = [1, 2, 8], strides = [1, 1, 1]} : vector<1x2x32xf32> to vector<1x2x8xf32>
    %323 = vector.extract_strided_slice %301 {offsets = [0, 0, 8], sizes = [1, 2, 8], strides = [1, 1, 1]} : vector<1x2x32xf32> to vector<1x2x8xf32>
    %324 = vector.extract_strided_slice %303 {offsets = [0, 0, 8], sizes = [1, 2, 8], strides = [1, 1, 1]} : vector<1x2x32xf32> to vector<1x2x8xf32>
    "tpu.trace_start"() <{level = 10 : i32, message = "bqd,bkd->bqk"}> : () -> ()
    %cst_112 = arith.constant dense<0.000000e+00> : vector<1x2x2xf32>
    %325 = tpu.matmul %322, %323, %cst_112 {dimension_numbers = #tpu.dot_dimension_numbers<[2], [2], [1], [1], [0, 0, 0, 1, 1, 1], [0], [0]>} : vector<1x2x8xf32>, vector<1x2x8xf32>, vector<1x2x2xf32> -> vector<1x2x2xf32>
    "tpu.trace_stop"() : () -> ()
    %cst_113 = arith.constant 0.176776692 : f32
    %326 = vector.broadcast %cst_113 : f32 to vector<1x2x2xf32>
    %327 = arith.mulf %325, %326 : vector<1x2x2xf32>
    %cst_114 = arith.constant dense<0xFF800000> : vector<1x2xf32>
    %328 = vector.multi_reduction <maximumf>, %327, %cst_114 [2] : vector<1x2x2xf32> to vector<1x2xf32>
    %329 = vector.shape_cast %328 : vector<1x2xf32> to vector<1x2x1xf32>
    %330 = vector.broadcast %329 : vector<1x2x1xf32> to vector<1x2x2xf32>
    %331 = arith.subf %327, %330 : vector<1x2x2xf32>
    %332 = math.exp %331 : vector<1x2x2xf32>
    %cst_115 = arith.constant dense<0.000000e+00> : vector<1x2xf32>
    %333 = vector.multi_reduction <add>, %332, %cst_115 [2] : vector<1x2x2xf32> to vector<1x2xf32>
    %334 = vector.shape_cast %333 : vector<1x2xf32> to vector<1x2x1xf32>
    %335 = tpu.reciprocal %334 {approx = true} : vector<1x2x1xf32> -> vector<1x2x1xf32>
    %336 = vector.broadcast %335 : vector<1x2x1xf32> to vector<1x2x2xf32>
    %337 = arith.mulf %332, %336 : vector<1x2x2xf32>
    "tpu.trace_start"() <{level = 10 : i32, message = "bqk,bkd->bqd"}> : () -> ()
    %cst_116 = arith.constant dense<0.000000e+00> : vector<1x2x8xf32>
    %338 = tpu.matmul %337, %324, %cst_116 {dimension_numbers = #tpu.dot_dimension_numbers<[2], [1], [1], [2], [0, 0, 0, 1, 1, 2], [0], [0]>} : vector<1x2x2xf32>, vector<1x2x8xf32>, vector<1x2x8xf32> -> vector<1x2x8xf32>
    "tpu.trace_stop"() : () -> ()
    %339 = arith.addf %322, %338 : vector<1x2x8xf32>
    %340 = vector.extract_strided_slice %299 {offsets = [0, 0, 16], sizes = [1, 2, 8], strides = [1, 1, 1]} : vector<1x2x32xf32> to vector<1x2x8xf32>
    %341 = vector.extract_strided_slice %301 {offsets = [0, 0, 16], sizes = [1, 2, 8], strides = [1, 1, 1]} : vector<1x2x32xf32> to vector<1x2x8xf32>
    %342 = vector.extract_strided_slice %303 {offsets = [0, 0, 16], sizes = [1, 2, 8], strides = [1, 1, 1]} : vector<1x2x32xf32> to vector<1x2x8xf32>
    "tpu.trace_start"() <{level = 10 : i32, message = "bqd,bkd->bqk"}> : () -> ()
    %cst_117 = arith.constant dense<0.000000e+00> : vector<1x2x2xf32>
    %343 = tpu.matmul %340, %341, %cst_117 {dimension_numbers = #tpu.dot_dimension_numbers<[2], [2], [1], [1], [0, 0, 0, 1, 1, 1], [0], [0]>} : vector<1x2x8xf32>, vector<1x2x8xf32>, vector<1x2x2xf32> -> vector<1x2x2xf32>
    "tpu.trace_stop"() : () -> ()
    %cst_118 = arith.constant 0.176776692 : f32
    %344 = vector.broadcast %cst_118 : f32 to vector<1x2x2xf32>
    %345 = arith.mulf %343, %344 : vector<1x2x2xf32>
    %cst_119 = arith.constant dense<0xFF800000> : vector<1x2xf32>
    %346 = vector.multi_reduction <maximumf>, %345, %cst_119 [2] : vector<1x2x2xf32> to vector<1x2xf32>
    %347 = vector.shape_cast %346 : vector<1x2xf32> to vector<1x2x1xf32>
    %348 = vector.broadcast %347 : vector<1x2x1xf32> to vector<1x2x2xf32>
    %349 = arith.subf %345, %348 : vector<1x2x2xf32>
    %350 = math.exp %349 : vector<1x2x2xf32>
    %cst_120 = arith.constant dense<0.000000e+00> : vector<1x2xf32>
    %351 = vector.multi_reduction <add>, %350, %cst_120 [2] : vector<1x2x2xf32> to vector<1x2xf32>
    %352 = vector.shape_cast %351 : vector<1x2xf32> to vector<1x2x1xf32>
    %353 = tpu.reciprocal %352 {approx = true} : vector<1x2x1xf32> -> vector<1x2x1xf32>
    %354 = vector.broadcast %353 : vector<1x2x1xf32> to vector<1x2x2xf32>
    %355 = arith.mulf %350, %354 : vector<1x2x2xf32>
    "tpu.trace_start"() <{level = 10 : i32, message = "bqk,bkd->bqd"}> : () -> ()
    %cst_121 = arith.constant dense<0.000000e+00> : vector<1x2x8xf32>
    %356 = tpu.matmul %355, %342, %cst_121 {dimension_numbers = #tpu.dot_dimension_numbers<[2], [1], [1], [2], [0, 0, 0, 1, 1, 2], [0], [0]>} : vector<1x2x2xf32>, vector<1x2x8xf32>, vector<1x2x8xf32> -> vector<1x2x8xf32>
    "tpu.trace_stop"() : () -> ()
    %357 = arith.addf %340, %356 : vector<1x2x8xf32>
    %358 = vector.extract_strided_slice %299 {offsets = [0, 0, 24], sizes = [1, 2, 8], strides = [1, 1, 1]} : vector<1x2x32xf32> to vector<1x2x8xf32>
    %359 = vector.extract_strided_slice %301 {offsets = [0, 0, 24], sizes = [1, 2, 8], strides = [1, 1, 1]} : vector<1x2x32xf32> to vector<1x2x8xf32>
    %360 = vector.extract_strided_slice %303 {offsets = [0, 0, 24], sizes = [1, 2, 8], strides = [1, 1, 1]} : vector<1x2x32xf32> to vector<1x2x8xf32>
    "tpu.trace_start"() <{level = 10 : i32, message = "bqd,bkd->bqk"}> : () -> ()
    %cst_122 = arith.constant dense<0.000000e+00> : vector<1x2x2xf32>
    %361 = tpu.matmul %358, %359, %cst_122 {dimension_numbers = #tpu.dot_dimension_numbers<[2], [2], [1], [1], [0, 0, 0, 1, 1, 1], [0], [0]>} : vector<1x2x8xf32>, vector<1x2x8xf32>, vector<1x2x2xf32> -> vector<1x2x2xf32>
    "tpu.trace_stop"() : () -> ()
    %cst_123 = arith.constant 0.176776692 : f32
    %362 = vector.broadcast %cst_123 : f32 to vector<1x2x2xf32>
    %363 = arith.mulf %361, %362 : vector<1x2x2xf32>
    %cst_124 = arith.constant dense<0xFF800000> : vector<1x2xf32>
    %364 = vector.multi_reduction <maximumf>, %363, %cst_124 [2] : vector<1x2x2xf32> to vector<1x2xf32>
    %365 = vector.shape_cast %364 : vector<1x2xf32> to vector<1x2x1xf32>
    %366 = vector.broadcast %365 : vector<1x2x1xf32> to vector<1x2x2xf32>
    %367 = arith.subf %363, %366 : vector<1x2x2xf32>
    %368 = math.exp %367 : vector<1x2x2xf32>
    %cst_125 = arith.constant dense<0.000000e+00> : vector<1x2xf32>
    %369 = vector.multi_reduction <add>, %368, %cst_125 [2] : vector<1x2x2xf32> to vector<1x2xf32>
    %370 = vector.shape_cast %369 : vector<1x2xf32> to vector<1x2x1xf32>
    %371 = tpu.reciprocal %370 {approx = true} : vector<1x2x1xf32> -> vector<1x2x1xf32>
    %372 = vector.broadcast %371 : vector<1x2x1xf32> to vector<1x2x2xf32>
    %373 = arith.mulf %368, %372 : vector<1x2x2xf32>
    "tpu.trace_start"() <{level = 10 : i32, message = "bqk,bkd->bqd"}> : () -> ()
    %cst_126 = arith.constant dense<0.000000e+00> : vector<1x2x8xf32>
    %374 = tpu.matmul %373, %360, %cst_126 {dimension_numbers = #tpu.dot_dimension_numbers<[2], [1], [1], [2], [0, 0, 0, 1, 1, 2], [0], [0]>} : vector<1x2x2xf32>, vector<1x2x8xf32>, vector<1x2x8xf32> -> vector<1x2x8xf32>
    "tpu.trace_stop"() : () -> ()
    %375 = arith.addf %358, %374 : vector<1x2x8xf32>
    %376 = tpu.concatenate %321, %339, %357, %375 in 2 : vector<1x2x8xf32>, vector<1x2x8xf32>, vector<1x2x8xf32>, vector<1x2x8xf32> -> vector<1x2x32xf32>
    %377 = vector.shape_cast %376 : vector<1x2x32xf32> to vector<2x32xf32>
    %c0_127 = arith.constant 0 : index
    %c0_128 = arith.constant 0 : index
    %378 = vector.load %arg19[%c0_127, %c0_128] : memref<32x32xf32, #tpu.memory_space<vmem>>, vector<32x32xf32>
    %cst_129 = arith.constant dense<0.000000e+00> : vector<2x32xf32>
    %379 = tpu.matmul %377, %378, %cst_129 {dimension_numbers = #tpu.dot_dimension_numbers<[1], [0], [0], [1], [0, 0, 1, 1], [], []>} : vector<2x32xf32>, vector<32x32xf32>, vector<2x32xf32> -> vector<2x32xf32>
    %c0_130 = arith.constant 0 : index
    %c0_131 = arith.constant 0 : index
    %380 = vector.load %arg20[%c0_130, %c0_131] : memref<1x32xf32, #tpu.memory_space<vmem>>, vector<1x32xf32>
    %381 = vector.broadcast %380 : vector<1x32xf32> to vector<2x32xf32>
    %382 = arith.addf %379, %381 : vector<2x32xf32>
    %cst_132 = arith.constant 0.000000e+00 : f32
    %383 = vector.broadcast %cst_132 : f32 to vector<2x32xf32>
    %384 = arith.maximumf %382, %383 : vector<2x32xf32>
    %385 = arith.addf %377, %384 : vector<2x32xf32>
    %386 = vector.shape_cast %385 : vector<2x32xf32> to vector<1x2x32xf32>
    %387 = vector.shape_cast %386 : vector<1x2x32xf32> to vector<2x32xf32>
    %c0_133 = arith.constant 0 : index
    %c0_134 = arith.constant 0 : index
    %388 = vector.load %arg21[%c0_133, %c0_134] : memref<32x4xf32, #tpu.memory_space<vmem>>, vector<32x4xf32>
    %cst_135 = arith.constant dense<0.000000e+00> : vector<2x4xf32>
    %389 = tpu.matmul %387, %388, %cst_135 {dimension_numbers = #tpu.dot_dimension_numbers<[1], [0], [0], [1], [0, 0, 1, 1], [], []>} : vector<2x32xf32>, vector<32x4xf32>, vector<2x4xf32> -> vector<2x4xf32>
    %c0_136 = arith.constant 0 : index
    %c0_137 = arith.constant 0 : index
    %390 = vector.load %arg22[%c0_136, %c0_137] : memref<1x4xf32, #tpu.memory_space<vmem>>, vector<1x4xf32>
    %391 = vector.broadcast %390 : vector<1x4xf32> to vector<2x4xf32>
    %392 = arith.addf %389, %391 : vector<2x4xf32>
    %393 = vector.shape_cast %392 : vector<2x4xf32> to vector<1x2x4xf32>
    %c0_138 = arith.constant 0 : index
    %c0_139 = arith.constant 0 : index
    %c0_140 = arith.constant 0 : index
    %394 = vector.load %arg23[%c0_138, %c0_139, %c0_140] : memref<1x2x4xf32, #tpu.memory_space<vmem>>, vector<1x2x4xf32>
    tpu.vector_store %arg23[%c0_138, %c0_139, %c0_140], %393 {strides = array<i32>} : memref<1x2x4xf32, #tpu.memory_space<vmem>>, vector<1x2x4xf32>,
    return
  }
  func.func @transform_0(%arg0: i32) -> (i32, i32, i32) {
    %c0_i32 = arith.constant 0 : i32
    %c0_i32_0 = arith.constant 0 : i32
    %c0_i32_1 = arith.constant 0 : i32
    return %arg0, %c0_i32, %c0_i32_0 : i32, i32, i32
  }
  func.func @transform_1(%arg0: i32) -> (i32, i32, i32) {
    %c0_i32 = arith.constant 0 : i32
    %c0_i32_0 = arith.constant 0 : i32
    %c0_i32_1 = arith.constant 0 : i32
    %c0_i32_2 = arith.constant 0 : i32
    return %c0_i32, %c0_i32_0, %c0_i32_1 : i32, i32, i32
  }
  func.func @transform_2(%arg0: i32) -> (i32, i32) {
    %c0_i32 = arith.constant 0 : i32
    %c0_i32_0 = arith.constant 0 : i32
    %c0_i32_1 = arith.constant 0 : i32
    return %c0_i32, %c0_i32_0 : i32, i32
  }
  func.func @transform_3(%arg0: i32) -> (i32, i32) {
    %c0_i32 = arith.constant 0 : i32
    %c0_i32_0 = arith.constant 0 : i32
    %c0_i32_1 = arith.constant 0 : i32
    return %c0_i32, %c0_i32_0 : i32, i32
  }
  func.func @transform_4(%arg0: i32) -> (i32, i32) {
    %c0_i32 = arith.constant 0 : i32
    %c0_i32_0 = arith.constant 0 : i32
    %c0_i32_1 = arith.constant 0 : i32
    return %c0_i32, %c0_i32_0 : i32, i32
  }
  func.func @transform_5(%arg0: i32) -> (i32, i32) {
    %c0_i32 = arith.constant 0 : i32
    %c0_i32_0 = arith.constant 0 : i32
    %c0_i32_1 = arith.constant 0 : i32
    return %c0_i32, %c0_i32_0 : i32, i32
  }
  func.func @transform_6(%arg0: i32) -> (i32, i32) {
    %c0_i32 = arith.constant 0 : i32
    %c0_i32_0 = arith.constant 0 : i32
    %c0_i32_1 = arith.constant 0 : i32
    return %c0_i32, %c0_i32_0 : i32, i32
  }
  func.func @transform_7(%arg0: i32) -> (i32, i32) {
    %c0_i32 = arith.constant 0 : i32
    %c0_i32_0 = arith.constant 0 : i32
    %c0_i32_1 = arith.constant 0 : i32
    return %c0_i32, %c0_i32_0 : i32, i32
  }
  func.func @transform_8(%arg0: i32) -> (i32, i32) {
    %c0_i32 = arith.constant 0 : i32
    %c0_i32_0 = arith.constant 0 : i32
    %c0_i32_1 = arith.constant 0 : i32
    return %c0_i32, %c0_i32_0 : i32, i32
  }
  func.func @transform_9(%arg0: i32) -> (i32, i32) {
    %c0_i32 = arith.constant 0 : i32
    %c0_i32_0 = arith.constant 0 : i32
    %c0_i32_1 = arith.constant 0 : i32
    return %c0_i32, %c0_i32_0 : i32, i32
  }
  func.func @transform_10(%arg0: i32) -> (i32, i32) {
    %c0_i32 = arith.constant 0 : i32
    %c0_i32_0 = arith.constant 0 : i32
    %c0_i32_1 = arith.constant 0 : i32
    return %c0_i32, %c0_i32_0 : i32, i32
  }
  func.func @transform_11(%arg0: i32) -> (i32, i32) {
    %c0_i32 = arith.constant 0 : i32
    %c0_i32_0 = arith.constant 0 : i32
    %c0_i32_1 = arith.constant 0 : i32
    return %c0_i32, %c0_i32_0 : i32, i32
  }
  func.func @transform_12(%arg0: i32) -> (i32, i32) {
    %c0_i32 = arith.constant 0 : i32
    %c0_i32_0 = arith.constant 0 : i32
    %c0_i32_1 = arith.constant 0 : i32
    return %c0_i32, %c0_i32_0 : i32, i32
  }
  func.func @transform_13(%arg0: i32) -> (i32, i32) {
    %c0_i32 = arith.constant 0 : i32
    %c0_i32_0 = arith.constant 0 : i32
    %c0_i32_1 = arith.constant 0 : i32
    return %c0_i32, %c0_i32_0 : i32, i32
  }
  func.func @transform_14(%arg0: i32) -> (i32, i32) {
    %c0_i32 = arith.constant 0 : i32
    %c0_i32_0 = arith.constant 0 : i32
    %c0_i32_1 = arith.constant 0 : i32
    return %c0_i32, %c0_i32_0 : i32, i32
  }
  func.func @transform_15(%arg0: i32) -> (i32, i32) {
    %c0_i32 = arith.constant 0 : i32
    %c0_i32_0 = arith.constant 0 : i32
    %c0_i32_1 = arith.constant 0 : i32
    return %c0_i32, %c0_i32_0 : i32, i32
  }
  func.func @transform_16(%arg0: i32) -> (i32, i32) {
    %c0_i32 = arith.constant 0 : i32
    %c0_i32_0 = arith.constant 0 : i32
    %c0_i32_1 = arith.constant 0 : i32
    return %c0_i32, %c0_i32_0 : i32, i32
  }
  func.func @transform_17(%arg0: i32) -> (i32, i32) {
    %c0_i32 = arith.constant 0 : i32
    %c0_i32_0 = arith.constant 0 : i32
    %c0_i32_1 = arith.constant 0 : i32
    return %c0_i32, %c0_i32_0 : i32, i32
  }
  func.func @transform_18(%arg0: i32) -> (i32, i32) {
    %c0_i32 = arith.constant 0 : i32
    %c0_i32_0 = arith.constant 0 : i32
    %c0_i32_1 = arith.constant 0 : i32
    return %c0_i32, %c0_i32_0 : i32, i32
  }
  func.func @transform_19(%arg0: i32) -> (i32, i32) {
    %c0_i32 = arith.constant 0 : i32
    %c0_i32_0 = arith.constant 0 : i32
    %c0_i32_1 = arith.constant 0 : i32
    return %c0_i32, %c0_i32_0 : i32, i32
  }
  func.func @transform_20(%arg0: i32) -> (i32, i32) {
    %c0_i32 = arith.constant 0 : i32
    %c0_i32_0 = arith.constant 0 : i32
    %c0_i32_1 = arith.constant 0 : i32
    return %c0_i32, %c0_i32_0 : i32, i32
  }
  func.func @transform_21(%arg0: i32) -> (i32, i32) {
    %c0_i32 = arith.constant 0 : i32
    %c0_i32_0 = arith.constant 0 : i32
    %c0_i32_1 = arith.constant 0 : i32
    return %c0_i32, %c0_i32_0 : i32, i32
  }
  func.func @transform_22(%arg0: i32) -> (i32, i32, i32) {
    %c0_i32 = arith.constant 0 : i32
    %c0_i32_0 = arith.constant 0 : i32
    %c0_i32_1 = arith.constant 0 : i32
    return %arg0, %c0_i32, %c0_i32_0 : i32, i32, i32
  }
}

</mosaic_0001>

<llo_original>
// kernel: tpu_custom_call.1
$region0: #{tpu_custom_call.1}
  #allocation0 [shape = 'u32[]', space=smem, size = 0x4, offset = 0x4, fixed_abs, tag = 'smem constant byte address 0x4 - core index']
  #allocation1 [shape = 'u32[72,128]{1,0:T(1,128)}', space=vmem, size = 0x9000, scoped, tag = 'internal scratch']
  %s0 = inlined_call_operand.vmem [shape: f32[2,16,8], index: 0, kind: input, shape index: {}]
  %s1 = inlined_call_operand.hbm [shape: f32[1,2,32], index: 1, kind: input, shape index: {}]
  %s2 = inlined_call_operand.hbm [shape: f32[8,96], index: 2, kind: input, shape index: {}]
  %s3 = inlined_call_operand.hbm [shape: f32[1,96], index: 3, kind: input, shape index: {}]
  %s4 = inlined_call_operand.vmem [shape: f32[32,32], index: 4, kind: input, shape index: {}]
  %s5 = inlined_call_operand.hbm [shape: f32[1,32], index: 5, kind: input, shape index: {}]
  %s6 = inlined_call_operand.vmem [shape: f32[32,96], index: 6, kind: input, shape index: {}]
  %s7 = inlined_call_operand.hbm [shape: f32[1,96], index: 7, kind: input, shape index: {}]
  %s8 = inlined_call_operand.hbm [shape: f32[32,32], index: 8, kind: input, shape index: {}]
  %s9 = inlined_call_operand.hbm [shape: f32[1,32], index: 9, kind: input, shape index: {}]
  %s10 = inlined_call_operand.hbm [shape: f32[32,32], index: 10, kind: input, shape index: {}]
  %s11 = inlined_call_operand.hbm [shape: f32[1,32], index: 11, kind: input, shape index: {}]
  %s12 = inlined_call_operand.hbm [shape: f32[32,64], index: 12, kind: input, shape index: {}]
  %s13 = inlined_call_operand.hbm [shape: f32[1,64], index: 13, kind: input, shape index: {}]
  %s14 = inlined_call_operand.hbm [shape: f32[32,32], index: 14, kind: input, shape index: {}]
  %s15 = inlined_call_operand.hbm [shape: f32[1,32], index: 15, kind: input, shape index: {}]
  %s16 = inlined_call_operand.hbm [shape: f32[32,96], index: 16, kind: input, shape index: {}]
  %s17 = inlined_call_operand.hbm [shape: f32[1,96], index: 17, kind: input, shape index: {}]
  %s18 = inlined_call_operand.vmem [shape: f32[32,32], index: 18, kind: input, shape index: {}]
  %s19 = inlined_call_operand.vmem [shape: f32[1,32], index: 19, kind: input, shape index: {}]
  %s20 = inlined_call_operand.vmem [shape: f32[32,4], index: 20, kind: input, shape index: {}]
  %s21 = inlined_call_operand.vmem [shape: f32[1,4], index: 21, kind: input, shape index: {}]
  %s22 = inlined_call_operand.hbm [shape: f32[2,2,4], index: 22, kind: output, shape index: {}]
  %s23 = sld [smem:[#allocation0]]
  $region181: #{tpu_custom_call.1} parent=0
    _
  %s25 = ssub.s32 1, %s23
  %s26 = scalar_select 0, %s25, %s23
  $region1: #{tpu_custom_call.1} parent=0
    #allocation2 [shape = 'u8[1024]{0}', space=vmem, size = 0x400, scoped, tag = 'input window, operand 1, single buffered']
    #allocation3 [shape = 's32[2]{0}', space=sflag, size = 0x8, scoped, tag = 'scoped memory for tpu_custom_call.1']
    #allocation4 [shape = 's32[2]{0}', space=sflag, size = 0x8, scoped, tag = 'scoped memory for tpu_custom_call.1']
    #allocation5 [shape = 'u8[4096]{0}', space=vmem, size = 0x1000, scoped, tag = 'input window, operand 2, single buffered']
    #allocation6 [shape = 's32[1]{0}', space=sflag, size = 0x4, scoped, tag = 'scoped memory for tpu_custom_call.1']
    #allocation7 [shape = 'u8[512]{0}', space=vmem, size = 0x400, scoped, tag = 'input window, operand 3, single buffered']
    #allocation8 [shape = 'u8[512]{0}', space=vmem, size = 0x400, scoped, tag = 'input window, operand 5, single buffered']
    #allocation9 [shape = 's32[1]{0}', space=sflag, size = 0x4, scoped, tag = 'scoped memory for tpu_custom_call.1']
    #allocation10 [shape = 'u8[512]{0}', space=vmem, size = 0x400, scoped, tag = 'input window, operand 7, single buffered']
    #allocation11 [shape = 'u8[16384]{0}', space=vmem, size = 0x4000, scoped, tag = 'input window, operand 8, single buffered']
    #allocation12 [shape = 's32[1]{0}', space=sflag, size = 0x4, scoped, tag = 'scoped memory for tpu_custom_call.1']
    #allocation13 [shape = 'u8[512]{0}', space=vmem, size = 0x400, scoped, tag = 'input window, operand 9, single buffered']
    #allocation14 [shape = 'u8[16384]{0}', space=vmem, size = 0x4000, scoped, tag = 'input window, operand 10, single buffered']
    #allocation15 [shape = 's32[1]{0}', space=sflag, size = 0x4, scoped, tag = 'scoped memory for tpu_custom_call.1']
    #allocation16 [shape = 'u8[512]{0}', space=vmem, size = 0x400, scoped, tag = 'input window, operand 11, single buffered']
    #allocation17 [shape = 'u8[16384]{0}', space=vmem, size = 0x4000, scoped, tag = 'input window, operand 12, single buffered']
    #allocation18 [shape = 's32[1]{0}', space=sflag, size = 0x4, scoped, tag = 'scoped memory for tpu_custom_call.1']
    #allocation19 [shape = 'u8[512]{0}', space=vmem, size = 0x400, scoped, tag = 'input window, operand 13, single buffered']
    #allocation20 [shape = 'u8[16384]{0}', space=vmem, size = 0x4000, scoped, tag = 'input window, operand 14, single buffered']
    #allocation21 [shape = 's32[1]{0}', space=sflag, size = 0x4, scoped, tag = 'scoped memory for tpu_custom_call.1']
    #allocation22 [shape = 'u8[512]{0}', space=vmem, size = 0x400, scoped, tag = 'input window, operand 15, single buffered']
    #allocation23 [shape = 'u8[16384]{0}', space=vmem, size = 0x4000, scoped, tag = 'input window, operand 16, single buffered']
    #allocation24 [shape = 's32[1]{0}', space=sflag, size = 0x4, scoped, tag = 'scoped memory for tpu_custom_call.1']
    #allocation25 [shape = 'u8[512]{0}', space=vmem, size = 0x400, scoped, tag = 'input window, operand 17, single buffered']
    #allocation26 [shape = 'u8[2048]{0}', space=vmem, size = 0x800, scoped, tag = 'output window, operand 0']
    %27 = vsyncpa [#allocation3], 0
    %28 = vsyncpa [#allocation6], 0
    %29 = vsyncpa [#allocation9], 0
    %30 = vsyncpa [#allocation12], 0
    %31 = vsyncpa [#allocation15], 0
    %32 = vsyncpa [#allocation18], 0
    %33 = vsyncpa [#allocation21], 0
    %34 = vsyncpa [#allocation24], 0
    %35 = vsyncpa [#allocation4], 0
    %s36 = scalar_lea.sflag [#allocation4], 1
    %37 = vsyncpa %s36, 0
    loop: start=0, step=1, limit=4
    $region2: #{tpu_custom_call.1} parent=1 // loop_pre_header
      _
    $region3: #{tpu_custom_call.1} parent=1 // loop_header
      %s39 = sphi 0, %s43
      %p40 = scmp.ge.s32.totalorder %s39, 4
      %s49 = sphi 0, %s51
      %s52 = sphi 0, %s49
      %s53 = sphi 0, %s52
      %s69 = sphi 0, %s53
      %s73 = sphi 0, %s73
      %s75 = sphi 0, %s73
      %s76 = sphi 0, %s75
      %s90 = sphi 0, %s76
      %s94 = sphi 0, %s94
      %s96 = sphi 0, %s94
      %s97 = sphi 0, %s96
      %s111 = sphi 0, %s97
      %s115 = sphi 0, %s115
      %s117 = sphi 0, %s115
      %s118 = sphi 0, %s117
      %s132 = sphi 0, %s118
      %s136 = sphi 0, %s136
      %s138 = sphi 0, %s136
      %s139 = sphi 0, %s138
      %s153 = sphi 0, %s139
      %s157 = sphi 0, %s157
      %s159 = sphi 0, %s157
      %s160 = sphi 0, %s159
      %s174 = sphi 0, %s160
      %s178 = sphi 0, %s178
      %s180 = sphi 0, %s178
      %s181 = sphi 0, %s180
      %s195 = sphi 0, %s181
      %s199 = sphi 0, %s199
      %s201 = sphi 0, %s199
      %s202 = sphi 0, %s201
      %s216 = sphi 0, %s202
      %s220 = sphi 0, %s220
      %s222 = sphi 0, %s220
      %s223 = sphi 0, %s222
      %s237 = sphi 0, %s223
      %s241 = sphi 0, %s241
      %s243 = sphi 0, %s241
      %s244 = sphi 0, %s243
      %s258 = sphi 0, %s244
      %s262 = sphi 0, %s262
      %s264 = sphi 0, %s262
      %s265 = sphi 0, %s264
      %s279 = sphi 0, %s265
      %s283 = sphi 0, %s283
      %s285 = sphi 0, %s283
      %s286 = sphi 0, %s285
      %s300 = sphi 0, %s286
      %s304 = sphi 0, %s304
      %s306 = sphi 0, %s304
      %s307 = sphi 0, %s306
      %s321 = sphi 0, %s307
      %s325 = sphi 0, %s325
      %s327 = sphi 0, %s325
      %s328 = sphi 0, %s327
      %s342 = sphi 0, %s328
      %s346 = sphi 0, %s346
      %s348 = sphi 0, %s346
      %s349 = sphi 0, %s348
      %s363 = sphi 0, %s349
      %s367 = sphi 0, %s367
      %s369 = sphi 0, %s367
      %s370 = sphi 0, %s369
      %s384 = sphi 0, %s370
      %s388 = sphi 0, %s388
      %s390 = sphi 0, %s388
      %s391 = sphi 0, %s390
      %s405 = sphi 0, %s391
      %s409 = sphi 0, %s409
      %s411 = sphi 0, %s409
      %s412 = sphi 0, %s411
      %s426 = sphi 0, %s412
      %s430 = sphi 0, %s430
      %s432 = sphi 0, %s430
      %s433 = sphi 0, %s432
      %s447 = sphi 0, %s433
      %s451 = sphi 0, %s451
      %s453 = sphi 0, %s451
      %s454 = sphi 0, %s453
      %s468 = sphi 0, %s454
      %s472 = sphi 0, %s472
      %s474 = sphi 0, %s472
      %s475 = sphi 0, %s474
      %s489 = sphi 0, %s475
      %s493 = sphi 0, %s493
      %s495 = sphi 0, %s493
      %s496 = sphi 0, %s495
      %s510 = sphi 0, %s496
      %s516 = sphi 0, %s518
      %s519 = sphi 0, %s516
      %s520 = sphi 0, %s519
      %s536 = sphi 0, %s520
    $region4: #{tpu_custom_call.1} parent=1 // loop_header_branch
      %42 = sbr.rel (%p40) target = $region8
    $region5: #{tpu_custom_call.1} parent=1 // loop_body
      %s44 = ssub.s32 %s39, 1
      %s45 = ssub.s32 %s39, 2
      %s46 = sadd.s32 %s39, 1
      %s47 = ssub.s32 %s39, %s46
      %p48 = scmp.eq.s32.totalorder %s47, 0
      %s50 = sadd.s32 %s49, 1
      %s51 = scalar_select %p48, %s49, %s50
      %p54 = pneg %p48
      %p55 = scmp.eq.s32.totalorder %s39, 1
      %p56 = por %p54, %p55
      %p57 = scmp.ne.s32.totalorder %s49, %s52
      %p58 = scmp.eq.s32.totalorder %s39, 0
      %p59 = por %p57, %p58
      %p60 = scmp.ne.s32.totalorder %s49, %s52
      %p61 = scmp.eq.s32.totalorder %s44, 1
      %p62 = por %p60, %p61
      %p63 = scmp.ne.s32.totalorder %s52, %s53
      %p64 = scmp.eq.s32.totalorder %s44, 0
      %p65 = por %p63, %p64
      %p66 = scmp.ne.s32.totalorder %s52, %s53
      %p67 = scmp.eq.s32.totalorder %s45, 1
      %p68 = por %p66, %p67
      %p70 = scmp.ne.s32.totalorder %s53, %s69
      %p71 = scmp.eq.s32.totalorder %s45, 0
      %p72 = por %p70, %p71
      %s74 = sadd.s32 %s73, 1
      %p77 = scmp.eq.s32.totalorder %s39, 1
      %p78 = scmp.ne.s32.totalorder %s73, %s75
      %p79 = scmp.eq.s32.totalorder %s39, 0
      %p80 = por %p78, %p79
      %p81 = scmp.ne.s32.totalorder %s73, %s75
      %p82 = scmp.eq.s32.totalorder %s44, 1
      %p83 = por %p81, %p82
      %p84 = scmp.ne.s32.totalorder %s75, %s76
      %p85 = scmp.eq.s32.totalorder %s44, 0
      %p86 = por %p84, %p85
      %p87 = scmp.ne.s32.totalorder %s75, %s76
      %p88 = scmp.eq.s32.totalorder %s45, 1
      %p89 = por %p87, %p88
      %p91 = scmp.ne.s32.totalorder %s76, %s90
      %p92 = scmp.eq.s32.totalorder %s45, 0
      %p93 = por %p91, %p92
      %s95 = sadd.s32 %s94, 1
      %p98 = scmp.eq.s32.totalorder %s39, 1
      %p99 = scmp.ne.s32.totalorder %s94, %s96
      %p100 = scmp.eq.s32.totalorder %s39, 0
      %p101 = por %p99, %p100
      %p102 = scmp.ne.s32.totalorder %s94, %s96
      %p103 = scmp.eq.s32.totalorder %s44, 1
      %p104 = por %p102, %p103
      %p105 = scmp.ne.s32.totalorder %s96, %s97
      %p106 = scmp.eq.s32.totalorder %s44, 0
      %p107 = por %p105, %p106
      %p108 = scmp.ne.s32.totalorder %s96, %s97
      %p109 = scmp.eq.s32.totalorder %s45, 1
      %p110 = por %p108, %p109
      %p112 = scmp.ne.s32.totalorder %s97, %s111
      %p113 = scmp.eq.s32.totalorder %s45, 0
      %p114 = por %p112, %p113
      %s116 = sadd.s32 %s115, 1
      %p119 = scmp.eq.s32.totalorder %s39, 1
      %p120 = scmp.ne.s32.totalorder %s115, %s117
      %p121 = scmp.eq.s32.totalorder %s39, 0
      %p122 = por %p120, %p121
      %p123 = scmp.ne.s32.totalorder %s115, %s117
      %p124 = scmp.eq.s32.totalorder %s44, 1
      %p125 = por %p123, %p124
      %p126 = scmp.ne.s32.totalorder %s117, %s118
      %p127 = scmp.eq.s32.totalorder %s44, 0
      %p128 = por %p126, %p127
      %p129 = scmp.ne.s32.totalorder %s117, %s118
      %p130 = scmp.eq.s32.totalorder %s45, 1
      %p131 = por %p129, %p130
      %p133 = scmp.ne.s32.totalorder %s118, %s132
      %p134 = scmp.eq.s32.totalorder %s45, 0
      %p135 = por %p133, %p134
      %s137 = sadd.s32 %s136, 1
      %p140 = scmp.eq.s32.totalorder %s39, 1
      %p141 = scmp.ne.s32.totalorder %s136, %s138
      %p142 = scmp.eq.s32.totalorder %s39, 0
      %p143 = por %p141, %p142
      %p144 = scmp.ne.s32.totalorder %s136, %s138
      %p145 = scmp.eq.s32.totalorder %s44, 1
      %p146 = por %p144, %p145
      %p147 = scmp.ne.s32.totalorder %s138, %s139
      %p148 = scmp.eq.s32.totalorder %s44, 0
      %p149 = por %p147, %p148
      %p150 = scmp.ne.s32.totalorder %s138, %s139
      %p151 = scmp.eq.s32.totalorder %s45, 1
      %p152 = por %p150, %p151
      %p154 = scmp.ne.s32.totalorder %s139, %s153
      %p155 = scmp.eq.s32.totalorder %s45, 0
      %p156 = por %p154, %p155
      %s158 = sadd.s32 %s157, 1
      %p161 = scmp.eq.s32.totalorder %s39, 1
      %p162 = scmp.ne.s32.totalorder %s157, %s159
      %p163 = scmp.eq.s32.totalorder %s39, 0
      %p164 = por %p162, %p163
      %p165 = scmp.ne.s32.totalorder %s157, %s159
      %p166 = scmp.eq.s32.totalorder %s44, 1
      %p167 = por %p165, %p166
      %p168 = scmp.ne.s32.totalorder %s159, %s160
      %p169 = scmp.eq.s32.totalorder %s44, 0
      %p170 = por %p168, %p169
      %p171 = scmp.ne.s32.totalorder %s159, %s160
      %p172 = scmp.eq.s32.totalorder %s45, 1
      %p173 = por %p171, %p172
      %p175 = scmp.ne.s32.totalorder %s160, %s174
      %p176 = scmp.eq.s32.totalorder %s45, 0
      %p177 = por %p175, %p176
      %s179 = sadd.s32 %s178, 1
      %p182 = scmp.eq.s32.totalorder %s39, 1
      %p183 = scmp.ne.s32.totalorder %s178, %s180
      %p184 = scmp.eq.s32.totalorder %s39, 0
      %p185 = por %p183, %p184
      %p186 = scmp.ne.s32.totalorder %s178, %s180
      %p187 = scmp.eq.s32.totalorder %s44, 1
      %p188 = por %p186, %p187
      %p189 = scmp.ne.s32.totalorder %s180, %s181
      %p190 = scmp.eq.s32.totalorder %s44, 0
      %p191 = por %p189, %p190
      %p192 = scmp.ne.s32.totalorder %s180, %s181
      %p193 = scmp.eq.s32.totalorder %s45, 1
      %p194 = por %p192, %p193
      %p196 = scmp.ne.s32.totalorder %s181, %s195
      %p197 = scmp.eq.s32.totalorder %s45, 0
      %p198 = por %p196, %p197
      %s200 = sadd.s32 %s199, 1
      %p203 = scmp.eq.s32.totalorder %s39, 1
      %p204 = scmp.ne.s32.totalorder %s199, %s201
      %p205 = scmp.eq.s32.totalorder %s39, 0
      %p206 = por %p204, %p205
      %p207 = scmp.ne.s32.totalorder %s199, %s201
      %p208 = scmp.eq.s32.totalorder %s44, 1
      %p209 = por %p207, %p208
      %p210 = scmp.ne.s32.totalorder %s201, %s202
      %p211 = scmp.eq.s32.totalorder %s44, 0
      %p212 = por %p210, %p211
      %p213 = scmp.ne.s32.totalorder %s201, %s202
      %p214 = scmp.eq.s32.totalorder %s45, 1
      %p215 = por %p213, %p214
      %p217 = scmp.ne.s32.totalorder %s202, %s216
      %p218 = scmp.eq.s32.totalorder %s45, 0
      %p219 = por %p217, %p218
      %s221 = sadd.s32 %s220, 1
      %p224 = scmp.eq.s32.totalorder %s39, 1
      %p225 = scmp.ne.s32.totalorder %s220, %s222
      %p226 = scmp.eq.s32.totalorder %s39, 0
      %p227 = por %p225, %p226
      %p228 = scmp.ne.s32.totalorder %s220, %s222
      %p229 = scmp.eq.s32.totalorder %s44, 1
      %p230 = por %p228, %p229
      %p231 = scmp.ne.s32.totalorder %s222, %s223
      %p232 = scmp.eq.s32.totalorder %s44, 0
      %p233 = por %p231, %p232
      %p234 = scmp.ne.s32.totalorder %s222, %s223
      %p235 = scmp.eq.s32.totalorder %s45, 1
      %p236 = por %p234, %p235
      %p238 = scmp.ne.s32.totalorder %s223, %s237
      %p239 = scmp.eq.s32.totalorder %s45, 0
      %p240 = por %p238, %p239
      %s242 = sadd.s32 %s241, 1
      %p245 = scmp.eq.s32.totalorder %s39, 1
      %p246 = scmp.ne.s32.totalorder %s241, %s243
      %p247 = scmp.eq.s32.totalorder %s39, 0
      %p248 = por %p246, %p247
      %p249 = scmp.ne.s32.totalorder %s241, %s243
      %p250 = scmp.eq.s32.totalorder %s44, 1
      %p251 = por %p249, %p250
      %p252 = scmp.ne.s32.totalorder %s243, %s244
      %p253 = scmp.eq.s32.totalorder %s44, 0
      %p254 = por %p252, %p253
      %p255 = scmp.ne.s32.totalorder %s243, %s244
      %p256 = scmp.eq.s32.totalorder %s45, 1
      %p257 = por %p255, %p256
      %p259 = scmp.ne.s32.totalorder %s244, %s258
      %p260 = scmp.eq.s32.totalorder %s45, 0
      %p261 = por %p259, %p260
      %s263 = sadd.s32 %s262, 1
      %p266 = scmp.eq.s32.totalorder %s39, 1
      %p267 = scmp.ne.s32.totalorder %s262, %s264
      %p268 = scmp.eq.s32.totalorder %s39, 0
      %p269 = por %p267, %p268
      %p270 = scmp.ne.s32.totalorder %s262, %s264
      %p271 = scmp.eq.s32.totalorder %s44, 1
      %p272 = por %p270, %p271
      %p273 = scmp.ne.s32.totalorder %s264, %s265
      %p274 = scmp.eq.s32.totalorder %s44, 0
      %p275 = por %p273, %p274
      %p276 = scmp.ne.s32.totalorder %s264, %s265
      %p277 = scmp.eq.s32.totalorder %s45, 1
      %p278 = por %p276, %p277
      %p280 = scmp.ne.s32.totalorder %s265, %s279
      %p281 = scmp.eq.s32.totalorder %s45, 0
      %p282 = por %p280, %p281
      %s284 = sadd.s32 %s283, 1
      %p287 = scmp.eq.s32.totalorder %s39, 1
      %p288 = scmp.ne.s32.totalorder %s283, %s285
      %p289 = scmp.eq.s32.totalorder %s39, 0
      %p290 = por %p288, %p289
      %p291 = scmp.ne.s32.totalorder %s283, %s285
      %p292 = scmp.eq.s32.totalorder %s44, 1
      %p293 = por %p291, %p292
      %p294 = scmp.ne.s32.totalorder %s285, %s286
      %p295 = scmp.eq.s32.totalorder %s44, 0
      %p296 = por %p294, %p295
      %p297 = scmp.ne.s32.totalorder %s285, %s286
      %p298 = scmp.eq.s32.totalorder %s45, 1
      %p299 = por %p297, %p298
      %p301 = scmp.ne.s32.totalorder %s286, %s300
      %p302 = scmp.eq.s32.totalorder %s45, 0
      %p303 = por %p301, %p302
      %s305 = sadd.s32 %s304, 1
      %p308 = scmp.eq.s32.totalorder %s39, 1
      %p309 = scmp.ne.s32.totalorder %s304, %s306
      %p310 = scmp.eq.s32.totalorder %s39, 0
      %p311 = por %p309, %p310
      %p312 = scmp.ne.s32.totalorder %s304, %s306
      %p313 = scmp.eq.s32.totalorder %s44, 1
      %p314 = por %p312, %p313
      %p315 = scmp.ne.s32.totalorder %s306, %s307
      %p316 = scmp.eq.s32.totalorder %s44, 0
      %p317 = por %p315, %p316
      %p318 = scmp.ne.s32.totalorder %s306, %s307
      %p319 = scmp.eq.s32.totalorder %s45, 1
      %p320 = por %p318, %p319
      %p322 = scmp.ne.s32.totalorder %s307, %s321
      %p323 = scmp.eq.s32.totalorder %s45, 0
      %p324 = por %p322, %p323
      %s326 = sadd.s32 %s325, 1
      %p329 = scmp.eq.s32.totalorder %s39, 1
      %p330 = scmp.ne.s32.totalorder %s325, %s327
      %p331 = scmp.eq.s32.totalorder %s39, 0
      %p332 = por %p330, %p331
      %p333 = scmp.ne.s32.totalorder %s325, %s327
      %p334 = scmp.eq.s32.totalorder %s44, 1
      %p335 = por %p333, %p334
      %p336 = scmp.ne.s32.totalorder %s327, %s328
      %p337 = scmp.eq.s32.totalorder %s44, 0
      %p338 = por %p336, %p337
      %p339 = scmp.ne.s32.totalorder %s327, %s328
      %p340 = scmp.eq.s32.totalorder %s45, 1
      %p341 = por %p339, %p340
      %p343 = scmp.ne.s32.totalorder %s328, %s342
      %p344 = scmp.eq.s32.totalorder %s45, 0
      %p345 = por %p343, %p344
      %s347 = sadd.s32 %s346, 1
      %p350 = scmp.eq.s32.totalorder %s39, 1
      %p351 = scmp.ne.s32.totalorder %s346, %s348
      %p352 = scmp.eq.s32.totalorder %s39, 0
      %p353 = por %p351, %p352
      %p354 = scmp.ne.s32.totalorder %s346, %s348
      %p355 = scmp.eq.s32.totalorder %s44, 1
      %p356 = por %p354, %p355
      %p357 = scmp.ne.s32.totalorder %s348, %s349
      %p358 = scmp.eq.s32.totalorder %s44, 0
      %p359 = por %p357, %p358
      %p360 = scmp.ne.s32.totalorder %s348, %s349
      %p361 = scmp.eq.s32.totalorder %s45, 1
      %p362 = por %p360, %p361
      %p364 = scmp.ne.s32.totalorder %s349, %s363
      %p365 = scmp.eq.s32.totalorder %s45, 0
      %p366 = por %p364, %p365
      %s368 = sadd.s32 %s367, 1
      %p371 = scmp.eq.s32.totalorder %s39, 1
      %p372 = scmp.ne.s32.totalorder %s367, %s369
      %p373 = scmp.eq.s32.totalorder %s39, 0
      %p374 = por %p372, %p373
      %p375 = scmp.ne.s32.totalorder %s367, %s369
      %p376 = scmp.eq.s32.totalorder %s44, 1
      %p377 = por %p375, %p376
      %p378 = scmp.ne.s32.totalorder %s369, %s370
      %p379 = scmp.eq.s32.totalorder %s44, 0
      %p380 = por %p378, %p379
      %p381 = scmp.ne.s32.totalorder %s369, %s370
      %p382 = scmp.eq.s32.totalorder %s45, 1
      %p383 = por %p381, %p382
      %p385 = scmp.ne.s32.totalorder %s370, %s384
      %p386 = scmp.eq.s32.totalorder %s45, 0
      %p387 = por %p385, %p386
      %s389 = sadd.s32 %s388, 1
      %p392 = scmp.eq.s32.totalorder %s39, 1
      %p393 = scmp.ne.s32.totalorder %s388, %s390
      %p394 = scmp.eq.s32.totalorder %s39, 0
      %p395 = por %p393, %p394
      %p396 = scmp.ne.s32.totalorder %s388, %s390
      %p397 = scmp.eq.s32.totalorder %s44, 1
      %p398 = por %p396, %p397
      %p399 = scmp.ne.s32.totalorder %s390, %s391
      %p400 = scmp.eq.s32.totalorder %s44, 0
      %p401 = por %p399, %p400
      %p402 = scmp.ne.s32.totalorder %s390, %s391
      %p403 = scmp.eq.s32.totalorder %s45, 1
      %p404 = por %p402, %p403
      %p406 = scmp.ne.s32.totalorder %s391, %s405
      %p407 = scmp.eq.s32.totalorder %s45, 0
      %p408 = por %p406, %p407
      %s410 = sadd.s32 %s409, 1
      %p413 = scmp.eq.s32.totalorder %s39, 1
      %p414 = scmp.ne.s32.totalorder %s409, %s411
      %p415 = scmp.eq.s32.totalorder %s39, 0
      %p416 = por %p414, %p415
      %p417 = scmp.ne.s32.totalorder %s409, %s411
      %p418 = scmp.eq.s32.totalorder %s44, 1
      %p419 = por %p417, %p418
      %p420 = scmp.ne.s32.totalorder %s411, %s412
      %p421 = scmp.eq.s32.totalorder %s44, 0
      %p422 = por %p420, %p421
      %p423 = scmp.ne.s32.totalorder %s411, %s412
      %p424 = scmp.eq.s32.totalorder %s45, 1
      %p425 = por %p423, %p424
      %p427 = scmp.ne.s32.totalorder %s412, %s426
      %p428 = scmp.eq.s32.totalorder %s45, 0
      %p429 = por %p427, %p428
      %s431 = sadd.s32 %s430, 1
      %p434 = scmp.eq.s32.totalorder %s39, 1
      %p435 = scmp.ne.s32.totalorder %s430, %s432
      %p436 = scmp.eq.s32.totalorder %s39, 0
      %p437 = por %p435, %p436
      %p438 = scmp.ne.s32.totalorder %s430, %s432
      %p439 = scmp.eq.s32.totalorder %s44, 1
      %p440 = por %p438, %p439
      %p441 = scmp.ne.s32.totalorder %s432, %s433
      %p442 = scmp.eq.s32.totalorder %s44, 0
      %p443 = por %p441, %p442
      %p444 = scmp.ne.s32.totalorder %s432, %s433
      %p445 = scmp.eq.s32.totalorder %s45, 1
      %p446 = por %p444, %p445
      %p448 = scmp.ne.s32.totalorder %s433, %s447
      %p449 = scmp.eq.s32.totalorder %s45, 0
      %p450 = por %p448, %p449
      %s452 = sadd.s32 %s451, 1
      %p455 = scmp.eq.s32.totalorder %s39, 1
      %p456 = scmp.ne.s32.totalorder %s451, %s453
      %p457 = scmp.eq.s32.totalorder %s39, 0
      %p458 = por %p456, %p457
      %p459 = scmp.ne.s32.totalorder %s451, %s453
      %p460 = scmp.eq.s32.totalorder %s44, 1
      %p461 = por %p459, %p460
      %p462 = scmp.ne.s32.totalorder %s453, %s454
      %p463 = scmp.eq.s32.totalorder %s44, 0
      %p464 = por %p462, %p463
      %p465 = scmp.ne.s32.totalorder %s453, %s454
      %p466 = scmp.eq.s32.totalorder %s45, 1
      %p467 = por %p465, %p466
      %p469 = scmp.ne.s32.totalorder %s454, %s468
      %p470 = scmp.eq.s32.totalorder %s45, 0
      %p471 = por %p469, %p470
      %s473 = sadd.s32 %s472, 1
      %p476 = scmp.eq.s32.totalorder %s39, 1
      %p477 = scmp.ne.s32.totalorder %s472, %s474
      %p478 = scmp.eq.s32.totalorder %s39, 0
      %p479 = por %p477, %p478
      %p480 = scmp.ne.s32.totalorder %s472, %s474
      %p481 = scmp.eq.s32.totalorder %s44, 1
      %p482 = por %p480, %p481
      %p483 = scmp.ne.s32.totalorder %s474, %s475
      %p484 = scmp.eq.s32.totalorder %s44, 0
      %p485 = por %p483, %p484
      %p486 = scmp.ne.s32.totalorder %s474, %s475
      %p487 = scmp.eq.s32.totalorder %s45, 1
      %p488 = por %p486, %p487
      %p490 = scmp.ne.s32.totalorder %s475, %s489
      %p491 = scmp.eq.s32.totalorder %s45, 0
      %p492 = por %p490, %p491
      %s494 = sadd.s32 %s493, 1
      %p497 = scmp.eq.s32.totalorder %s39, 1
      %p498 = scmp.ne.s32.totalorder %s493, %s495
      %p499 = scmp.eq.s32.totalorder %s39, 0
      %p500 = por %p498, %p499
      %p501 = scmp.ne.s32.totalorder %s493, %s495
      %p502 = scmp.eq.s32.totalorder %s44, 1
      %p503 = por %p501, %p502
      %p504 = scmp.ne.s32.totalorder %s495, %s496
      %p505 = scmp.eq.s32.totalorder %s44, 0
      %p506 = por %p504, %p505
      %p507 = scmp.ne.s32.totalorder %s495, %s496
      %p508 = scmp.eq.s32.totalorder %s45, 1
      %p509 = por %p507, %p508
      %p511 = scmp.ne.s32.totalorder %s496, %s510
      %p512 = scmp.eq.s32.totalorder %s45, 0
      %p513 = por %p511, %p512
      %s514 = ssub.s32 %s39, %s46
      %p515 = scmp.eq.s32.totalorder %s514, 0
      %s517 = sadd.s32 %s516, 1
      %s518 = scalar_select %p515, %s516, %s517
      %p521 = pneg %p515
      %p522 = scmp.eq.s32.totalorder %s39, 1
      %p523 = por %p521, %p522
      %p524 = scmp.ne.s32.totalorder %s516, %s519
      %p525 = scmp.eq.s32.totalorder %s39, 0
      %p526 = por %p524, %p525
      %p527 = scmp.ne.s32.totalorder %s516, %s519
      %p528 = scmp.eq.s32.totalorder %s44, 1
      %p529 = por %p527, %p528
      %p530 = scmp.ne.s32.totalorder %s519, %s520
      %p531 = scmp.eq.s32.totalorder %s44, 0
      %p532 = por %p530, %p531
      %p533 = scmp.ne.s32.totalorder %s519, %s520
      %p534 = scmp.eq.s32.totalorder %s45, 1
      %p535 = por %p533, %p534
      %p537 = scmp.ne.s32.totalorder %s520, %s536
      %p538 = scmp.eq.s32.totalorder %s45, 0
      %p539 = por %p537, %p538
      %p540 = scmp.le.s32.totalorder 1, %s39
      %p541 = scmp.lt.s32.totalorder %s39, 3
      %p542 = pnand %p540, %p541
      %p543 = pneg %p542
      // Predicated region
      $region9: #{tpu_custom_call.1} parent=5 // pred_check
        _
      $region10: #{tpu_custom_call.1} parent=5 // pred_check_branch
        %545 = sbr.rel (%p542) target = $region12
      $region11: #{tpu_custom_call.1} parent=5 // pred_region
        %s546 = ssub.s32 %s39, 1
        // Predicated region
        $region13: #{tpu_custom_call.1} parent=11 // pred_check
          %p547 = pneg %p86
        $region14: #{tpu_custom_call.1} parent=11 // pred_check_branch
          %549 = sbr.rel (%p547) target = $region16
        $region15: #{tpu_custom_call.1} parent=11 // pred_region
          %551 = vsyncadd [#allocation3], 0
          %s553 = sshll.u32 %s1, 4
          %s554 = int_to_ptr.hbm [resolvable:$true] %s553
          %s555 = sshll.u32 [#allocation2], 4
          %s556 = int_to_ptr.vmem [resolvable:$true] %s555
          %558 = dma.hbm_to_vmem [thread:$0]  %s554, 32, %s556, [#allocation3]
        $region16: #{tpu_custom_call.1} parent=11 // pred_fallthru
          _
        // Predicated region
        $region17: #{tpu_custom_call.1} parent=11 // pred_check
          %p559 = pneg %p107
        $region18: #{tpu_custom_call.1} parent=11 // pred_check_branch
          %561 = sbr.rel (%p559) target = $region20
        $region19: #{tpu_custom_call.1} parent=11 // pred_region
          %563 = vsyncadd [#allocation6], 0
          %s565 = sshll.u32 %s2, 4
          %s566 = int_to_ptr.hbm [resolvable:$true] %s565
          %s567 = sshll.u32 [#allocation5], 4
          %s568 = int_to_ptr.vmem [resolvable:$true] %s567
          %570 = dma.hbm_to_vmem [thread:$0]  %s566, 128, %s568, [#allocation6]
        $region20: #{tpu_custom_call.1} parent=11 // pred_fallthru
          _
        // Predicated region
        $region21: #{tpu_custom_call.1} parent=11 // pred_check
          %p571 = pneg %p128
        $region22: #{tpu_custom_call.1} parent=11 // pred_check_branch
          %573 = sbr.rel (%p571) target = $region24
        $region23: #{tpu_custom_call.1} parent=11 // pred_region
          %575 = vsyncadd [#allocation6], 0
          %s577 = sshll.u32 %s3, 4
          %s578 = int_to_ptr.hbm [resolvable:$true] %s577
          %s579 = sshll.u32 [#allocation7], 4
          %s580 = int_to_ptr.vmem [resolvable:$true] %s579
          %582 = dma.hbm_to_vmem [thread:$0]  %s578, 16, %s580, [#allocation6]
        $region24: #{tpu_custom_call.1} parent=11 // pred_fallthru
          _
        // Predicated region
        $region25: #{tpu_custom_call.1} parent=11 // pred_check
          %p583 = pneg %p149
        $region26: #{tpu_custom_call.1} parent=11 // pred_check_branch
          %585 = sbr.rel (%p583) target = $region28
        $region27: #{tpu_custom_call.1} parent=11 // pred_region
          _
        $region28: #{tpu_custom_call.1} parent=11 // pred_fallthru
          _
        // Predicated region
        $region29: #{tpu_custom_call.1} parent=11 // pred_check
          %p586 = pneg %p170
        $region30: #{tpu_custom_call.1} parent=11 // pred_check_branch
          %588 = sbr.rel (%p586) target = $region32
        $region31: #{tpu_custom_call.1} parent=11 // pred_region
          %590 = vsyncadd [#allocation9], 0
          %s592 = sshll.u32 %s5, 4
          %s593 = int_to_ptr.hbm [resolvable:$true] %s592
          %s594 = sshll.u32 [#allocation8], 4
          %s595 = int_to_ptr.vmem [resolvable:$true] %s594
          %597 = dma.hbm_to_vmem [thread:$0]  %s593, 16, %s595, [#allocation9]
        $region32: #{tpu_custom_call.1} parent=11 // pred_fallthru
          _
        // Predicated region
        $region33: #{tpu_custom_call.1} parent=11 // pred_check
          %p598 = pneg %p191
        $region34: #{tpu_custom_call.1} parent=11 // pred_check_branch
          %600 = sbr.rel (%p598) target = $region36
        $region35: #{tpu_custom_call.1} parent=11 // pred_region
          _
        $region36: #{tpu_custom_call.1} parent=11 // pred_fallthru
          _
        // Predicated region
        $region37: #{tpu_custom_call.1} parent=11 // pred_check
          %p601 = pneg %p212
        $region38: #{tpu_custom_call.1} parent=11 // pred_check_branch
          %603 = sbr.rel (%p601) target = $region40
        $region39: #{tpu_custom_call.1} parent=11 // pred_region
          %605 = vsyncadd [#allocation9], 0
          %s607 = sshll.u32 %s7, 4
          %s608 = int_to_ptr.hbm [resolvable:$true] %s607
          %s609 = sshll.u32 [#allocation10], 4
          %s610 = int_to_ptr.vmem [resolvable:$true] %s609
          %612 = dma.hbm_to_vmem [thread:$0]  %s608, 16, %s610, [#allocation9]
        $region40: #{tpu_custom_call.1} parent=11 // pred_fallthru
          _
        // Predicated region
        $region41: #{tpu_custom_call.1} parent=11 // pred_check
          %p613 = pneg %p233
        $region42: #{tpu_custom_call.1} parent=11 // pred_check_branch
          %615 = sbr.rel (%p613) target = $region44
        $region43: #{tpu_custom_call.1} parent=11 // pred_region
          %617 = vsyncadd [#allocation12], 0
          %s618 = sshll.u32 %s8, 4
          %s619 = int_to_ptr.hbm [resolvable:$true] %s618
          %s620 = sshll.u32 [#allocation11], 4
          %s621 = int_to_ptr.vmem [resolvable:$true] %s620
          %626 = dma.hbm_to_vmem [thread:$0]  %s619, 512, %s621, [#allocation12], 128, 128, 8
        $region44: #{tpu_custom_call.1} parent=11 // pred_fallthru
          _
        // Predicated region
        $region45: #{tpu_custom_call.1} parent=11 // pred_check
          %p627 = pneg %p254
        $region46: #{tpu_custom_call.1} parent=11 // pred_check_branch
          %629 = sbr.rel (%p627) target = $region48
        $region47: #{tpu_custom_call.1} parent=11 // pred_region
          %631 = vsyncadd [#allocation12], 0
          %s633 = sshll.u32 %s9, 4
          %s634 = int_to_ptr.hbm [resolvable:$true] %s633
          %s635 = sshll.u32 [#allocation13], 4
          %s636 = int_to_ptr.vmem [resolvable:$true] %s635
          %638 = dma.hbm_to_vmem [thread:$0]  %s634, 16, %s636, [#allocation12]
        $region48: #{tpu_custom_call.1} parent=11 // pred_fallthru
          _
        // Predicated region
        $region49: #{tpu_custom_call.1} parent=11 // pred_check
          %p639 = pneg %p275
        $region50: #{tpu_custom_call.1} parent=11 // pred_check_branch
          %641 = sbr.rel (%p639) target = $region52
        $region51: #{tpu_custom_call.1} parent=11 // pred_region
          %643 = vsyncadd [#allocation15], 0
          %s644 = sshll.u32 %s10, 4
          %s645 = int_to_ptr.hbm [resolvable:$true] %s644
          %s646 = sshll.u32 [#allocation14], 4
          %s647 = int_to_ptr.vmem [resolvable:$true] %s646
          %652 = dma.hbm_to_vmem [thread:$0]  %s645, 512, %s647, [#allocation15], 128, 128, 8
        $region52: #{tpu_custom_call.1} parent=11 // pred_fallthru
          _
        // Predicated region
        $region53: #{tpu_custom_call.1} parent=11 // pred_check
          %p653 = pneg %p296
        $region54: #{tpu_custom_call.1} parent=11 // pred_check_branch
          %655 = sbr.rel (%p653) target = $region56
        $region55: #{tpu_custom_call.1} parent=11 // pred_region
          %657 = vsyncadd [#allocation15], 0
          %s659 = sshll.u32 %s11, 4
          %s660 = int_to_ptr.hbm [resolvable:$true] %s659
          %s661 = sshll.u32 [#allocation16], 4
          %s662 = int_to_ptr.vmem [resolvable:$true] %s661
          %664 = dma.hbm_to_vmem [thread:$0]  %s660, 16, %s662, [#allocation15]
        $region56: #{tpu_custom_call.1} parent=11 // pred_fallthru
          _
        // Predicated region
        $region57: #{tpu_custom_call.1} parent=11 // pred_check
          %p665 = pneg %p317
        $region58: #{tpu_custom_call.1} parent=11 // pred_check_branch
          %667 = sbr.rel (%p665) target = $region60
        $region59: #{tpu_custom_call.1} parent=11 // pred_region
          %669 = vsyncadd [#allocation18], 0
          %s670 = sshll.u32 %s12, 4
          %s671 = int_to_ptr.hbm [resolvable:$true] %s670
          %s672 = sshll.u32 [#allocation17], 4
          %s673 = int_to_ptr.vmem [resolvable:$true] %s672
          %678 = dma.hbm_to_vmem [thread:$0]  %s671, 512, %s673, [#allocation18], 128, 128, 8
        $region60: #{tpu_custom_call.1} parent=11 // pred_fallthru
          _
        // Predicated region
        $region61: #{tpu_custom_call.1} parent=11 // pred_check
          %p679 = pneg %p338
        $region62: #{tpu_custom_call.1} parent=11 // pred_check_branch
          %681 = sbr.rel (%p679) target = $region64
        $region63: #{tpu_custom_call.1} parent=11 // pred_region
          %683 = vsyncadd [#allocation18], 0
          %s685 = sshll.u32 %s13, 4
          %s686 = int_to_ptr.hbm [resolvable:$true] %s685
          %s687 = sshll.u32 [#allocation19], 4
          %s688 = int_to_ptr.vmem [resolvable:$true] %s687
          %690 = dma.hbm_to_vmem [thread:$0]  %s686, 16, %s688, [#allocation18]
        $region64: #{tpu_custom_call.1} parent=11 // pred_fallthru
          _
        // Predicated region
        $region65: #{tpu_custom_call.1} parent=11 // pred_check
          %p691 = pneg %p359
        $region66: #{tpu_custom_call.1} parent=11 // pred_check_branch
          %693 = sbr.rel (%p691) target = $region68
        $region67: #{tpu_custom_call.1} parent=11 // pred_region
          %695 = vsyncadd [#allocation21], 0
          %s696 = sshll.u32 %s14, 4
          %s697 = int_to_ptr.hbm [resolvable:$true] %s696
          %s698 = sshll.u32 [#allocation20], 4
          %s699 = int_to_ptr.vmem [resolvable:$true] %s698
          %704 = dma.hbm_to_vmem [thread:$0]  %s697, 512, %s699, [#allocation21], 128, 128, 8
        $region68: #{tpu_custom_call.1} parent=11 // pred_fallthru
          _
        // Predicated region
        $region69: #{tpu_custom_call.1} parent=11 // pred_check
          %p705 = pneg %p380
        $region70: #{tpu_custom_call.1} parent=11 // pred_check_branch
          %707 = sbr.rel (%p705) target = $region72
        $region71: #{tpu_custom_call.1} parent=11 // pred_region
          %709 = vsyncadd [#allocation21], 0
          %s711 = sshll.u32 %s15, 4
          %s712 = int_to_ptr.hbm [resolvable:$true] %s711
          %s713 = sshll.u32 [#allocation22], 4
          %s714 = int_to_ptr.vmem [resolvable:$true] %s713
          %716 = dma.hbm_to_vmem [thread:$0]  %s712, 16, %s714, [#allocation21]
        $region72: #{tpu_custom_call.1} parent=11 // pred_fallthru
          _
        // Predicated region
        $region73: #{tpu_custom_call.1} parent=11 // pred_check
          %p717 = pneg %p401
        $region74: #{tpu_custom_call.1} parent=11 // pred_check_branch
          %719 = sbr.rel (%p717) target = $region76
        $region75: #{tpu_custom_call.1} parent=11 // pred_region
          %721 = vsyncadd [#allocation24], 0
          %s722 = sshll.u32 %s16, 4
          %s723 = int_to_ptr.hbm [resolvable:$true] %s722
          %s724 = sshll.u32 [#allocation23], 4
          %s725 = int_to_ptr.vmem [resolvable:$true] %s724
          %730 = dma.hbm_to_vmem [thread:$0]  %s723, 512, %s725, [#allocation24], 128, 128, 8
        $region76: #{tpu_custom_call.1} parent=11 // pred_fallthru
          _
        // Predicated region
        $region77: #{tpu_custom_call.1} parent=11 // pred_check
          %p731 = pneg %p422
        $region78: #{tpu_custom_call.1} parent=11 // pred_check_branch
          %733 = sbr.rel (%p731) target = $region80
        $region79: #{tpu_custom_call.1} parent=11 // pred_region
          %735 = vsyncadd [#allocation24], 0
          %s737 = sshll.u32 %s17, 4
          %s738 = int_to_ptr.hbm [resolvable:$true] %s737
          %s739 = sshll.u32 [#allocation25], 4
          %s740 = int_to_ptr.vmem [resolvable:$true] %s739
          %742 = dma.hbm_to_vmem [thread:$0]  %s738, 16, %s740, [#allocation24]
        $region80: #{tpu_custom_call.1} parent=11 // pred_fallthru
          _
        // Predicated region
        $region81: #{tpu_custom_call.1} parent=11 // pred_check
          %p743 = pneg %p443
        $region82: #{tpu_custom_call.1} parent=11 // pred_check_branch
          %745 = sbr.rel (%p743) target = $region84
        $region83: #{tpu_custom_call.1} parent=11 // pred_region
          _
        $region84: #{tpu_custom_call.1} parent=11 // pred_fallthru
          _
        // Predicated region
        $region85: #{tpu_custom_call.1} parent=11 // pred_check
          %p746 = pneg %p464
        $region86: #{tpu_custom_call.1} parent=11 // pred_check_branch
          %748 = sbr.rel (%p746) target = $region88
        $region87: #{tpu_custom_call.1} parent=11 // pred_region
          _
        $region88: #{tpu_custom_call.1} parent=11 // pred_fallthru
          _
        // Predicated region
        $region89: #{tpu_custom_call.1} parent=11 // pred_check
          %p749 = pneg %p485
        $region90: #{tpu_custom_call.1} parent=11 // pred_check_branch
          %751 = sbr.rel (%p749) target = $region92
        $region91: #{tpu_custom_call.1} parent=11 // pred_region
          _
        $region92: #{tpu_custom_call.1} parent=11 // pred_fallthru
          _
        // Predicated region
        $region93: #{tpu_custom_call.1} parent=11 // pred_check
          %p752 = pneg %p506
        $region94: #{tpu_custom_call.1} parent=11 // pred_check_branch
          %754 = sbr.rel (%p752) target = $region96
        $region95: #{tpu_custom_call.1} parent=11 // pred_region
          _
        $region96: #{tpu_custom_call.1} parent=11 // pred_fallthru
          _
      $region12: #{tpu_custom_call.1} parent=5 // pred_fallthru
        _
      %p755 = scmp.lt.s32.totalorder %s39, 2
      // Predicated region
      $region97: #{tpu_custom_call.1} parent=5 // pred_check
        %p756 = pneg %p755
      $region98: #{tpu_custom_call.1} parent=5 // pred_check_branch
        %758 = sbr.rel (%p756) target = $region100
      $region99: #{tpu_custom_call.1} parent=5 // pred_region
        // Predicated region
        $region101: #{tpu_custom_call.1} parent=99 // pred_check
          %p759 = pneg %p59
        $region102: #{tpu_custom_call.1} parent=99 // pred_check_branch
          %761 = sbr.rel (%p759) target = $region104
        $region103: #{tpu_custom_call.1} parent=99 // pred_region
          %p762 = scmp.lt.s32.totalorder %s39, 1
          %s763 = scalar_select %p762, %s39, 1
          %s764 = smul.addr %s763, 2
          %s765 = smul.addr %s764, 8
          %s766 = scalar_lea.vmem %s0, %s765
        $region104: #{tpu_custom_call.1} parent=99 // pred_fallthru
          _
      $region100: #{tpu_custom_call.1} parent=5 // pred_fallthru
        _
      %p767 = scmp.le.s32.totalorder 1, %s39
      %p768 = scmp.lt.s32.totalorder %s39, 3
      %p769 = pnand %p767, %p768
      %p770 = pneg %p769
      // Predicated region
      $region105: #{tpu_custom_call.1} parent=5 // pred_check
        _
      $region106: #{tpu_custom_call.1} parent=5 // pred_check_branch
        %772 = sbr.rel (%p769) target = $region108
      $region107: #{tpu_custom_call.1} parent=5 // pred_region
        %s773 = ssub.s32 %s39, 1
        // Predicated region
        $region109: #{tpu_custom_call.1} parent=107 // pred_check
          %p774 = pneg %p86
        $region110: #{tpu_custom_call.1} parent=107 // pred_check_branch
          %776 = sbr.rel (%p774) target = $region112
        $region111: #{tpu_custom_call.1} parent=107 // pred_region
          %778 = dma.done [#allocation3], 32
        $region112: #{tpu_custom_call.1} parent=107 // pred_fallthru
          _
        // Predicated region
        $region113: #{tpu_custom_call.1} parent=107 // pred_check
          %p779 = pneg %p107
        $region114: #{tpu_custom_call.1} parent=107 // pred_check_branch
          %781 = sbr.rel (%p779) target = $region116
        $region115: #{tpu_custom_call.1} parent=107 // pred_region
          %783 = dma.done [#allocation6], 128
        $region116: #{tpu_custom_call.1} parent=107 // pred_fallthru
          _
        // Predicated region
        $region117: #{tpu_custom_call.1} parent=107 // pred_check
          %p784 = pneg %p128
        $region118: #{tpu_custom_call.1} parent=107 // pred_check_branch
          %786 = sbr.rel (%p784) target = $region120
        $region119: #{tpu_custom_call.1} parent=107 // pred_region
          %788 = dma.done [#allocation6], 16
        $region120: #{tpu_custom_call.1} parent=107 // pred_fallthru
          _
        // Predicated region
        $region121: #{tpu_custom_call.1} parent=107 // pred_check
          %p789 = pneg %p170
        $region122: #{tpu_custom_call.1} parent=107 // pred_check_branch
          %791 = sbr.rel (%p789) target = $region124
        $region123: #{tpu_custom_call.1} parent=107 // pred_region
          %793 = dma.done [#allocation9], 16
        $region124: #{tpu_custom_call.1} parent=107 // pred_fallthru
          _
        // Predicated region
        $region125: #{tpu_custom_call.1} parent=107 // pred_check
          %p794 = pneg %p212
        $region126: #{tpu_custom_call.1} parent=107 // pred_check_branch
          %796 = sbr.rel (%p794) target = $region128
        $region127: #{tpu_custom_call.1} parent=107 // pred_region
          %798 = dma.done [#allocation9], 16
        $region128: #{tpu_custom_call.1} parent=107 // pred_fallthru
          _
        // Predicated region
        $region129: #{tpu_custom_call.1} parent=107 // pred_check
          %p799 = pneg %p233
        $region130: #{tpu_custom_call.1} parent=107 // pred_check_branch
          %801 = sbr.rel (%p799) target = $region132
        $region131: #{tpu_custom_call.1} parent=107 // pred_region
          %803 = dma.done [#allocation12], 512
        $region132: #{tpu_custom_call.1} parent=107 // pred_fallthru
          _
        // Predicated region
        $region133: #{tpu_custom_call.1} parent=107 // pred_check
          %p804 = pneg %p254
        $region134: #{tpu_custom_call.1} parent=107 // pred_check_branch
          %806 = sbr.rel (%p804) target = $region136
        $region135: #{tpu_custom_call.1} parent=107 // pred_region
          %808 = dma.done [#allocation12], 16
        $region136: #{tpu_custom_call.1} parent=107 // pred_fallthru
          _
        // Predicated region
        $region137: #{tpu_custom_call.1} parent=107 // pred_check
          %p809 = pneg %p275
        $region138: #{tpu_custom_call.1} parent=107 // pred_check_branch
          %811 = sbr.rel (%p809) target = $region140
        $region139: #{tpu_custom_call.1} parent=107 // pred_region
          %813 = dma.done [#allocation15], 512
        $region140: #{tpu_custom_call.1} parent=107 // pred_fallthru
          _
        // Predicated region
        $region141: #{tpu_custom_call.1} parent=107 // pred_check
          %p814 = pneg %p296
        $region142: #{tpu_custom_call.1} parent=107 // pred_check_branch
          %816 = sbr.rel (%p814) target = $region144
        $region143: #{tpu_custom_call.1} parent=107 // pred_region
          %818 = dma.done [#allocation15], 16
        $region144: #{tpu_custom_call.1} parent=107 // pred_fallthru
          _
        // Predicated region
        $region145: #{tpu_custom_call.1} parent=107 // pred_check
          %p819 = pneg %p317
        $region146: #{tpu_custom_call.1} parent=107 // pred_check_branch
          %821 = sbr.rel (%p819) target = $region148
        $region147: #{tpu_custom_call.1} parent=107 // pred_region
          %823 = dma.done [#allocation18], 512
        $region148: #{tpu_custom_call.1} parent=107 // pred_fallthru
          _
        // Predicated region
        $region149: #{tpu_custom_call.1} parent=107 // pred_check
          %p824 = pneg %p338
        $region150: #{tpu_custom_call.1} parent=107 // pred_check_branch
          %826 = sbr.rel (%p824) target = $region152
        $region151: #{tpu_custom_call.1} parent=107 // pred_region
          %828 = dma.done [#allocation18], 16
        $region152: #{tpu_custom_call.1} parent=107 // pred_fallthru
          _
        // Predicated region
        $region153: #{tpu_custom_call.1} parent=107 // pred_check
          %p829 = pneg %p359
        $region154: #{tpu_custom_call.1} parent=107 // pred_check_branch
          %831 = sbr.rel (%p829) target = $region156
        $region155: #{tpu_custom_call.1} parent=107 // pred_region
          %833 = dma.done [#allocation21], 512
        $region156: #{tpu_custom_call.1} parent=107 // pred_fallthru
          _
        // Predicated region
        $region157: #{tpu_custom_call.1} parent=107 // pred_check
          %p834 = pneg %p380
        $region158: #{tpu_custom_call.1} parent=107 // pred_check_branch
          %836 = sbr.rel (%p834) target = $region160
        $region159: #{tpu_custom_call.1} parent=107 // pred_region
          %838 = dma.done [#allocation21], 16
        $region160: #{tpu_custom_call.1} parent=107 // pred_fallthru
          _
        // Predicated region
        $region161: #{tpu_custom_call.1} parent=107 // pred_check
          %p839 = pneg %p401
        $region162: #{tpu_custom_call.1} parent=107 // pred_check_branch
          %841 = sbr.rel (%p839) target = $region164
        $region163: #{tpu_custom_call.1} parent=107 // pred_region
          %843 = dma.done [#allocation24], 512
        $region164: #{tpu_custom_call.1} parent=107 // pred_fallthru
          _
        // Predicated region
        $region165: #{tpu_custom_call.1} parent=107 // pred_check
          %p844 = pneg %p422
        $region166: #{tpu_custom_call.1} parent=107 // pred_check_branch
          %846 = sbr.rel (%p844) target = $region168
        $region167: #{tpu_custom_call.1} parent=107 // pred_region
          %848 = dma.done [#allocation24], 16
        $region168: #{tpu_custom_call.1} parent=107 // pred_fallthru
          _
        %p849 = scmp.lt.s32.totalorder %s44, 1
        %s850 = scalar_select %p849, %s44, 1
        %s851 = smul.addr %s850, 2
        %s852 = smul.addr %s851, 8
        %s853 = scalar_lea.vmem %s0, %s852
        %p854 = pneg %p65
        %p855 = pneg %p62
        %p856 = pneg %p86
        %p857 = pneg %p83
        %p858 = pneg %p107
        %p859 = pneg %p104
        %p860 = pneg %p128
        %p861 = pneg %p125
        %p862 = pneg %p149
        %p863 = pneg %p146
        %p864 = pneg %p170
        %p865 = pneg %p167
        %p866 = pneg %p191
        %p867 = pneg %p188
        %p868 = pneg %p212
        %p869 = pneg %p209
        %p870 = pneg %p233
        %p871 = pneg %p230
        %p872 = pneg %p254
        %p873 = pneg %p251
        %p874 = pneg %p275
        %p875 = pneg %p272
        %p876 = pneg %p296
        %p877 = pneg %p293
        %p878 = pneg %p317
        %p879 = pneg %p314
        %p880 = pneg %p338
        %p881 = pneg %p335
        %p882 = pneg %p359
        %p883 = pneg %p356
        %p884 = pneg %p380
        %p885 = pneg %p377
        %p886 = pneg %p401
        %p887 = pneg %p398
        %p888 = pneg %p422
        %p889 = pneg %p419
        %p890 = pneg %p443
        %p891 = pneg %p440
        %p892 = pneg %p464
        %p893 = pneg %p461
        %p894 = pneg %p485
        %p895 = pneg %p482
        %p896 = pneg %p506
        %p897 = pneg %p503
        %p898 = pneg %p532
        %p899 = pneg %p529
        %s900 = sand.u32 %s519, 1
        %s901 = scalar_lea.sflag [#allocation4], %s900
        %s902 = sand.u32 %s519, 1
        %s903 = smul.addr %s902, 2
        %s904 = scalar_lea.vmem [#allocation26], %s903
        %p905 = scmp.lt.s32.totalorder %s44, 1
        %s906 = scalar_select %p905, %s44, 1
        %s907 = smul.addr %s906, 2
        %s908 = smul.addr %s907, 8
        %s909 = scalar_lea.vmem %s0, %s908
        %v910 = vld [vmem:[%s909] sm:$0xff]
        %v911 = vld [vmem:[%s909 + $0x8] sm:$0xff]
        %v912 = vld [vmem:[#allocation5] sm:$0xff]
        %v913 = vld [vmem:[#allocation7] sm:$0x1]
        %v915 = vperm.slane %v913, 0
        %vm917 = vcmask 64512
        %v919 = vsel %vm917, %v910, 0
        %v922 = vsel %vm917, %v911, 0
        %924 = vmatpush.msra.mxu0 0.0
        %925 = vmatpush.msra.mxu0 0.0
        %926 = vmatpush.msra.mxu0 0.0
        %927 = vmatpush.msra.mxu0 0.0
        %928 = vmatpush.msra.mxu0 0.0
        %929 = vmatpush.msra.mxu0 0.0
        %930 = vmatpush.msra.mxu0 0.0
        %931 = vmatpush.msra.mxu0 0.0
        %932 = vmatpush.msra.mxu0 0.0
        %933 = vmatpush.msra.mxu0 0.0
        %934 = vmatpush.msra.mxu0 0.0
        %935 = vmatpush.msra.mxu0 0.0
        %936 = vmatpush.msra.mxu0 0.0
        %937 = vmatpush.msra.mxu0 0.0
        %938 = vmatpush.msra.mxu0 0.0
        %939 = vmatpush.msra.mxu0 %v912
        %940 = vmatmul.f32.gmra.mxu0 %v919
        %v941 = vpop.f32.mrf.mxu0
        %v942 = vadd.f32 %v915, %v941
        %943 = vmatmul.f32.gmra.mxu0 %v922
        %v944 = vpop.f32.mrf.mxu0
        %v945 = vadd.f32 %v915, %v944
        %946 = vdwg.mxu0
        %949 = vrot.lane.b32.xlu0 %v942, 96
        %v950 = vpop.permute.xlu0 %949
        %951 = vrot.lane.b32.xlu0 %v945, 96
        %v952 = vpop.permute.xlu0 %951
        %v953 = vsel %vm917, %v942, 0
        %v955 = vsel %vm917, %v945, 0
        %v957 = vsel %vm917, %v950, 0
        %v959 = vsel %vm917, %v952, 0
        %961 = vmatpush.xpose.msra.mxu0 0.0
        %962 = vmatpush.xpose.msra.mxu0 0.0
        %963 = vmatpush.xpose.msra.mxu0 0.0
        %964 = vmatpush.xpose.msra.mxu0 0.0
        %965 = vmatpush.xpose.msra.mxu0 0.0
        %966 = vmatpush.xpose.msra.mxu0 0.0
        %967 = vmatpush.xpose.msra.mxu0 0.0
        %968 = vmatpush.xpose.msra.mxu0 0.0
        %969 = vmatpush.xpose.msra.mxu0 0.0
        %970 = vmatpush.xpose.msra.mxu0 0.0
        %971 = vmatpush.xpose.msra.mxu0 0.0
        %972 = vmatpush.xpose.msra.mxu0 0.0
        %973 = vmatpush.xpose.msra.mxu0 0.0
        %974 = vmatpush.xpose.msra.mxu0 0.0
        %975 = vmatpush.xpose.msra.mxu0 %v959
        %976 = vmatpush.xpose.msra.mxu0 %v957
        %977 = vmatmul.f32.gmra.mxu0 %v953
        %v978 = vpop.f32.mrf.mxu0
        %v979 = vadd.f32 0.0, %v978
        %980 = vmatmul.f32.gmra.mxu0 %v955
        %v981 = vpop.f32.mrf.mxu0
        %v982 = vadd.f32 0.0, %v981
        %983 = vdwg.mxu0
        %v984 = vmul.f32 %v979, 0.17677669
        %v985 = vmul.f32 %v982, 0.17677669
        %vm986 = vcmask 130048
        %v987 = vsel %vm986, %v984, -inf
        %988 = vmax.xlane.f32.xlu0 %v987
        %v989 = vpop.xlane.xlu0 %988
        %v990 = vsel %vm986, %v985, -inf
        %991 = vmax.xlane.f32.xlu0 %v990
        %v992 = vpop.xlane.xlu0 %991
        %v993 = vsub.f32 %v984, %v989
        %v994 = vsub.f32 %v985, %v992
        %v995 = vmul.f32 %v993, 1.442695
        %v996 = vpow.pop %v995
        %v997 = vmul.f32 %v994, 1.442695
        %v998 = vpow.pop %v997
        %v999 = vsel %vm986, %v996, 0.0
        %1000 = vadd.xlane.f32.xlu0 %v999
        %v1001 = vpop.xlane.xlu0 %1000
        %v1002 = vsel %vm986, %v998, 0.0
        %1003 = vadd.xlane.f32.xlu0 %v1002
        %v1004 = vpop.xlane.xlu0 %1003
        %v1005 = vrcp.pop %v1001
        %v1006 = vrcp.pop %v1004
        %v1007 = vmul.f32 %v996, %v1005
        %v1008 = vmul.f32 %v998, %v1006
        %1009 = vrot.lane.b32.xlu0 %v942, 64
        %v1010 = vpop.permute.xlu0 %1009
        %1011 = vrot.lane.b32.xlu0 %v945, 64
        %v1012 = vpop.permute.xlu0 %1011
        %v1016 = vsel %vm986, %v1007, 0
        %v1019 = vsel %vm986, %v1008, 0
        %1021 = vmatpush.msra.mxu0 0.0
        %1022 = vmatpush.msra.mxu0 0.0
        %1023 = vmatpush.msra.mxu0 0.0
        %1024 = vmatpush.msra.mxu0 0.0
        %1025 = vmatpush.msra.mxu0 0.0
        %1026 = vmatpush.msra.mxu0 0.0
        %1027 = vmatpush.msra.mxu0 0.0
        %1028 = vmatpush.msra.mxu0 0.0
        %1029 = vmatpush.msra.mxu0 0.0
        %1030 = vmatpush.msra.mxu0 0.0
        %1031 = vmatpush.msra.mxu0 0.0
        %1032 = vmatpush.msra.mxu0 0.0
        %1033 = vmatpush.msra.mxu0 0.0
        %1034 = vmatpush.msra.mxu0 0.0
        %1035 = vmatpush.msra.mxu0 %v1012
        %1036 = vmatpush.msra.mxu0 %v1010
        %1037 = vmatmul.f32.gmra.mxu0 %v1016
        %v1038 = vpop.f32.mrf.mxu0
        %v1039 = vadd.f32 0.0, %v1038
        %1040 = vmatmul.f32.gmra.mxu0 %v1019
        %v1041 = vpop.f32.mrf.mxu0
        %v1042 = vadd.f32 0.0, %v1041
        %1043 = vdwg.mxu0
        %v1044 = vadd.f32 %v942, %v1039
        %v1045 = vadd.f32 %v945, %v1042
        %1046 = vrot.lane.b32.xlu0 %v942, 120
        %v1047 = vpop.permute.xlu0 %1046
        %1048 = vrot.lane.b32.xlu0 %v945, 120
        %v1049 = vpop.permute.xlu0 %1048
        %1050 = vrot.lane.b32.xlu0 %v942, 88
        %v1051 = vpop.permute.xlu0 %1050
        %1052 = vrot.lane.b32.xlu0 %v945, 88
        %v1053 = vpop.permute.xlu0 %1052
        %v1054 = vsel %vm917, %v1047, 0
        %v1056 = vsel %vm917, %v1049, 0
        %v1058 = vsel %vm917, %v1051, 0
        %v1060 = vsel %vm917, %v1053, 0
        %1062 = vmatpush.xpose.msra.mxu0 0.0
        %1063 = vmatpush.xpose.msra.mxu0 0.0
        %1064 = vmatpush.xpose.msra.mxu0 0.0
        %1065 = vmatpush.xpose.msra.mxu0 0.0
        %1066 = vmatpush.xpose.msra.mxu0 0.0
        %1067 = vmatpush.xpose.msra.mxu0 0.0
        %1068 = vmatpush.xpose.msra.mxu0 0.0
        %1069 = vmatpush.xpose.msra.mxu0 0.0
        %1070 = vmatpush.xpose.msra.mxu0 0.0
        %1071 = vmatpush.xpose.msra.mxu0 0.0
        %1072 = vmatpush.xpose.msra.mxu0 0.0
        %1073 = vmatpush.xpose.msra.mxu0 0.0
        %1074 = vmatpush.xpose.msra.mxu0 0.0
        %1075 = vmatpush.xpose.msra.mxu0 0.0
        %1076 = vmatpush.xpose.msra.mxu0 %v1060
        %1077 = vmatpush.xpose.msra.mxu0 %v1058
        %1078 = vmatmul.f32.gmra.mxu0 %v1054
        %v1079 = vpop.f32.mrf.mxu0
        %v1080 = vadd.f32 0.0, %v1079
        %1081 = vmatmul.f32.gmra.mxu0 %v1056
        %v1082 = vpop.f32.mrf.mxu0
        %v1083 = vadd.f32 0.0, %v1082
        %1084 = vdwg.mxu0
        %v1085 = vmul.f32 %v1080, 0.17677669
        %v1086 = vmul.f32 %v1083, 0.17677669
        %v1087 = vsel %vm986, %v1085, -inf
        %1088 = vmax.xlane.f32.xlu0 %v1087
        %v1089 = vpop.xlane.xlu0 %1088
        %v1090 = vsel %vm986, %v1086, -inf
        %1091 = vmax.xlane.f32.xlu0 %v1090
        %v1092 = vpop.xlane.xlu0 %1091
        %v1093 = vsub.f32 %v1085, %v1089
        %v1094 = vsub.f32 %v1086, %v1092
        %v1095 = vmul.f32 %v1093, 1.442695
        %v1096 = vpow.pop %v1095
        %v1097 = vmul.f32 %v1094, 1.442695
        %v1098 = vpow.pop %v1097
        %v1099 = vsel %vm986, %v1096, 0.0
        %1100 = vadd.xlane.f32.xlu0 %v1099
        %v1101 = vpop.xlane.xlu0 %1100
        %v1102 = vsel %vm986, %v1098, 0.0
        %1103 = vadd.xlane.f32.xlu0 %v1102
        %v1104 = vpop.xlane.xlu0 %1103
        %v1105 = vrcp.pop %v1101
        %v1106 = vrcp.pop %v1104
        %v1107 = vmul.f32 %v1096, %v1105
        %v1108 = vmul.f32 %v1098, %v1106
        %1109 = vrot.lane.b32.xlu0 %v942, 56
        %v1110 = vpop.permute.xlu0 %1109
        %1111 = vrot.lane.b32.xlu0 %v945, 56
        %v1112 = vpop.permute.xlu0 %1111
        %v1116 = vsel %vm986, %v1107, 0
        %v1119 = vsel %vm986, %v1108, 0
        %1121 = vmatpush.msra.mxu0 0.0
        %1122 = vmatpush.msra.mxu0 0.0
        %1123 = vmatpush.msra.mxu0 0.0
        %1124 = vmatpush.msra.mxu0 0.0
        %1125 = vmatpush.msra.mxu0 0.0
        %1126 = vmatpush.msra.mxu0 0.0
        %1127 = vmatpush.msra.mxu0 0.0
        %1128 = vmatpush.msra.mxu0 0.0
        %1129 = vmatpush.msra.mxu0 0.0
        %1130 = vmatpush.msra.mxu0 0.0
        %1131 = vmatpush.msra.mxu0 0.0
        %1132 = vmatpush.msra.mxu0 0.0
        %1133 = vmatpush.msra.mxu0 0.0
        %1134 = vmatpush.msra.mxu0 0.0
        %1135 = vmatpush.msra.mxu0 %v1112
        %1136 = vmatpush.msra.mxu0 %v1110
        %1137 = vmatmul.f32.gmra.mxu0 %v1116
        %v1138 = vpop.f32.mrf.mxu0
        %v1139 = vadd.f32 0.0, %v1138
        %1140 = vmatmul.f32.gmra.mxu0 %v1119
        %v1141 = vpop.f32.mrf.mxu0
        %v1142 = vadd.f32 0.0, %v1141
        %1143 = vdwg.mxu0
        %1146 = vrot.lane.b32.xlu0 %v1139, 8
        %v1147 = vpop.permute.xlu0 %1146
        %1148 = vrot.lane.b32.xlu0 %v1142, 8
        %v1149 = vpop.permute.xlu0 %1148
        %v1152 = vadd.f32 %v942, %v1147
        %v1153 = vadd.f32 %v945, %v1149
        %1154 = vrot.lane.b32.xlu0 %v942, 112
        %v1155 = vpop.permute.xlu0 %1154
        %1156 = vrot.lane.b32.xlu0 %v945, 112
        %v1157 = vpop.permute.xlu0 %1156
        %1158 = vrot.lane.b32.xlu0 %v942, 80
        %v1159 = vpop.permute.xlu0 %1158
        %1160 = vrot.lane.b32.xlu0 %v945, 80
        %v1161 = vpop.permute.xlu0 %1160
        %v1162 = vsel %vm917, %v1155, 0
        %v1164 = vsel %vm917, %v1157, 0
        %v1166 = vsel %vm917, %v1159, 0
        %v1168 = vsel %vm917, %v1161, 0
        %1170 = vmatpush.xpose.msra.mxu0 0.0
        %1171 = vmatpush.xpose.msra.mxu0 0.0
        %1172 = vmatpush.xpose.msra.mxu0 0.0
        %1173 = vmatpush.xpose.msra.mxu0 0.0
        %1174 = vmatpush.xpose.msra.mxu0 0.0
        %1175 = vmatpush.xpose.msra.mxu0 0.0
        %1176 = vmatpush.xpose.msra.mxu0 0.0
        %1177 = vmatpush.xpose.msra.mxu0 0.0
        %1178 = vmatpush.xpose.msra.mxu0 0.0
        %1179 = vmatpush.xpose.msra.mxu0 0.0
        %1180 = vmatpush.xpose.msra.mxu0 0.0
        %1181 = vmatpush.xpose.msra.mxu0 0.0
        %1182 = vmatpush.xpose.msra.mxu0 0.0
        %1183 = vmatpush.xpose.msra.mxu0 0.0
        %1184 = vmatpush.xpose.msra.mxu0 %v1168
        %1185 = vmatpush.xpose.msra.mxu0 %v1166
        %1186 = vmatmul.f32.gmra.mxu0 %v1162
        %v1187 = vpop.f32.mrf.mxu0
        %v1188 = vadd.f32 0.0, %v1187
        %1189 = vmatmul.f32.gmra.mxu0 %v1164
        %v1190 = vpop.f32.mrf.mxu0
        %v1191 = vadd.f32 0.0, %v1190
        %1192 = vdwg.mxu0
        %v1193 = vmul.f32 %v1188, 0.17677669
        %v1194 = vmul.f32 %v1191, 0.17677669
        %v1195 = vsel %vm986, %v1193, -inf
        %1196 = vmax.xlane.f32.xlu0 %v1195
        %v1197 = vpop.xlane.xlu0 %1196
        %v1198 = vsel %vm986, %v1194, -inf
        %1199 = vmax.xlane.f32.xlu0 %v1198
        %v1200 = vpop.xlane.xlu0 %1199
        %v1201 = vsub.f32 %v1193, %v1197
        %v1202 = vsub.f32 %v1194, %v1200
        %v1203 = vmul.f32 %v1201, 1.442695
        %v1204 = vpow.pop %v1203
        %v1205 = vmul.f32 %v1202, 1.442695
        %v1206 = vpow.pop %v1205
        %v1207 = vsel %vm986, %v1204, 0.0
        %1208 = vadd.xlane.f32.xlu0 %v1207
        %v1209 = vpop.xlane.xlu0 %1208
        %v1210 = vsel %vm986, %v1206, 0.0
        %1211 = vadd.xlane.f32.xlu0 %v1210
        %v1212 = vpop.xlane.xlu0 %1211
        %v1213 = vrcp.pop %v1209
        %v1214 = vrcp.pop %v1212
        %v1215 = vmul.f32 %v1204, %v1213
        %v1216 = vmul.f32 %v1206, %v1214
        %1217 = vrot.lane.b32.xlu0 %v942, 48
        %v1218 = vpop.permute.xlu0 %1217
        %1219 = vrot.lane.b32.xlu0 %v945, 48
        %v1220 = vpop.permute.xlu0 %1219
        %v1224 = vsel %vm986, %v1215, 0
        %v1227 = vsel %vm986, %v1216, 0
        %1229 = vmatpush.msra.mxu0 0.0
        %1230 = vmatpush.msra.mxu0 0.0
        %1231 = vmatpush.msra.mxu0 0.0
        %1232 = vmatpush.msra.mxu0 0.0
        %1233 = vmatpush.msra.mxu0 0.0
        %1234 = vmatpush.msra.mxu0 0.0
        %1235 = vmatpush.msra.mxu0 0.0
        %1236 = vmatpush.msra.mxu0 0.0
        %1237 = vmatpush.msra.mxu0 0.0
        %1238 = vmatpush.msra.mxu0 0.0
        %1239 = vmatpush.msra.mxu0 0.0
        %1240 = vmatpush.msra.mxu0 0.0
        %1241 = vmatpush.msra.mxu0 0.0
        %1242 = vmatpush.msra.mxu0 0.0
        %1243 = vmatpush.msra.mxu0 %v1220
        %1244 = vmatpush.msra.mxu0 %v1218
        %1245 = vmatmul.f32.gmra.mxu0 %v1224
        %v1246 = vpop.f32.mrf.mxu0
        %v1247 = vadd.f32 0.0, %v1246
        %1248 = vmatmul.f32.gmra.mxu0 %v1227
        %v1249 = vpop.f32.mrf.mxu0
        %v1250 = vadd.f32 0.0, %v1249
        %1251 = vdwg.mxu0
        %1254 = vrot.lane.b32.xlu0 %v1247, 16
        %v1255 = vpop.permute.xlu0 %1254
        %1256 = vrot.lane.b32.xlu0 %v1250, 16
        %v1257 = vpop.permute.xlu0 %1256
        %v1260 = vadd.f32 %v942, %v1255
        %v1261 = vadd.f32 %v945, %v1257
        %1262 = vrot.lane.b32.xlu0 %v942, 104
        %v1263 = vpop.permute.xlu0 %1262
        %1264 = vrot.lane.b32.xlu0 %v945, 104
        %v1265 = vpop.permute.xlu0 %1264
        %1266 = vrot.lane.b32.xlu0 %v942, 72
        %v1267 = vpop.permute.xlu0 %1266
        %1268 = vrot.lane.b32.xlu0 %v945, 72
        %v1269 = vpop.permute.xlu0 %1268
        %v1270 = vsel %vm917, %v1263, 0
        %v1272 = vsel %vm917, %v1265, 0
        %v1274 = vsel %vm917, %v1267, 0
        %v1276 = vsel %vm917, %v1269, 0
        %1278 = vmatpush.xpose.msra.mxu0 0.0
        %1279 = vmatpush.xpose.msra.mxu0 0.0
        %1280 = vmatpush.xpose.msra.mxu0 0.0
        %1281 = vmatpush.xpose.msra.mxu0 0.0
        %1282 = vmatpush.xpose.msra.mxu0 0.0
        %1283 = vmatpush.xpose.msra.mxu0 0.0
        %1284 = vmatpush.xpose.msra.mxu0 0.0
        %1285 = vmatpush.xpose.msra.mxu0 0.0
        %1286 = vmatpush.xpose.msra.mxu0 0.0
        %1287 = vmatpush.xpose.msra.mxu0 0.0
        %1288 = vmatpush.xpose.msra.mxu0 0.0
        %1289 = vmatpush.xpose.msra.mxu0 0.0
        %1290 = vmatpush.xpose.msra.mxu0 0.0
        %1291 = vmatpush.xpose.msra.mxu0 0.0
        %1292 = vmatpush.xpose.msra.mxu0 %v1276
        %1293 = vmatpush.xpose.msra.mxu0 %v1274
        %1294 = vmatmul.f32.gmra.mxu0 %v1270
        %v1295 = vpop.f32.mrf.mxu0
        %v1296 = vadd.f32 0.0, %v1295
        %1297 = vmatmul.f32.gmra.mxu0 %v1272
        %v1298 = vpop.f32.mrf.mxu0
        %v1299 = vadd.f32 0.0, %v1298
        %1300 = vdwg.mxu0
        %v1301 = vmul.f32 %v1296, 0.17677669
        %v1302 = vmul.f32 %v1299, 0.17677669
        %v1303 = vsel %vm986, %v1301, -inf
        %1304 = vmax.xlane.f32.xlu0 %v1303
        %v1305 = vpop.xlane.xlu0 %1304
        %v1306 = vsel %vm986, %v1302, -inf
        %1307 = vmax.xlane.f32.xlu0 %v1306
        %v1308 = vpop.xlane.xlu0 %1307
        %v1309 = vsub.f32 %v1301, %v1305
        %v1310 = vsub.f32 %v1302, %v1308
        %v1311 = vmul.f32 %v1309, 1.442695
        %v1312 = vpow.pop %v1311
        %v1313 = vmul.f32 %v1310, 1.442695
        %v1314 = vpow.pop %v1313
        %v1315 = vsel %vm986, %v1312, 0.0
        %1316 = vadd.xlane.f32.xlu0 %v1315
        %v1317 = vpop.xlane.xlu0 %1316
        %v1318 = vsel %vm986, %v1314, 0.0
        %1319 = vadd.xlane.f32.xlu0 %v1318
        %v1320 = vpop.xlane.xlu0 %1319
        %v1321 = vrcp.pop %v1317
        %v1322 = vrcp.pop %v1320
        %v1323 = vmul.f32 %v1312, %v1321
        %v1324 = vmul.f32 %v1314, %v1322
        %1325 = vrot.lane.b32.xlu0 %v942, 40
        %v1326 = vpop.permute.xlu0 %1325
        %1327 = vrot.lane.b32.xlu0 %v945, 40
        %v1328 = vpop.permute.xlu0 %1327
        %v1332 = vsel %vm986, %v1323, 0
        %v1335 = vsel %vm986, %v1324, 0
        %1337 = vmatpush.msra.mxu0 0.0
        %1338 = vmatpush.msra.mxu0 0.0
        %1339 = vmatpush.msra.mxu0 0.0
        %1340 = vmatpush.msra.mxu0 0.0
        %1341 = vmatpush.msra.mxu0 0.0
        %1342 = vmatpush.msra.mxu0 0.0
        %1343 = vmatpush.msra.mxu0 0.0
        %1344 = vmatpush.msra.mxu0 0.0
        %1345 = vmatpush.msra.mxu0 0.0
        %1346 = vmatpush.msra.mxu0 0.0
        %1347 = vmatpush.msra.mxu0 0.0
        %1348 = vmatpush.msra.mxu0 0.0
        %1349 = vmatpush.msra.mxu0 0.0
        %1350 = vmatpush.msra.mxu0 0.0
        %1351 = vmatpush.msra.mxu0 %v1328
        %1352 = vmatpush.msra.mxu0 %v1326
        %1353 = vmatmul.f32.gmra.mxu0 %v1332
        %v1354 = vpop.f32.mrf.mxu0
        %v1355 = vadd.f32 0.0, %v1354
        %1356 = vmatmul.f32.gmra.mxu0 %v1335
        %v1357 = vpop.f32.mrf.mxu0
        %v1358 = vadd.f32 0.0, %v1357
        %1359 = vdwg.mxu0
        %1362 = vrot.lane.b32.xlu0 %v1355, 24
        %v1363 = vpop.permute.xlu0 %1362
        %1364 = vrot.lane.b32.xlu0 %v1358, 24
        %v1365 = vpop.permute.xlu0 %1364
        %v1368 = vadd.f32 %v942, %v1363
        %v1369 = vadd.f32 %v945, %v1365
        %v1370 = vsel %vm917, %v1044, %v1152
        %v1371 = vsel %vm917, %v1045, %v1153
        %v1372 = vsel %vm986, %v1370, %v1260
        %v1373 = vsel %vm986, %v1371, %v1261
        %vm1374 = vcmask 195584
        %v1375 = vsel %vm1374, %v1372, %v1368
        %v1376 = vsel %vm1374, %v1373, %v1369
        %v1377 = vld [vmem:[%s4] sm:$0xff]
        %v1378 = vld [vmem:[%s4 + $0x8] sm:$0xff]
        %v1379 = vld [vmem:[%s4 + $0x10] sm:$0xff]
        %v1380 = vld [vmem:[%s4 + $0x18] sm:$0xff]
        %v1381 = vld [vmem:[#allocation8] sm:$0x1]
        %v1383 = vperm.slane %v1381, 0
        %vm1385 = vcmask 261120
        %v1387 = vsel %vm1385, %v1375, 0
        %v1390 = vsel %vm1385, %v1376, 0
        %1392 = vmatpush.msra.mxu0 0.0
        %1393 = vmatpush.msra.mxu0 0.0
        %1394 = vmatpush.msra.mxu0 0.0
        %1395 = vmatpush.msra.mxu0 0.0
        %1396 = vmatpush.msra.mxu0 0.0
        %1397 = vmatpush.msra.mxu0 0.0
        %1398 = vmatpush.msra.mxu0 0.0
        %1399 = vmatpush.msra.mxu0 0.0
        %1400 = vmatpush.msra.mxu0 0.0
        %1401 = vmatpush.msra.mxu0 0.0
        %1402 = vmatpush.msra.mxu0 0.0
        %1403 = vmatpush.msra.mxu0 0.0
        %1404 = vmatpush.msra.mxu0 %v1380
        %1405 = vmatpush.msra.mxu0 %v1379
        %1406 = vmatpush.msra.mxu0 %v1378
        %1407 = vmatpush.msra.mxu0 %v1377
        %1408 = vmatmul.f32.gmra.mxu0 %v1387
        %v1409 = vpop.f32.mrf.mxu0
        %v1410 = vadd.f32 %v1383, %v1409
        %1411 = vmatmul.f32.gmra.mxu0 %v1390
        %v1412 = vpop.f32.mrf.mxu0
        %v1413 = vadd.f32 %v1383, %v1412
        %1414 = vdwg.mxu0
        %v1415 = vmax.f32 %v1410, 0.0
        %v1416 = vmax.f32 %v1413, 0.0
        %v1417 = vadd.f32 %v1375, %v1415
        %v1418 = vadd.f32 %v1376, %v1416
        %v1419 = vld [vmem:[%s6] sm:$0xff]
        %v1420 = vld [vmem:[%s6 + $0x8] sm:$0xff]
        %v1421 = vld [vmem:[%s6 + $0x10] sm:$0xff]
        %v1422 = vld [vmem:[%s6 + $0x18] sm:$0xff]
        %v1423 = vld [vmem:[#allocation10] sm:$0x1]
        %v1425 = vperm.slane %v1423, 0
        %v1428 = vsel %vm1385, %v1417, 0
        %v1431 = vsel %vm1385, %v1418, 0
        %1433 = vmatpush.msra.mxu0 0.0
        %1434 = vmatpush.msra.mxu0 0.0
        %1435 = vmatpush.msra.mxu0 0.0
        %1436 = vmatpush.msra.mxu0 0.0
        %1437 = vmatpush.msra.mxu0 0.0
        %1438 = vmatpush.msra.mxu0 0.0
        %1439 = vmatpush.msra.mxu0 0.0
        %1440 = vmatpush.msra.mxu0 0.0
        %1441 = vmatpush.msra.mxu0 0.0
        %1442 = vmatpush.msra.mxu0 0.0
        %1443 = vmatpush.msra.mxu0 0.0
        %1444 = vmatpush.msra.mxu0 0.0
        %1445 = vmatpush.msra.mxu0 %v1422
        %1446 = vmatpush.msra.mxu0 %v1421
        %1447 = vmatpush.msra.mxu0 %v1420
        %1448 = vmatpush.msra.mxu0 %v1419
        %1449 = vmatmul.f32.gmra.mxu0 %v1428
        %v1450 = vpop.f32.mrf.mxu0
        %v1451 = vadd.f32 %v1425, %v1450
        %1452 = vmatmul.f32.gmra.mxu0 %v1431
        %v1453 = vpop.f32.mrf.mxu0
        %v1454 = vadd.f32 %v1425, %v1453
        %1455 = vdwg.mxu0
        %1458 = vrot.lane.b32.xlu0 %v1451, 96
        %v1459 = vpop.permute.xlu0 %1458
        %1460 = vrot.lane.b32.xlu0 %v1454, 96
        %v1461 = vpop.permute.xlu0 %1460
        %v1462 = vsel %vm917, %v1451, 0
        %v1464 = vsel %vm917, %v1454, 0
        %v1466 = vsel %vm917, %v1459, 0
        %v1468 = vsel %vm917, %v1461, 0
        %1470 = vmatpush.xpose.msra.mxu0 0.0
        %1471 = vmatpush.xpose.msra.mxu0 0.0
        %1472 = vmatpush.xpose.msra.mxu0 0.0
        %1473 = vmatpush.xpose.msra.mxu0 0.0
        %1474 = vmatpush.xpose.msra.mxu0 0.0
        %1475 = vmatpush.xpose.msra.mxu0 0.0
        %1476 = vmatpush.xpose.msra.mxu0 0.0
        %1477 = vmatpush.xpose.msra.mxu0 0.0
        %1478 = vmatpush.xpose.msra.mxu0 0.0
        %1479 = vmatpush.xpose.msra.mxu0 0.0
        %1480 = vmatpush.xpose.msra.mxu0 0.0
        %1481 = vmatpush.xpose.msra.mxu0 0.0
        %1482 = vmatpush.xpose.msra.mxu0 0.0
        %1483 = vmatpush.xpose.msra.mxu0 0.0
        %1484 = vmatpush.xpose.msra.mxu0 %v1468
        %1485 = vmatpush.xpose.msra.mxu0 %v1466
        %1486 = vmatmul.f32.gmra.mxu0 %v1462
        %v1487 = vpop.f32.mrf.mxu0
        %v1488 = vadd.f32 0.0, %v1487
        %1489 = vmatmul.f32.gmra.mxu0 %v1464
        %v1490 = vpop.f32.mrf.mxu0
        %v1491 = vadd.f32 0.0, %v1490
        %1492 = vdwg.mxu0
        %v1493 = vmul.f32 %v1488, 0.17677669
        %v1494 = vmul.f32 %v1491, 0.17677669
        %v1495 = vsel %vm986, %v1493, -inf
        %1496 = vmax.xlane.f32.xlu0 %v1495
        %v1497 = vpop.xlane.xlu0 %1496
        %v1498 = vsel %vm986, %v1494, -inf
        %1499 = vmax.xlane.f32.xlu0 %v1498
        %v1500 = vpop.xlane.xlu0 %1499
        %v1501 = vsub.f32 %v1493, %v1497
        %v1502 = vsub.f32 %v1494, %v1500
        %v1503 = vmul.f32 %v1501, 1.442695
        %v1504 = vpow.pop %v1503
        %v1505 = vmul.f32 %v1502, 1.442695
        %v1506 = vpow.pop %v1505
        %v1507 = vsel %vm986, %v1504, 0.0
        %1508 = vadd.xlane.f32.xlu0 %v1507
        %v1509 = vpop.xlane.xlu0 %1508
        %v1510 = vsel %vm986, %v1506, 0.0
        %1511 = vadd.xlane.f32.xlu0 %v1510
        %v1512 = vpop.xlane.xlu0 %1511
        %v1513 = vrcp.pop %v1509
        %v1514 = vrcp.pop %v1512
        %v1515 = vmul.f32 %v1504, %v1513
        %v1516 = vmul.f32 %v1506, %v1514
        %1517 = vrot.lane.b32.xlu0 %v1451, 64
        %v1518 = vpop.permute.xlu0 %1517
        %1519 = vrot.lane.b32.xlu0 %v1454, 64
        %v1520 = vpop.permute.xlu0 %1519
        %v1524 = vsel %vm986, %v1515, 0
        %v1527 = vsel %vm986, %v1516, 0
        %1529 = vmatpush.msra.mxu0 0.0
        %1530 = vmatpush.msra.mxu0 0.0
        %1531 = vmatpush.msra.mxu0 0.0
        %1532 = vmatpush.msra.mxu0 0.0
        %1533 = vmatpush.msra.mxu0 0.0
        %1534 = vmatpush.msra.mxu0 0.0
        %1535 = vmatpush.msra.mxu0 0.0
        %1536 = vmatpush.msra.mxu0 0.0
        %1537 = vmatpush.msra.mxu0 0.0
        %1538 = vmatpush.msra.mxu0 0.0
        %1539 = vmatpush.msra.mxu0 0.0
        %1540 = vmatpush.msra.mxu0 0.0
        %1541 = vmatpush.msra.mxu0 0.0
        %1542 = vmatpush.msra.mxu0 0.0
        %1543 = vmatpush.msra.mxu0 %v1520
        %1544 = vmatpush.msra.mxu0 %v1518
        %1545 = vmatmul.f32.gmra.mxu0 %v1524
        %v1546 = vpop.f32.mrf.mxu0
        %v1547 = vadd.f32 0.0, %v1546
        %1548 = vmatmul.f32.gmra.mxu0 %v1527
        %v1549 = vpop.f32.mrf.mxu0
        %v1550 = vadd.f32 0.0, %v1549
        %1551 = vdwg.mxu0
        %v1552 = vadd.f32 %v1451, %v1547
        %v1553 = vadd.f32 %v1454, %v1550
        %1554 = vrot.lane.b32.xlu0 %v1451, 120
        %v1555 = vpop.permute.xlu0 %1554
        %1556 = vrot.lane.b32.xlu0 %v1454, 120
        %v1557 = vpop.permute.xlu0 %1556
        %1558 = vrot.lane.b32.xlu0 %v1451, 88
        %v1559 = vpop.permute.xlu0 %1558
        %1560 = vrot.lane.b32.xlu0 %v1454, 88
        %v1561 = vpop.permute.xlu0 %1560
        %v1562 = vsel %vm917, %v1555, 0
        %v1564 = vsel %vm917, %v1557, 0
        %v1566 = vsel %vm917, %v1559, 0
        %v1568 = vsel %vm917, %v1561, 0
        %1570 = vmatpush.xpose.msra.mxu0 0.0
        %1571 = vmatpush.xpose.msra.mxu0 0.0
        %1572 = vmatpush.xpose.msra.mxu0 0.0
        %1573 = vmatpush.xpose.msra.mxu0 0.0
        %1574 = vmatpush.xpose.msra.mxu0 0.0
        %1575 = vmatpush.xpose.msra.mxu0 0.0
        %1576 = vmatpush.xpose.msra.mxu0 0.0
        %1577 = vmatpush.xpose.msra.mxu0 0.0
        %1578 = vmatpush.xpose.msra.mxu0 0.0
        %1579 = vmatpush.xpose.msra.mxu0 0.0
        %1580 = vmatpush.xpose.msra.mxu0 0.0
        %1581 = vmatpush.xpose.msra.mxu0 0.0
        %1582 = vmatpush.xpose.msra.mxu0 0.0
        %1583 = vmatpush.xpose.msra.mxu0 0.0
        %1584 = vmatpush.xpose.msra.mxu0 %v1568
        %1585 = vmatpush.xpose.msra.mxu0 %v1566
        %1586 = vmatmul.f32.gmra.mxu0 %v1562
        %v1587 = vpop.f32.mrf.mxu0
        %v1588 = vadd.f32 0.0, %v1587
        %1589 = vmatmul.f32.gmra.mxu0 %v1564
        %v1590 = vpop.f32.mrf.mxu0
        %v1591 = vadd.f32 0.0, %v1590
        %1592 = vdwg.mxu0
        %v1593 = vmul.f32 %v1588, 0.17677669
        %v1594 = vmul.f32 %v1591, 0.17677669
        %v1595 = vsel %vm986, %v1593, -inf
        %1596 = vmax.xlane.f32.xlu0 %v1595
        %v1597 = vpop.xlane.xlu0 %1596
        %v1598 = vsel %vm986, %v1594, -inf
        %1599 = vmax.xlane.f32.xlu0 %v1598
        %v1600 = vpop.xlane.xlu0 %1599
        %v1601 = vsub.f32 %v1593, %v1597
        %v1602 = vsub.f32 %v1594, %v1600
        %v1603 = vmul.f32 %v1601, 1.442695
        %v1604 = vpow.pop %v1603
        %v1605 = vmul.f32 %v1602, 1.442695
        %v1606 = vpow.pop %v1605
        %v1607 = vsel %vm986, %v1604, 0.0
        %1608 = vadd.xlane.f32.xlu0 %v1607
        %v1609 = vpop.xlane.xlu0 %1608
        %v1610 = vsel %vm986, %v1606, 0.0
        %1611 = vadd.xlane.f32.xlu0 %v1610
        %v1612 = vpop.xlane.xlu0 %1611
        %v1613 = vrcp.pop %v1609
        %v1614 = vrcp.pop %v1612
        %v1615 = vmul.f32 %v1604, %v1613
        %v1616 = vmul.f32 %v1606, %v1614
        %1617 = vrot.lane.b32.xlu0 %v1451, 56
        %v1618 = vpop.permute.xlu0 %1617
        %1619 = vrot.lane.b32.xlu0 %v1454, 56
        %v1620 = vpop.permute.xlu0 %1619
        %v1624 = vsel %vm986, %v1615, 0
        %v1627 = vsel %vm986, %v1616, 0
        %1629 = vmatpush.msra.mxu0 0.0
        %1630 = vmatpush.msra.mxu0 0.0
        %1631 = vmatpush.msra.mxu0 0.0
        %1632 = vmatpush.msra.mxu0 0.0
        %1633 = vmatpush.msra.mxu0 0.0
        %1634 = vmatpush.msra.mxu0 0.0
        %1635 = vmatpush.msra.mxu0 0.0
        %1636 = vmatpush.msra.mxu0 0.0
        %1637 = vmatpush.msra.mxu0 0.0
        %1638 = vmatpush.msra.mxu0 0.0
        %1639 = vmatpush.msra.mxu0 0.0
        %1640 = vmatpush.msra.mxu0 0.0
        %1641 = vmatpush.msra.mxu0 0.0
        %1642 = vmatpush.msra.mxu0 0.0
        %1643 = vmatpush.msra.mxu0 %v1620
        %1644 = vmatpush.msra.mxu0 %v1618
        %1645 = vmatmul.f32.gmra.mxu0 %v1624
        %v1646 = vpop.f32.mrf.mxu0
        %v1647 = vadd.f32 0.0, %v1646
        %1648 = vmatmul.f32.gmra.mxu0 %v1627
        %v1649 = vpop.f32.mrf.mxu0
        %v1650 = vadd.f32 0.0, %v1649
        %1651 = vdwg.mxu0
        %1654 = vrot.lane.b32.xlu0 %v1647, 8
        %v1655 = vpop.permute.xlu0 %1654
        %1656 = vrot.lane.b32.xlu0 %v1650, 8
        %v1657 = vpop.permute.xlu0 %1656
        %v1660 = vadd.f32 %v1451, %v1655
        %v1661 = vadd.f32 %v1454, %v1657
        %1662 = vrot.lane.b32.xlu0 %v1451, 112
        %v1663 = vpop.permute.xlu0 %1662
        %1664 = vrot.lane.b32.xlu0 %v1454, 112
        %v1665 = vpop.permute.xlu0 %1664
        %1666 = vrot.lane.b32.xlu0 %v1451, 80
        %v1667 = vpop.permute.xlu0 %1666
        %1668 = vrot.lane.b32.xlu0 %v1454, 80
        %v1669 = vpop.permute.xlu0 %1668
        %v1670 = vsel %vm917, %v1663, 0
        %v1672 = vsel %vm917, %v1665, 0
        %v1674 = vsel %vm917, %v1667, 0
        %v1676 = vsel %vm917, %v1669, 0
        %1678 = vmatpush.xpose.msra.mxu0 0.0
        %1679 = vmatpush.xpose.msra.mxu0 0.0
        %1680 = vmatpush.xpose.msra.mxu0 0.0
        %1681 = vmatpush.xpose.msra.mxu0 0.0
        %1682 = vmatpush.xpose.msra.mxu0 0.0
        %1683 = vmatpush.xpose.msra.mxu0 0.0
        %1684 = vmatpush.xpose.msra.mxu0 0.0
        %1685 = vmatpush.xpose.msra.mxu0 0.0
        %1686 = vmatpush.xpose.msra.mxu0 0.0
        %1687 = vmatpush.xpose.msra.mxu0 0.0
        %1688 = vmatpush.xpose.msra.mxu0 0.0
        %1689 = vmatpush.xpose.msra.mxu0 0.0
        %1690 = vmatpush.xpose.msra.mxu0 0.0
        %1691 = vmatpush.xpose.msra.mxu0 0.0
        %1692 = vmatpush.xpose.msra.mxu0 %v1676
        %1693 = vmatpush.xpose.msra.mxu0 %v1674
        %1694 = vmatmul.f32.gmra.mxu0 %v1670
        %v1695 = vpop.f32.mrf.mxu0
        %v1696 = vadd.f32 0.0, %v1695
        %1697 = vmatmul.f32.gmra.mxu0 %v1672
        %v1698 = vpop.f32.mrf.mxu0
        %v1699 = vadd.f32 0.0, %v1698
        %1700 = vdwg.mxu0
        %v1701 = vmul.f32 %v1696, 0.17677669
        %v1702 = vmul.f32 %v1699, 0.17677669
        %v1703 = vsel %vm986, %v1701, -inf
        %1704 = vmax.xlane.f32.xlu0 %v1703
        %v1705 = vpop.xlane.xlu0 %1704
        %v1706 = vsel %vm986, %v1702, -inf
        %1707 = vmax.xlane.f32.xlu0 %v1706
        %v1708 = vpop.xlane.xlu0 %1707
        %v1709 = vsub.f32 %v1701, %v1705
        %v1710 = vsub.f32 %v1702, %v1708
        %v1711 = vmul.f32 %v1709, 1.442695
        %v1712 = vpow.pop %v1711
        %v1713 = vmul.f32 %v1710, 1.442695
        %v1714 = vpow.pop %v1713
        %v1715 = vsel %vm986, %v1712, 0.0
        %1716 = vadd.xlane.f32.xlu0 %v1715
        %v1717 = vpop.xlane.xlu0 %1716
        %v1718 = vsel %vm986, %v1714, 0.0
        %1719 = vadd.xlane.f32.xlu0 %v1718
        %v1720 = vpop.xlane.xlu0 %1719
        %v1721 = vrcp.pop %v1717
        %v1722 = vrcp.pop %v1720
        %v1723 = vmul.f32 %v1712, %v1721
        %v1724 = vmul.f32 %v1714, %v1722
        %1725 = vrot.lane.b32.xlu0 %v1451, 48
        %v1726 = vpop.permute.xlu0 %1725
        %1727 = vrot.lane.b32.xlu0 %v1454, 48
        %v1728 = vpop.permute.xlu0 %1727
        %v1732 = vsel %vm986, %v1723, 0
        %v1735 = vsel %vm986, %v1724, 0
        %1737 = vmatpush.msra.mxu0 0.0
        %1738 = vmatpush.msra.mxu0 0.0
        %1739 = vmatpush.msra.mxu0 0.0
        %1740 = vmatpush.msra.mxu0 0.0
        %1741 = vmatpush.msra.mxu0 0.0
        %1742 = vmatpush.msra.mxu0 0.0
        %1743 = vmatpush.msra.mxu0 0.0
        %1744 = vmatpush.msra.mxu0 0.0
        %1745 = vmatpush.msra.mxu0 0.0
        %1746 = vmatpush.msra.mxu0 0.0
        %1747 = vmatpush.msra.mxu0 0.0
        %1748 = vmatpush.msra.mxu0 0.0
        %1749 = vmatpush.msra.mxu0 0.0
        %1750 = vmatpush.msra.mxu0 0.0
        %1751 = vmatpush.msra.mxu0 %v1728
        %1752 = vmatpush.msra.mxu0 %v1726
        %1753 = vmatmul.f32.gmra.mxu0 %v1732
        %v1754 = vpop.f32.mrf.mxu0
        %v1755 = vadd.f32 0.0, %v1754
        %1756 = vmatmul.f32.gmra.mxu0 %v1735
        %v1757 = vpop.f32.mrf.mxu0
        %v1758 = vadd.f32 0.0, %v1757
        %1759 = vdwg.mxu0
        %1762 = vrot.lane.b32.xlu0 %v1755, 16
        %v1763 = vpop.permute.xlu0 %1762
        %1764 = vrot.lane.b32.xlu0 %v1758, 16
        %v1765 = vpop.permute.xlu0 %1764
        %v1768 = vadd.f32 %v1451, %v1763
        %v1769 = vadd.f32 %v1454, %v1765
        %1770 = vrot.lane.b32.xlu0 %v1451, 104
        %v1771 = vpop.permute.xlu0 %1770
        %1772 = vrot.lane.b32.xlu0 %v1454, 104
        %v1773 = vpop.permute.xlu0 %1772
        %1774 = vrot.lane.b32.xlu0 %v1451, 72
        %v1775 = vpop.permute.xlu0 %1774
        %1776 = vrot.lane.b32.xlu0 %v1454, 72
        %v1777 = vpop.permute.xlu0 %1776
        %v1778 = vsel %vm917, %v1771, 0
        %v1780 = vsel %vm917, %v1773, 0
        %v1782 = vsel %vm917, %v1775, 0
        %v1784 = vsel %vm917, %v1777, 0
        %1786 = vmatpush.xpose.msra.mxu0 0.0
        %1787 = vmatpush.xpose.msra.mxu0 0.0
        %1788 = vmatpush.xpose.msra.mxu0 0.0
        %1789 = vmatpush.xpose.msra.mxu0 0.0
        %1790 = vmatpush.xpose.msra.mxu0 0.0
        %1791 = vmatpush.xpose.msra.mxu0 0.0
        %1792 = vmatpush.xpose.msra.mxu0 0.0
        %1793 = vmatpush.xpose.msra.mxu0 0.0
        %1794 = vmatpush.xpose.msra.mxu0 0.0
        %1795 = vmatpush.xpose.msra.mxu0 0.0
        %1796 = vmatpush.xpose.msra.mxu0 0.0
        %1797 = vmatpush.xpose.msra.mxu0 0.0
        %1798 = vmatpush.xpose.msra.mxu0 0.0
        %1799 = vmatpush.xpose.msra.mxu0 0.0
        %1800 = vmatpush.xpose.msra.mxu0 %v1784
        %1801 = vmatpush.xpose.msra.mxu0 %v1782
        %1802 = vmatmul.f32.gmra.mxu0 %v1778
        %v1803 = vpop.f32.mrf.mxu0
        %v1804 = vadd.f32 0.0, %v1803
        %1805 = vmatmul.f32.gmra.mxu0 %v1780
        %v1806 = vpop.f32.mrf.mxu0
        %v1807 = vadd.f32 0.0, %v1806
        %1808 = vdwg.mxu0
        %v1809 = vmul.f32 %v1804, 0.17677669
        %v1810 = vmul.f32 %v1807, 0.17677669
        %v1811 = vsel %vm986, %v1809, -inf
        %1812 = vmax.xlane.f32.xlu0 %v1811
        %v1813 = vpop.xlane.xlu0 %1812
        %v1814 = vsel %vm986, %v1810, -inf
        %1815 = vmax.xlane.f32.xlu0 %v1814
        %v1816 = vpop.xlane.xlu0 %1815
        %v1817 = vsub.f32 %v1809, %v1813
        %v1818 = vsub.f32 %v1810, %v1816
        %v1819 = vmul.f32 %v1817, 1.442695
        %v1820 = vpow.pop %v1819
        %v1821 = vmul.f32 %v1818, 1.442695
        %v1822 = vpow.pop %v1821
        %v1823 = vsel %vm986, %v1820, 0.0
        %1824 = vadd.xlane.f32.xlu0 %v1823
        %v1825 = vpop.xlane.xlu0 %1824
        %v1826 = vsel %vm986, %v1822, 0.0
        %1827 = vadd.xlane.f32.xlu0 %v1826
        %v1828 = vpop.xlane.xlu0 %1827
        %v1829 = vrcp.pop %v1825
        %v1830 = vrcp.pop %v1828
        %v1831 = vmul.f32 %v1820, %v1829
        %v1832 = vmul.f32 %v1822, %v1830
        %1833 = vrot.lane.b32.xlu0 %v1451, 40
        %v1834 = vpop.permute.xlu0 %1833
        %1835 = vrot.lane.b32.xlu0 %v1454, 40
        %v1836 = vpop.permute.xlu0 %1835
        %v1840 = vsel %vm986, %v1831, 0
        %v1843 = vsel %vm986, %v1832, 0
        %1845 = vmatpush.msra.mxu0 0.0
        %1846 = vmatpush.msra.mxu0 0.0
        %1847 = vmatpush.msra.mxu0 0.0
        %1848 = vmatpush.msra.mxu0 0.0
        %1849 = vmatpush.msra.mxu0 0.0
        %1850 = vmatpush.msra.mxu0 0.0
        %1851 = vmatpush.msra.mxu0 0.0
        %1852 = vmatpush.msra.mxu0 0.0
        %1853 = vmatpush.msra.mxu0 0.0
        %1854 = vmatpush.msra.mxu0 0.0
        %1855 = vmatpush.msra.mxu0 0.0
        %1856 = vmatpush.msra.mxu0 0.0
        %1857 = vmatpush.msra.mxu0 0.0
        %1858 = vmatpush.msra.mxu0 0.0
        %1859 = vmatpush.msra.mxu0 %v1836
        %1860 = vmatpush.msra.mxu0 %v1834
        %1861 = vmatmul.f32.gmra.mxu0 %v1840
        %v1862 = vpop.f32.mrf.mxu0
        %v1863 = vadd.f32 0.0, %v1862
        %1864 = vmatmul.f32.gmra.mxu0 %v1843
        %v1865 = vpop.f32.mrf.mxu0
        %v1866 = vadd.f32 0.0, %v1865
        %1867 = vdwg.mxu0
        %1870 = vrot.lane.b32.xlu0 %v1863, 24
        %v1871 = vpop.permute.xlu0 %1870
        %1872 = vrot.lane.b32.xlu0 %v1866, 24
        %v1873 = vpop.permute.xlu0 %1872
        %v1876 = vadd.f32 %v1451, %v1871
        %v1877 = vadd.f32 %v1454, %v1873
        %v1878 = vsel %vm917, %v1552, %v1660
        %v1879 = vsel %vm917, %v1553, %v1661
        %v1880 = vsel %vm986, %v1878, %v1768
        %v1881 = vsel %vm986, %v1879, %v1769
        %v1882 = vsel %vm1374, %v1880, %v1876
        %v1883 = vsel %vm1374, %v1881, %v1877
        %v1884 = vld [vmem:[#allocation11] sm:$0xff]
        %v1885 = vld [vmem:[#allocation11 + $0x8] sm:$0xff]
        %v1886 = vld [vmem:[#allocation11 + $0x10] sm:$0xff]
        %v1887 = vld [vmem:[#allocation11 + $0x18] sm:$0xff]
        %v1888 = vld [vmem:[#allocation13] sm:$0x1]
        %v1890 = vperm.slane %v1888, 0
        %v1893 = vsel %vm1385, %v1882, 0
        %v1896 = vsel %vm1385, %v1883, 0
        %1898 = vmatpush.msra.mxu0 0.0
        %1899 = vmatpush.msra.mxu0 0.0
        %1900 = vmatpush.msra.mxu0 0.0
        %1901 = vmatpush.msra.mxu0 0.0
        %1902 = vmatpush.msra.mxu0 0.0
        %1903 = vmatpush.msra.mxu0 0.0
        %1904 = vmatpush.msra.mxu0 0.0
        %1905 = vmatpush.msra.mxu0 0.0
        %1906 = vmatpush.msra.mxu0 0.0
        %1907 = vmatpush.msra.mxu0 0.0
        %1908 = vmatpush.msra.mxu0 0.0
        %1909 = vmatpush.msra.mxu0 0.0
        %1910 = vmatpush.msra.mxu0 %v1887
        %1911 = vmatpush.msra.mxu0 %v1886
        %1912 = vmatpush.msra.mxu0 %v1885
        %1913 = vmatpush.msra.mxu0 %v1884
        %1914 = vmatmul.f32.gmra.mxu0 %v1893
        %v1915 = vpop.f32.mrf.mxu0
        %v1916 = vadd.f32 %v1890, %v1915
        %1917 = vmatmul.f32.gmra.mxu0 %v1896
        %v1918 = vpop.f32.mrf.mxu0
        %v1919 = vadd.f32 %v1890, %v1918
        %1920 = vdwg.mxu0
        %v1921 = vmax.f32 %v1916, 0.0
        %v1922 = vmax.f32 %v1919, 0.0
        %v1923 = vadd.f32 %v1882, %v1921
        %v1924 = vadd.f32 %v1883, %v1922
        %v1925 = vld [vmem:[#allocation2] sm:$0x3]
        %v1926 = vld [vmem:[#allocation14] sm:$0xff]
        %v1927 = vld [vmem:[#allocation14 + $0x8] sm:$0xff]
        %v1928 = vld [vmem:[#allocation14 + $0x10] sm:$0xff]
        %v1929 = vld [vmem:[#allocation14 + $0x18] sm:$0xff]
        %v1930 = vld [vmem:[#allocation16] sm:$0x1]
        %v1932 = vperm.slane %v1930, 0
        %v1935 = vsel %vm1385, %v1925, 0
        %1937 = vmatpush.msra.mxu0 0.0
        %1938 = vmatpush.msra.mxu0 0.0
        %1939 = vmatpush.msra.mxu0 0.0
        %1940 = vmatpush.msra.mxu0 0.0
        %1941 = vmatpush.msra.mxu0 0.0
        %1942 = vmatpush.msra.mxu0 0.0
        %1943 = vmatpush.msra.mxu0 0.0
        %1944 = vmatpush.msra.mxu0 0.0
        %1945 = vmatpush.msra.mxu0 0.0
        %1946 = vmatpush.msra.mxu0 0.0
        %1947 = vmatpush.msra.mxu0 0.0
        %1948 = vmatpush.msra.mxu0 0.0
        %1949 = vmatpush.msra.mxu0 %v1929
        %1950 = vmatpush.msra.mxu0 %v1928
        %1951 = vmatpush.msra.mxu0 %v1927
        %1952 = vmatpush.msra.mxu0 %v1926
        %1953 = vmatmul.f32.gmra.mxu0 %v1935
        %v1954 = vpop.f32.mrf.mxu0
        %v1955 = vadd.f32 %v1932, %v1954
        %1956 = vdwg.mxu0
        %v1957 = vld [vmem:[#allocation17] sm:$0xff]
        %v1958 = vld [vmem:[#allocation17 + $0x8] sm:$0xff]
        %v1959 = vld [vmem:[#allocation17 + $0x10] sm:$0xff]
        %v1960 = vld [vmem:[#allocation17 + $0x18] sm:$0xff]
        %v1961 = vld [vmem:[#allocation19] sm:$0x1]
        %v1963 = vperm.slane %v1961, 0
        %v1966 = vsel %vm1385, %v1923, 0
        %v1969 = vsel %vm1385, %v1924, 0
        %1971 = vmatpush.msra.mxu0 0.0
        %1972 = vmatpush.msra.mxu0 0.0
        %1973 = vmatpush.msra.mxu0 0.0
        %1974 = vmatpush.msra.mxu0 0.0
        %1975 = vmatpush.msra.mxu0 0.0
        %1976 = vmatpush.msra.mxu0 0.0
        %1977 = vmatpush.msra.mxu0 0.0
        %1978 = vmatpush.msra.mxu0 0.0
        %1979 = vmatpush.msra.mxu0 0.0
        %1980 = vmatpush.msra.mxu0 0.0
        %1981 = vmatpush.msra.mxu0 0.0
        %1982 = vmatpush.msra.mxu0 0.0
        %1983 = vmatpush.msra.mxu0 %v1960
        %1984 = vmatpush.msra.mxu0 %v1959
        %1985 = vmatpush.msra.mxu0 %v1958
        %1986 = vmatpush.msra.mxu0 %v1957
        %1987 = vmatmul.f32.gmra.mxu0 %v1966
        %v1988 = vpop.f32.mrf.mxu0
        %v1989 = vadd.f32 %v1963, %v1988
        %1990 = vmatmul.f32.gmra.mxu0 %v1969
        %v1991 = vpop.f32.mrf.mxu0
        %v1992 = vadd.f32 %v1963, %v1991
        %1993 = vdwg.mxu0
        %v1995 = vsel %vm917, %v1955, 0
        %v1998 = vsel %vm917, %v1989, 0
        %v2001 = vsel %vm917, %v1992, 0
        %2003 = vmatpush.xpose.msra.mxu0 0.0
        %2004 = vmatpush.xpose.msra.mxu0 0.0
        %2005 = vmatpush.xpose.msra.mxu0 0.0
        %2006 = vmatpush.xpose.msra.mxu0 0.0
        %2007 = vmatpush.xpose.msra.mxu0 0.0
        %2008 = vmatpush.xpose.msra.mxu0 0.0
        %2009 = vmatpush.xpose.msra.mxu0 0.0
        %2010 = vmatpush.xpose.msra.mxu0 0.0
        %2011 = vmatpush.xpose.msra.mxu0 0.0
        %2012 = vmatpush.xpose.msra.mxu0 0.0
        %2013 = vmatpush.xpose.msra.mxu0 0.0
        %2014 = vmatpush.xpose.msra.mxu0 0.0
        %2015 = vmatpush.xpose.msra.mxu0 0.0
        %2016 = vmatpush.xpose.msra.mxu0 0.0
        %2017 = vmatpush.xpose.msra.mxu0 %v2001
        %2018 = vmatpush.xpose.msra.mxu0 %v1998
        %2019 = vmatmul.f32.gmra.mxu0 %v1995
        %v2020 = vpop.f32.mrf.mxu0
        %v2021 = vadd.f32 0.0, %v2020
        %2022 = vdwg.mxu0
        %v2023 = vmul.f32 %v2021, 0.17677669
        %vm2024 = vcmask 123904
        %v2025 = vsel %vm2024, %v2023, -inf
        %2026 = vmax.xlane.f32.xlu0 %v2025
        %v2027 = vpop.xlane.xlu0 %2026
        %v2028 = vsub.f32 %v2023, %v2027
        %v2029 = vmul.f32 %v2028, 1.442695
        %v2030 = vpow.pop %v2029
        %v2031 = vsel %vm2024, %v2030, 0.0
        %2032 = vadd.xlane.f32.xlu0 %v2031
        %v2033 = vpop.xlane.xlu0 %2032
        %v2034 = vrcp.pop %v2033
        %v2035 = vmul.f32 %v2030, %v2034
        %2036 = vrot.lane.b32.xlu0 %v1989, 96
        %v2037 = vpop.permute.xlu0 %2036
        %2038 = vrot.lane.b32.xlu0 %v1992, 96
        %v2039 = vpop.permute.xlu0 %2038
        %v2043 = vsel %vm986, %v2035, 0
        %2045 = vmatpush.msra.mxu0 0.0
        %2046 = vmatpush.msra.mxu0 0.0
        %2047 = vmatpush.msra.mxu0 0.0
        %2048 = vmatpush.msra.mxu0 0.0
        %2049 = vmatpush.msra.mxu0 0.0
        %2050 = vmatpush.msra.mxu0 0.0
        %2051 = vmatpush.msra.mxu0 0.0
        %2052 = vmatpush.msra.mxu0 0.0
        %2053 = vmatpush.msra.mxu0 0.0
        %2054 = vmatpush.msra.mxu0 0.0
        %2055 = vmatpush.msra.mxu0 0.0
        %2056 = vmatpush.msra.mxu0 0.0
        %2057 = vmatpush.msra.mxu0 0.0
        %2058 = vmatpush.msra.mxu0 0.0
        %2059 = vmatpush.msra.mxu0 %v2039
        %2060 = vmatpush.msra.mxu0 %v2037
        %2061 = vmatmul.f32.gmra.mxu0 %v2043
        %v2062 = vpop.f32.mrf.mxu0
        %v2063 = vadd.f32 0.0, %v2062
        %2064 = vdwg.mxu0
        %v2065 = vadd.f32 %v1955, %v2063
        %2066 = vrot.lane.b32.xlu0 %v1955, 120
        %v2067 = vpop.permute.xlu0 %2066
        %2068 = vrot.lane.b32.xlu0 %v1989, 120
        %v2069 = vpop.permute.xlu0 %2068
        %2070 = vrot.lane.b32.xlu0 %v1992, 120
        %v2071 = vpop.permute.xlu0 %2070
        %v2072 = vsel %vm917, %v2067, 0
        %v2074 = vsel %vm917, %v2069, 0
        %v2076 = vsel %vm917, %v2071, 0
        %2078 = vmatpush.xpose.msra.mxu0 0.0
        %2079 = vmatpush.xpose.msra.mxu0 0.0
        %2080 = vmatpush.xpose.msra.mxu0 0.0
        %2081 = vmatpush.xpose.msra.mxu0 0.0
        %2082 = vmatpush.xpose.msra.mxu0 0.0
        %2083 = vmatpush.xpose.msra.mxu0 0.0
        %2084 = vmatpush.xpose.msra.mxu0 0.0
        %2085 = vmatpush.xpose.msra.mxu0 0.0
        %2086 = vmatpush.xpose.msra.mxu0 0.0
        %2087 = vmatpush.xpose.msra.mxu0 0.0
        %2088 = vmatpush.xpose.msra.mxu0 0.0
        %2089 = vmatpush.xpose.msra.mxu0 0.0
        %2090 = vmatpush.xpose.msra.mxu0 0.0
        %2091 = vmatpush.xpose.msra.mxu0 0.0
        %2092 = vmatpush.xpose.msra.mxu0 %v2076
        %2093 = vmatpush.xpose.msra.mxu0 %v2074
        %2094 = vmatmul.f32.gmra.mxu0 %v2072
        %v2095 = vpop.f32.mrf.mxu0
        %v2096 = vadd.f32 0.0, %v2095
        %2097 = vdwg.mxu0
        %v2098 = vmul.f32 %v2096, 0.17677669
        %v2099 = vsel %vm2024, %v2098, -inf
        %2100 = vmax.xlane.f32.xlu0 %v2099
        %v2101 = vpop.xlane.xlu0 %2100
        %v2102 = vsub.f32 %v2098, %v2101
        %v2103 = vmul.f32 %v2102, 1.442695
        %v2104 = vpow.pop %v2103
        %v2105 = vsel %vm2024, %v2104, 0.0
        %2106 = vadd.xlane.f32.xlu0 %v2105
        %v2107 = vpop.xlane.xlu0 %2106
        %v2108 = vrcp.pop %v2107
        %v2109 = vmul.f32 %v2104, %v2108
        %2110 = vrot.lane.b32.xlu0 %v1989, 88
        %v2111 = vpop.permute.xlu0 %2110
        %2112 = vrot.lane.b32.xlu0 %v1992, 88
        %v2113 = vpop.permute.xlu0 %2112
        %v2117 = vsel %vm986, %v2109, 0
        %2119 = vmatpush.msra.mxu0 0.0
        %2120 = vmatpush.msra.mxu0 0.0
        %2121 = vmatpush.msra.mxu0 0.0
        %2122 = vmatpush.msra.mxu0 0.0
        %2123 = vmatpush.msra.mxu0 0.0
        %2124 = vmatpush.msra.mxu0 0.0
        %2125 = vmatpush.msra.mxu0 0.0
        %2126 = vmatpush.msra.mxu0 0.0
        %2127 = vmatpush.msra.mxu0 0.0
        %2128 = vmatpush.msra.mxu0 0.0
        %2129 = vmatpush.msra.mxu0 0.0
        %2130 = vmatpush.msra.mxu0 0.0
        %2131 = vmatpush.msra.mxu0 0.0
        %2132 = vmatpush.msra.mxu0 0.0
        %2133 = vmatpush.msra.mxu0 %v2113
        %2134 = vmatpush.msra.mxu0 %v2111
        %2135 = vmatmul.f32.gmra.mxu0 %v2117
        %v2136 = vpop.f32.mrf.mxu0
        %v2137 = vadd.f32 0.0, %v2136
        %2138 = vdwg.mxu0
        %2140 = vrot.lane.b32.xlu0 %v2137, 8
        %v2141 = vpop.permute.xlu0 %2140
        %v2143 = vadd.f32 %v1955, %v2141
        %2144 = vrot.lane.b32.xlu0 %v1955, 112
        %v2145 = vpop.permute.xlu0 %2144
        %2146 = vrot.lane.b32.xlu0 %v1989, 112
        %v2147 = vpop.permute.xlu0 %2146
        %2148 = vrot.lane.b32.xlu0 %v1992, 112
        %v2149 = vpop.permute.xlu0 %2148
        %v2150 = vsel %vm917, %v2145, 0
        %v2152 = vsel %vm917, %v2147, 0
        %v2154 = vsel %vm917, %v2149, 0
        %2156 = vmatpush.xpose.msra.mxu0 0.0
        %2157 = vmatpush.xpose.msra.mxu0 0.0
        %2158 = vmatpush.xpose.msra.mxu0 0.0
        %2159 = vmatpush.xpose.msra.mxu0 0.0
        %2160 = vmatpush.xpose.msra.mxu0 0.0
        %2161 = vmatpush.xpose.msra.mxu0 0.0
        %2162 = vmatpush.xpose.msra.mxu0 0.0
        %2163 = vmatpush.xpose.msra.mxu0 0.0
        %2164 = vmatpush.xpose.msra.mxu0 0.0
        %2165 = vmatpush.xpose.msra.mxu0 0.0
        %2166 = vmatpush.xpose.msra.mxu0 0.0
        %2167 = vmatpush.xpose.msra.mxu0 0.0
        %2168 = vmatpush.xpose.msra.mxu0 0.0
        %2169 = vmatpush.xpose.msra.mxu0 0.0
        %2170 = vmatpush.xpose.msra.mxu0 %v2154
        %2171 = vmatpush.xpose.msra.mxu0 %v2152
        %2172 = vmatmul.f32.gmra.mxu0 %v2150
        %v2173 = vpop.f32.mrf.mxu0
        %v2174 = vadd.f32 0.0, %v2173
        %2175 = vdwg.mxu0
        %v2176 = vmul.f32 %v2174, 0.17677669
        %v2177 = vsel %vm2024, %v2176, -inf
        %2178 = vmax.xlane.f32.xlu0 %v2177
        %v2179 = vpop.xlane.xlu0 %2178
        %v2180 = vsub.f32 %v2176, %v2179
        %v2181 = vmul.f32 %v2180, 1.442695
        %v2182 = vpow.pop %v2181
        %v2183 = vsel %vm2024, %v2182, 0.0
        %2184 = vadd.xlane.f32.xlu0 %v2183
        %v2185 = vpop.xlane.xlu0 %2184
        %v2186 = vrcp.pop %v2185
        %v2187 = vmul.f32 %v2182, %v2186
        %2188 = vrot.lane.b32.xlu0 %v1989, 80
        %v2189 = vpop.permute.xlu0 %2188
        %2190 = vrot.lane.b32.xlu0 %v1992, 80
        %v2191 = vpop.permute.xlu0 %2190
        %v2195 = vsel %vm986, %v2187, 0
        %2197 = vmatpush.msra.mxu0 0.0
        %2198 = vmatpush.msra.mxu0 0.0
        %2199 = vmatpush.msra.mxu0 0.0
        %2200 = vmatpush.msra.mxu0 0.0
        %2201 = vmatpush.msra.mxu0 0.0
        %2202 = vmatpush.msra.mxu0 0.0
        %2203 = vmatpush.msra.mxu0 0.0
        %2204 = vmatpush.msra.mxu0 0.0
        %2205 = vmatpush.msra.mxu0 0.0
        %2206 = vmatpush.msra.mxu0 0.0
        %2207 = vmatpush.msra.mxu0 0.0
        %2208 = vmatpush.msra.mxu0 0.0
        %2209 = vmatpush.msra.mxu0 0.0
        %2210 = vmatpush.msra.mxu0 0.0
        %2211 = vmatpush.msra.mxu0 %v2191
        %2212 = vmatpush.msra.mxu0 %v2189
        %2213 = vmatmul.f32.gmra.mxu0 %v2195
        %v2214 = vpop.f32.mrf.mxu0
        %v2215 = vadd.f32 0.0, %v2214
        %2216 = vdwg.mxu0
        %2218 = vrot.lane.b32.xlu0 %v2215, 16
        %v2219 = vpop.permute.xlu0 %2218
        %v2221 = vadd.f32 %v1955, %v2219
        %2222 = vrot.lane.b32.xlu0 %v1955, 104
        %v2223 = vpop.permute.xlu0 %2222
        %2224 = vrot.lane.b32.xlu0 %v1989, 104
        %v2225 = vpop.permute.xlu0 %2224
        %2226 = vrot.lane.b32.xlu0 %v1992, 104
        %v2227 = vpop.permute.xlu0 %2226
        %v2228 = vsel %vm917, %v2223, 0
        %v2230 = vsel %vm917, %v2225, 0
        %v2232 = vsel %vm917, %v2227, 0
        %2234 = vmatpush.xpose.msra.mxu0 0.0
        %2235 = vmatpush.xpose.msra.mxu0 0.0
        %2236 = vmatpush.xpose.msra.mxu0 0.0
        %2237 = vmatpush.xpose.msra.mxu0 0.0
        %2238 = vmatpush.xpose.msra.mxu0 0.0
        %2239 = vmatpush.xpose.msra.mxu0 0.0
        %2240 = vmatpush.xpose.msra.mxu0 0.0
        %2241 = vmatpush.xpose.msra.mxu0 0.0
        %2242 = vmatpush.xpose.msra.mxu0 0.0
        %2243 = vmatpush.xpose.msra.mxu0 0.0
        %2244 = vmatpush.xpose.msra.mxu0 0.0
        %2245 = vmatpush.xpose.msra.mxu0 0.0
        %2246 = vmatpush.xpose.msra.mxu0 0.0
        %2247 = vmatpush.xpose.msra.mxu0 0.0
        %2248 = vmatpush.xpose.msra.mxu0 %v2232
        %2249 = vmatpush.xpose.msra.mxu0 %v2230
        %2250 = vmatmul.f32.gmra.mxu0 %v2228
        %v2251 = vpop.f32.mrf.mxu0
        %v2252 = vadd.f32 0.0, %v2251
        %2253 = vdwg.mxu0
        %v2254 = vmul.f32 %v2252, 0.17677669
        %v2255 = vsel %vm2024, %v2254, -inf
        %2256 = vmax.xlane.f32.xlu0 %v2255
        %v2257 = vpop.xlane.xlu0 %2256
        %v2258 = vsub.f32 %v2254, %v2257
        %v2259 = vmul.f32 %v2258, 1.442695
        %v2260 = vpow.pop %v2259
        %v2261 = vsel %vm2024, %v2260, 0.0
        %2262 = vadd.xlane.f32.xlu0 %v2261
        %v2263 = vpop.xlane.xlu0 %2262
        %v2264 = vrcp.pop %v2263
        %v2265 = vmul.f32 %v2260, %v2264
        %2266 = vrot.lane.b32.xlu0 %v1989, 72
        %v2267 = vpop.permute.xlu0 %2266
        %2268 = vrot.lane.b32.xlu0 %v1992, 72
        %v2269 = vpop.permute.xlu0 %2268
        %v2273 = vsel %vm986, %v2265, 0
        %2275 = vmatpush.msra.mxu0 0.0
        %2276 = vmatpush.msra.mxu0 0.0
        %2277 = vmatpush.msra.mxu0 0.0
        %2278 = vmatpush.msra.mxu0 0.0
        %2279 = vmatpush.msra.mxu0 0.0
        %2280 = vmatpush.msra.mxu0 0.0
        %2281 = vmatpush.msra.mxu0 0.0
        %2282 = vmatpush.msra.mxu0 0.0
        %2283 = vmatpush.msra.mxu0 0.0
        %2284 = vmatpush.msra.mxu0 0.0
        %2285 = vmatpush.msra.mxu0 0.0
        %2286 = vmatpush.msra.mxu0 0.0
        %2287 = vmatpush.msra.mxu0 0.0
        %2288 = vmatpush.msra.mxu0 0.0
        %2289 = vmatpush.msra.mxu0 %v2269
        %2290 = vmatpush.msra.mxu0 %v2267
        %2291 = vmatmul.f32.gmra.mxu0 %v2273
        %v2292 = vpop.f32.mrf.mxu0
        %v2293 = vadd.f32 0.0, %v2292
        %2294 = vdwg.mxu0
        %2296 = vrot.lane.b32.xlu0 %v2293, 24
        %v2297 = vpop.permute.xlu0 %2296
        %v2299 = vadd.f32 %v1955, %v2297
        %v2300 = vsel %vm917, %v2065, %v2143
        %v2301 = vsel %vm986, %v2300, %v2221
        %v2302 = vsel %vm1374, %v2301, %v2299
        %v2303 = vld [vmem:[#allocation20] sm:$0xff]
        %v2304 = vld [vmem:[#allocation20 + $0x8] sm:$0xff]
        %v2305 = vld [vmem:[#allocation20 + $0x10] sm:$0xff]
        %v2306 = vld [vmem:[#allocation20 + $0x18] sm:$0xff]
        %v2307 = vld [vmem:[#allocation22] sm:$0x1]
        %v2309 = vperm.slane %v2307, 0
        %v2312 = vsel %vm1385, %v2302, 0
        %2314 = vmatpush.msra.mxu0 0.0
        %2315 = vmatpush.msra.mxu0 0.0
        %2316 = vmatpush.msra.mxu0 0.0
        %2317 = vmatpush.msra.mxu0 0.0
        %2318 = vmatpush.msra.mxu0 0.0
        %2319 = vmatpush.msra.mxu0 0.0
        %2320 = vmatpush.msra.mxu0 0.0
        %2321 = vmatpush.msra.mxu0 0.0
        %2322 = vmatpush.msra.mxu0 0.0
        %2323 = vmatpush.msra.mxu0 0.0
        %2324 = vmatpush.msra.mxu0 0.0
        %2325 = vmatpush.msra.mxu0 0.0
        %2326 = vmatpush.msra.mxu0 %v2306
        %2327 = vmatpush.msra.mxu0 %v2305
        %2328 = vmatpush.msra.mxu0 %v2304
        %2329 = vmatpush.msra.mxu0 %v2303
        %2330 = vmatmul.f32.gmra.mxu0 %v2312
        %v2331 = vpop.f32.mrf.mxu0
        %v2332 = vadd.f32 %v2309, %v2331
        %2333 = vdwg.mxu0
        %v2334 = vmax.f32 %v2332, 0.0
        %v2335 = vadd.f32 %v2302, %v2334
        %v2336 = vld [vmem:[#allocation23] sm:$0xff]
        %v2337 = vld [vmem:[#allocation23 + $0x8] sm:$0xff]
        %v2338 = vld [vmem:[#allocation23 + $0x10] sm:$0xff]
        %v2339 = vld [vmem:[#allocation23 + $0x18] sm:$0xff]
        %v2340 = vld [vmem:[#allocation25] sm:$0x1]
        %v2342 = vperm.slane %v2340, 0
        %v2345 = vsel %vm1385, %v2335, 0
        %2347 = vmatpush.msra.mxu0 0.0
        %2348 = vmatpush.msra.mxu0 0.0
        %2349 = vmatpush.msra.mxu0 0.0
        %2350 = vmatpush.msra.mxu0 0.0
        %2351 = vmatpush.msra.mxu0 0.0
        %2352 = vmatpush.msra.mxu0 0.0
        %2353 = vmatpush.msra.mxu0 0.0
        %2354 = vmatpush.msra.mxu0 0.0
        %2355 = vmatpush.msra.mxu0 0.0
        %2356 = vmatpush.msra.mxu0 0.0
        %2357 = vmatpush.msra.mxu0 0.0
        %2358 = vmatpush.msra.mxu0 0.0
        %2359 = vmatpush.msra.mxu0 %v2339
        %2360 = vmatpush.msra.mxu0 %v2338
        %2361 = vmatpush.msra.mxu0 %v2337
        %2362 = vmatpush.msra.mxu0 %v2336
        %2363 = vmatmul.f32.gmra.mxu0 %v2345
        %v2364 = vpop.f32.mrf.mxu0
        %v2365 = vadd.f32 %v2342, %v2364
        %2366 = vdwg.mxu0
        %2368 = vrot.lane.b32.xlu0 %v2365, 96
        %v2369 = vpop.permute.xlu0 %2368
        %v2370 = vsel %vm917, %v2365, 0
        %v2372 = vsel %vm917, %v2369, 0
        %2374 = vmatpush.xpose.msra.mxu0 0.0
        %2375 = vmatpush.xpose.msra.mxu0 0.0
        %2376 = vmatpush.xpose.msra.mxu0 0.0
        %2377 = vmatpush.xpose.msra.mxu0 0.0
        %2378 = vmatpush.xpose.msra.mxu0 0.0
        %2379 = vmatpush.xpose.msra.mxu0 0.0
        %2380 = vmatpush.xpose.msra.mxu0 0.0
        %2381 = vmatpush.xpose.msra.mxu0 0.0
        %2382 = vmatpush.xpose.msra.mxu0 0.0
        %2383 = vmatpush.xpose.msra.mxu0 0.0
        %2384 = vmatpush.xpose.msra.mxu0 0.0
        %2385 = vmatpush.xpose.msra.mxu0 0.0
        %2386 = vmatpush.xpose.msra.mxu0 0.0
        %2387 = vmatpush.xpose.msra.mxu0 0.0
        %2388 = vmatpush.xpose.msra.mxu0 0.0
        %2389 = vmatpush.xpose.msra.mxu0 %v2372
        %2390 = vmatmul.f32.gmra.mxu0 %v2370
        %v2391 = vpop.f32.mrf.mxu0
        %v2392 = vadd.f32 0.0, %v2391
        %2393 = vdwg.mxu0
        %v2394 = vmul.f32 %v2392, 0.17677669
        %vm2395 = vcmask 9216
        %v2396 = vsel %vm2395, %v2394, -inf
        %2397 = vmax.xlane.f32.xlu0 %v2396
        %v2398 = vpop.xlane.xlu0 %2397
        %v2399 = vsub.f32 %v2394, %v2398
        %v2400 = vmul.f32 %v2399, 1.442695
        %v2401 = vpow.pop %v2400
        %v2402 = vsel %vm2395, %v2401, 0.0
        %2403 = vadd.xlane.f32.xlu0 %v2402
        %v2404 = vpop.xlane.xlu0 %2403
        %v2405 = vrcp.pop %v2404
        %v2406 = vmul.f32 %v2401, %v2405
        %2407 = vrot.lane.b32.xlu0 %v2365, 64
        %v2408 = vpop.permute.xlu0 %2407
        %vm2409 = vcmask 15360
        %v2411 = vsel %vm2409, %v2406, 0
        %vm2413 = vcmask 1041408
        %v2414 = vsel %vm2413, %v2408, 0
        %2416 = vmatpush.msra.mxu0 0.0
        %2417 = vmatpush.msra.mxu0 0.0
        %2418 = vmatpush.msra.mxu0 0.0
        %2419 = vmatpush.msra.mxu0 0.0
        %2420 = vmatpush.msra.mxu0 0.0
        %2421 = vmatpush.msra.mxu0 0.0
        %2422 = vmatpush.msra.mxu0 0.0
        %2423 = vmatpush.msra.mxu0 0.0
        %2424 = vmatpush.msra.mxu0 0.0
        %2425 = vmatpush.msra.mxu0 0.0
        %2426 = vmatpush.msra.mxu0 0.0
        %2427 = vmatpush.msra.mxu0 0.0
        %2428 = vmatpush.msra.mxu0 0.0
        %2429 = vmatpush.msra.mxu0 0.0
        %2430 = vmatpush.msra.mxu0 0.0
        %2431 = vmatpush.msra.mxu0 %v2414
        %2432 = vmatmul.f32.gmra.mxu0 %v2411
        %v2433 = vpop.f32.mrf.mxu0
        %v2434 = vadd.f32 0.0, %v2433
        %2435 = vdwg.mxu0
        %v2436 = vadd.f32 %v2365, %v2434
        %2437 = vrot.lane.b32.xlu0 %v2365, 120
        %v2438 = vpop.permute.xlu0 %2437
        %2439 = vrot.lane.b32.xlu0 %v2365, 88
        %v2440 = vpop.permute.xlu0 %2439
        %v2441 = vsel %vm917, %v2438, 0
        %v2443 = vsel %vm917, %v2440, 0
        %2445 = vmatpush.xpose.msra.mxu0 0.0
        %2446 = vmatpush.xpose.msra.mxu0 0.0
        %2447 = vmatpush.xpose.msra.mxu0 0.0
        %2448 = vmatpush.xpose.msra.mxu0 0.0
        %2449 = vmatpush.xpose.msra.mxu0 0.0
        %2450 = vmatpush.xpose.msra.mxu0 0.0
        %2451 = vmatpush.xpose.msra.mxu0 0.0
        %2452 = vmatpush.xpose.msra.mxu0 0.0
        %2453 = vmatpush.xpose.msra.mxu0 0.0
        %2454 = vmatpush.xpose.msra.mxu0 0.0
        %2455 = vmatpush.xpose.msra.mxu0 0.0
        %2456 = vmatpush.xpose.msra.mxu0 0.0
        %2457 = vmatpush.xpose.msra.mxu0 0.0
        %2458 = vmatpush.xpose.msra.mxu0 0.0
        %2459 = vmatpush.xpose.msra.mxu0 0.0
        %2460 = vmatpush.xpose.msra.mxu0 %v2443
        %2461 = vmatmul.f32.gmra.mxu0 %v2441
        %v2462 = vpop.f32.mrf.mxu0
        %v2463 = vadd.f32 0.0, %v2462
        %2464 = vdwg.mxu0
        %v2465 = vmul.f32 %v2463, 0.17677669
        %v2466 = vsel %vm2395, %v2465, -inf
        %2467 = vmax.xlane.f32.xlu0 %v2466
        %v2468 = vpop.xlane.xlu0 %2467
        %v2469 = vsub.f32 %v2465, %v2468
        %v2470 = vmul.f32 %v2469, 1.442695
        %v2471 = vpow.pop %v2470
        %v2472 = vsel %vm2395, %v2471, 0.0
        %2473 = vadd.xlane.f32.xlu0 %v2472
        %v2474 = vpop.xlane.xlu0 %2473
        %v2475 = vrcp.pop %v2474
        %v2476 = vmul.f32 %v2471, %v2475
        %2477 = vrot.lane.b32.xlu0 %v2365, 56
        %v2478 = vpop.permute.xlu0 %2477
        %v2480 = vsel %vm2409, %v2476, 0
        %v2482 = vsel %vm2413, %v2478, 0
        %2484 = vmatpush.msra.mxu0 0.0
        %2485 = vmatpush.msra.mxu0 0.0
        %2486 = vmatpush.msra.mxu0 0.0
        %2487 = vmatpush.msra.mxu0 0.0
        %2488 = vmatpush.msra.mxu0 0.0
        %2489 = vmatpush.msra.mxu0 0.0
        %2490 = vmatpush.msra.mxu0 0.0
        %2491 = vmatpush.msra.mxu0 0.0
        %2492 = vmatpush.msra.mxu0 0.0
        %2493 = vmatpush.msra.mxu0 0.0
        %2494 = vmatpush.msra.mxu0 0.0
        %2495 = vmatpush.msra.mxu0 0.0
        %2496 = vmatpush.msra.mxu0 0.0
        %2497 = vmatpush.msra.mxu0 0.0
        %2498 = vmatpush.msra.mxu0 0.0
        %2499 = vmatpush.msra.mxu0 %v2482
        %2500 = vmatmul.f32.gmra.mxu0 %v2480
        %v2501 = vpop.f32.mrf.mxu0
        %v2502 = vadd.f32 0.0, %v2501
        %2503 = vdwg.mxu0
        %2505 = vrot.lane.b32.xlu0 %v2502, 8
        %v2506 = vpop.permute.xlu0 %2505
        %v2508 = vadd.f32 %v2365, %v2506
        %2509 = vrot.lane.b32.xlu0 %v2365, 112
        %v2510 = vpop.permute.xlu0 %2509
        %2511 = vrot.lane.b32.xlu0 %v2365, 80
        %v2512 = vpop.permute.xlu0 %2511
        %v2513 = vsel %vm917, %v2510, 0
        %v2515 = vsel %vm917, %v2512, 0
        %2517 = vmatpush.xpose.msra.mxu0 0.0
        %2518 = vmatpush.xpose.msra.mxu0 0.0
        %2519 = vmatpush.xpose.msra.mxu0 0.0
        %2520 = vmatpush.xpose.msra.mxu0 0.0
        %2521 = vmatpush.xpose.msra.mxu0 0.0
        %2522 = vmatpush.xpose.msra.mxu0 0.0
        %2523 = vmatpush.xpose.msra.mxu0 0.0
        %2524 = vmatpush.xpose.msra.mxu0 0.0
        %2525 = vmatpush.xpose.msra.mxu0 0.0
        %2526 = vmatpush.xpose.msra.mxu0 0.0
        %2527 = vmatpush.xpose.msra.mxu0 0.0
        %2528 = vmatpush.xpose.msra.mxu0 0.0
        %2529 = vmatpush.xpose.msra.mxu0 0.0
        %2530 = vmatpush.xpose.msra.mxu0 0.0
        %2531 = vmatpush.xpose.msra.mxu0 0.0
        %2532 = vmatpush.xpose.msra.mxu0 %v2515
        %2533 = vmatmul.f32.gmra.mxu0 %v2513
        %v2534 = vpop.f32.mrf.mxu0
        %v2535 = vadd.f32 0.0, %v2534
        %2536 = vdwg.mxu0
        %v2537 = vmul.f32 %v2535, 0.17677669
        %v2538 = vsel %vm2395, %v2537, -inf
        %2539 = vmax.xlane.f32.xlu0 %v2538
        %v2540 = vpop.xlane.xlu0 %2539
        %v2541 = vsub.f32 %v2537, %v2540
        %v2542 = vmul.f32 %v2541, 1.442695
        %v2543 = vpow.pop %v2542
        %v2544 = vsel %vm2395, %v2543, 0.0
        %2545 = vadd.xlane.f32.xlu0 %v2544
        %v2546 = vpop.xlane.xlu0 %2545
        %v2547 = vrcp.pop %v2546
        %v2548 = vmul.f32 %v2543, %v2547
        %2549 = vrot.lane.b32.xlu0 %v2365, 48
        %v2550 = vpop.permute.xlu0 %2549
        %v2552 = vsel %vm2409, %v2548, 0
        %v2554 = vsel %vm2413, %v2550, 0
        %2556 = vmatpush.msra.mxu0 0.0
        %2557 = vmatpush.msra.mxu0 0.0
        %2558 = vmatpush.msra.mxu0 0.0
        %2559 = vmatpush.msra.mxu0 0.0
        %2560 = vmatpush.msra.mxu0 0.0
        %2561 = vmatpush.msra.mxu0 0.0
        %2562 = vmatpush.msra.mxu0 0.0
        %2563 = vmatpush.msra.mxu0 0.0
        %2564 = vmatpush.msra.mxu0 0.0
        %2565 = vmatpush.msra.mxu0 0.0
        %2566 = vmatpush.msra.mxu0 0.0
        %2567 = vmatpush.msra.mxu0 0.0
        %2568 = vmatpush.msra.mxu0 0.0
        %2569 = vmatpush.msra.mxu0 0.0
        %2570 = vmatpush.msra.mxu0 0.0
        %2571 = vmatpush.msra.mxu0 %v2554
        %2572 = vmatmul.f32.gmra.mxu0 %v2552
        %v2573 = vpop.f32.mrf.mxu0
        %v2574 = vadd.f32 0.0, %v2573
        %2575 = vdwg.mxu0
        %2577 = vrot.lane.b32.xlu0 %v2574, 16
        %v2578 = vpop.permute.xlu0 %2577
        %v2580 = vadd.f32 %v2365, %v2578
        %2581 = vrot.lane.b32.xlu0 %v2365, 104
        %v2582 = vpop.permute.xlu0 %2581
        %2583 = vrot.lane.b32.xlu0 %v2365, 72
        %v2584 = vpop.permute.xlu0 %2583
        %v2585 = vsel %vm917, %v2582, 0
        %v2587 = vsel %vm917, %v2584, 0
        %2589 = vmatpush.xpose.msra.mxu0 0.0
        %2590 = vmatpush.xpose.msra.mxu0 0.0
        %2591 = vmatpush.xpose.msra.mxu0 0.0
        %2592 = vmatpush.xpose.msra.mxu0 0.0
        %2593 = vmatpush.xpose.msra.mxu0 0.0
        %2594 = vmatpush.xpose.msra.mxu0 0.0
        %2595 = vmatpush.xpose.msra.mxu0 0.0
        %2596 = vmatpush.xpose.msra.mxu0 0.0
        %2597 = vmatpush.xpose.msra.mxu0 0.0
        %2598 = vmatpush.xpose.msra.mxu0 0.0
        %2599 = vmatpush.xpose.msra.mxu0 0.0
        %2600 = vmatpush.xpose.msra.mxu0 0.0
        %2601 = vmatpush.xpose.msra.mxu0 0.0
        %2602 = vmatpush.xpose.msra.mxu0 0.0
        %2603 = vmatpush.xpose.msra.mxu0 0.0
        %2604 = vmatpush.xpose.msra.mxu0 %v2587
        %2605 = vmatmul.f32.gmra.mxu0 %v2585
        %v2606 = vpop.f32.mrf.mxu0
        %v2607 = vadd.f32 0.0, %v2606
        %2608 = vdwg.mxu0
        %v2609 = vmul.f32 %v2607, 0.17677669
        %v2610 = vsel %vm2395, %v2609, -inf
        %2611 = vmax.xlane.f32.xlu0 %v2610
        %v2612 = vpop.xlane.xlu0 %2611
        %v2613 = vsub.f32 %v2609, %v2612
        %v2614 = vmul.f32 %v2613, 1.442695
        %v2615 = vpow.pop %v2614
        %v2616 = vsel %vm2395, %v2615, 0.0
        %2617 = vadd.xlane.f32.xlu0 %v2616
        %v2618 = vpop.xlane.xlu0 %2617
        %v2619 = vrcp.pop %v2618
        %v2620 = vmul.f32 %v2615, %v2619
        %2621 = vrot.lane.b32.xlu0 %v2365, 40
        %v2622 = vpop.permute.xlu0 %2621
        %v2624 = vsel %vm2409, %v2620, 0
        %v2626 = vsel %vm2413, %v2622, 0
        %2628 = vmatpush.msra.mxu0 0.0
        %2629 = vmatpush.msra.mxu0 0.0
        %2630 = vmatpush.msra.mxu0 0.0
        %2631 = vmatpush.msra.mxu0 0.0
        %2632 = vmatpush.msra.mxu0 0.0
        %2633 = vmatpush.msra.mxu0 0.0
        %2634 = vmatpush.msra.mxu0 0.0
        %2635 = vmatpush.msra.mxu0 0.0
        %2636 = vmatpush.msra.mxu0 0.0
        %2637 = vmatpush.msra.mxu0 0.0
        %2638 = vmatpush.msra.mxu0 0.0
        %2639 = vmatpush.msra.mxu0 0.0
        %2640 = vmatpush.msra.mxu0 0.0
        %2641 = vmatpush.msra.mxu0 0.0
        %2642 = vmatpush.msra.mxu0 0.0
        %2643 = vmatpush.msra.mxu0 %v2626
        %2644 = vmatmul.f32.gmra.mxu0 %v2624
        %v2645 = vpop.f32.mrf.mxu0
        %v2646 = vadd.f32 0.0, %v2645
        %2647 = vdwg.mxu0
        %2649 = vrot.lane.b32.xlu0 %v2646, 24
        %v2650 = vpop.permute.xlu0 %2649
        %v2652 = vadd.f32 %v2365, %v2650
        %v2653 = vsel %vm917, %v2436, %v2508
        %v2654 = vsel %vm986, %v2653, %v2580
        %v2655 = vsel %vm1374, %v2654, %v2652
        %v2656 = vld [vmem:[%s18] sm:$0xff]
        %v2657 = vld [vmem:[%s18 + $0x8] sm:$0xff]
        %v2658 = vld [vmem:[%s18 + $0x10] sm:$0xff]
        %v2659 = vld [vmem:[%s18 + $0x18] sm:$0xff]
        %v2660 = vld [vmem:[%s19] sm:$0x1]
        %v2662 = vperm.slane %v2660, 0
        %v2665 = vsel %vm1385, %v2655, 0
        %2667 = vmatpush.msra.mxu0 0.0
        %2668 = vmatpush.msra.mxu0 0.0
        %2669 = vmatpush.msra.mxu0 0.0
        %2670 = vmatpush.msra.mxu0 0.0
        %2671 = vmatpush.msra.mxu0 0.0
        %2672 = vmatpush.msra.mxu0 0.0
        %2673 = vmatpush.msra.mxu0 0.0
        %2674 = vmatpush.msra.mxu0 0.0
        %2675 = vmatpush.msra.mxu0 0.0
        %2676 = vmatpush.msra.mxu0 0.0
        %2677 = vmatpush.msra.mxu0 0.0
        %2678 = vmatpush.msra.mxu0 0.0
        %2679 = vmatpush.msra.mxu0 %v2659
        %2680 = vmatpush.msra.mxu0 %v2658
        %2681 = vmatpush.msra.mxu0 %v2657
        %2682 = vmatpush.msra.mxu0 %v2656
        %2683 = vmatmul.f32.gmra.mxu0 %v2665
        %v2684 = vpop.f32.mrf.mxu0
        %v2685 = vadd.f32 %v2662, %v2684
        %2686 = vdwg.mxu0
        %v2687 = vmax.f32 %v2685, 0.0
        %v2688 = vadd.f32 %v2655, %v2687
        %v2689 = vld [vmem:[%s20] sm:$0xff]
        %v2690 = vld [vmem:[%s20 + $0x8] sm:$0xff]
        %v2691 = vld [vmem:[%s20 + $0x10] sm:$0xff]
        %v2692 = vld [vmem:[%s20 + $0x18] sm:$0xff]
        %v2693 = vld [vmem:[%s21] sm:$0x1]
        %v2695 = vperm.slane %v2693, 0
        %v2698 = vsel %vm1385, %v2688, 0
        %2700 = vmatpush.msra.mxu0 0.0
        %2701 = vmatpush.msra.mxu0 0.0
        %2702 = vmatpush.msra.mxu0 0.0
        %2703 = vmatpush.msra.mxu0 0.0
        %2704 = vmatpush.msra.mxu0 0.0
        %2705 = vmatpush.msra.mxu0 0.0
        %2706 = vmatpush.msra.mxu0 0.0
        %2707 = vmatpush.msra.mxu0 0.0
        %2708 = vmatpush.msra.mxu0 0.0
        %2709 = vmatpush.msra.mxu0 0.0
        %2710 = vmatpush.msra.mxu0 0.0
        %2711 = vmatpush.msra.mxu0 0.0
        %2712 = vmatpush.msra.mxu0 %v2692
        %2713 = vmatpush.msra.mxu0 %v2691
        %2714 = vmatpush.msra.mxu0 %v2690
        %2715 = vmatpush.msra.mxu0 %v2689
        %2716 = vmatmul.f32.gmra.mxu0 %v2698
        %v2717 = vpop.f32.mrf.mxu0
        %v2718 = vadd.f32 %v2695, %v2717
        %2719 = vdwg.mxu0
        %vm2720 = vcmask 25600
        %2721 = vst.msk [vmem:[%s904] sm:$0x3] %vm2720, %v2718
        %s2722 = sand.u32 %s519, 1
        %s2723 = scalar_lea.sflag [#allocation4], %s2722
        %s2724 = sand.u32 %s519, 1
        %s2725 = smul.addr %s2724, 2
        %s2726 = scalar_lea.vmem [#allocation26], %s2725
        // Predicated region
        $region169: #{tpu_custom_call.1} parent=107 // pred_check
          %p2727 = pneg %p529
        $region170: #{tpu_custom_call.1} parent=107 // pred_check_branch
          %2729 = sbr.rel (%p2727) target = $region172
        $region171: #{tpu_custom_call.1} parent=107 // pred_region
          %2731 = vsyncadd %s2723, 0
          %s2732 = smul.addr %s44, 2
          %s2733 = scalar_lea.hbm %s22, %s2732
          %s2735 = sshll.u32 %s2726, 4
          %s2736 = int_to_ptr.vmem [resolvable:$true] %s2735
          %s2737 = sshll.u32 %s2733, 4
          %s2738 = int_to_ptr.hbm [resolvable:$true] %s2737
          %2740 = dma.vmem_to_hbm [thread:$0]  %s2736, 32, %s2738, %s2723
        $region172: #{tpu_custom_call.1} parent=107 // pred_fallthru
          _
      $region108: #{tpu_custom_call.1} parent=5 // pred_fallthru
        _
      %p2741 = scmp.le.s32.totalorder 2, %s39
      // Predicated region
      $region173: #{tpu_custom_call.1} parent=5 // pred_check
        %p2742 = pneg %p2741
      $region174: #{tpu_custom_call.1} parent=5 // pred_check_branch
        %2744 = sbr.rel (%p2742) target = $region176
      $region175: #{tpu_custom_call.1} parent=5 // pred_region
        %s2745 = ssub.s32 %s39, 2
        // Predicated region
        $region177: #{tpu_custom_call.1} parent=175 // pred_check
          %p2746 = pneg %p535
        $region178: #{tpu_custom_call.1} parent=175 // pred_check_branch
          %2748 = sbr.rel (%p2746) target = $region180
        $region179: #{tpu_custom_call.1} parent=175 // pred_region
          %s2749 = sand.u32 %s520, 1
          %s2750 = scalar_lea.sflag [#allocation4], %s2749
          %s2751 = sand.u32 %s520, 1
          %s2752 = smul.addr %s2751, 2
          %s2753 = scalar_lea.vmem [#allocation26], %s2752
          %2755 = dma.done %s2750, 32
        $region180: #{tpu_custom_call.1} parent=175 // pred_fallthru
          _
      $region176: #{tpu_custom_call.1} parent=5 // pred_fallthru
        _
    $region6: #{tpu_custom_call.1} parent=1 // loop_footer
      %s43 = sadd.s32 1, %s39
    $region7: #{tpu_custom_call.1} parent=1 // loop_footer_branch
      %38 = sbr.rel target = $region3
    $region8: #{tpu_custom_call.1} parent=1 // loop_exit
      _
    %2756 = vsyncpa [#allocation3], 1
    %s2757 = scalar_lea.sflag [#allocation3], 1
    %2758 = vsyncpa %s2757, 1
    %2759 = vsyncpa [#allocation6], 1
    %2760 = vsyncpa [#allocation9], 1
    %2761 = vsyncpa [#allocation12], 1
    %2762 = vsyncpa [#allocation15], 1
    %2763 = vsyncpa [#allocation18], 1
    %2764 = vsyncpa [#allocation21], 1
    %2765 = vsyncpa [#allocation24], 1
    %2766 = vsyncpa [#allocation4], 1
    %s2767 = scalar_lea.sflag [#allocation4], 1
    %2768 = vsyncpa %s2767, 1

</llo_original>
